<compile_context>
chip_gen: v7x
topology: tpu7x:2x2x1
jax: 0.10.0
libtpu: 0.0.40
codegen_flags: <defaults>
</compile_context>

<pallas_src>
import functools

import jax
import jax.numpy as jnp
from jax.experimental import pallas as pl
from jax.experimental.pallas import tpu as pltpu


# --------------------------------------------------------------------------
# Fused kernel: embedding gather + bidirectional LSTM over 2 sentences + head.
# --------------------------------------------------------------------------
def fused_bilstm_kernel(ids1_ref, ids2_ref, emb_ref,
                        wi_ref, whh_ref, bias_ref, wlab_ref, blab_ref,
                        out_ref,
                        x1_ref, x2_ref,
                        *, s1, s2, batch, hidden, emb_dim):
    B, H, E = batch, hidden, emb_dim
    H2, H8 = 2 * H, 8 * H

    # ---- One-time embedding gathers into VMEM scratch (off the h chain). ----
    def gather(ids_ref, xbuf_ref, seq_len):
        for t in range(seq_len):
            for b in range(B):
                tok = ids_ref[t, b]                       # scalar from SMEM
                xbuf_ref[pl.ds(t * B + b, 1), :] = emb_ref[pl.ds(tok, 1), :]

    gather(ids1_ref, x1_ref, s1)
    gather(ids2_ref, x2_ref, s2)

    # ---- Hoisted input projection: one MXU call per sentence, bias folded. ----
    bias = bias_ref[...]                                  # (1, 8H)
    gx1 = jnp.dot(x1_ref[...], wi_ref[...],
                  preferred_element_type=jnp.float32) + bias       # (S1*B, 8H)
    gx2 = jnp.dot(x2_ref[...], wi_ref[...],
                  preferred_element_type=jnp.float32) + bias       # (S2*B, 8H)

    whh = whh_ref[...]                                    # (2H, 8H) block-diag

    # Lane mask selecting the fwd half (first H lanes) of every 2H gate pair.
    lane = jax.lax.broadcasted_iota(jnp.int32, (B, H8), 1)
    fwd_mask = (lane % H2) < H

    def run_sentence(gx, seq_len, h_cat, c_cat):
        """Fused fwd+rev recurrence over one sentence.

        h_cat/c_cat: (B, 2H) with lanes [0:H]=fwd state, [H:2H]=rev state.
        Returns final (h_cat, c_cat) plus the two halves of lstm_out[-1]:
        fwd hidden at seq index seq_len-1 (last fused step) and rev hidden at
        seq index seq_len-1 (FIRST fused step, which processes x[seq_len-1]).
        """
        h_rev_top = None
        for k in range(seq_len):                          # unrolled, static k
            # fwd consumes sequence index k; rev consumes index seq_len-1-k.
            row_f = gx[k * B:(k + 1) * B, :]
            row_r = gx[(seq_len - 1 - k) * B:(seq_len - k) * B, :]
            gxk = jnp.where(fwd_mask, row_f, row_r)       # not on the h chain
            gates = gxk + jnp.dot(h_cat, whh,
                                  preferred_element_type=jnp.float32)  # (B, 8H)
            # Column layout: [i_f i_r | f_f f_r | o_f o_r | g_f g_r].
            sig = jax.nn.sigmoid(gates[:, 0:6 * H])       # i, f, o gates
            g_cat = jnp.tanh(gates[:, 6 * H:8 * H])       # g gate
            i_cat = sig[:, 0:H2]
            f_cat = sig[:, H2:2 * H2]
            o_cat = sig[:, 2 * H2:3 * H2]
            c_cat = f_cat * c_cat + i_cat * g_cat
            h_cat = o_cat * jnp.tanh(c_cat)
            if k == 0:
                h_rev_top = h_cat[:, H:H2]                # rev out at index S-1
        h_fwd_top = h_cat[:, 0:H]                         # fwd out at index S-1
        return h_cat, c_cat, h_fwd_top, h_rev_top

    h0 = jnp.zeros((B, H2), jnp.float32)
    c0 = jnp.zeros((B, H2), jnp.float32)

    # Sentence 1 from zero state; sentence 2 starts from sentence 1's (h_n, c_n).
    h1, c1, hf1, hr1 = run_sentence(gx1, s1, h0, c0)
    _, _, hf2, hr2 = run_sentence(gx2, s2, h1, c1)

    # lstm_out[-1] = cat(out1[-1], out2[-1]) = [fwd1, rev1, fwd2, rev2] : (B, 4H)
    feat = jnp.concatenate([hf1, hr1, hf2, hr2], axis=1)

    # Linear head + log_softmax (dim=1) as the kernel epilogue.
    y = (jnp.dot(feat, wlab_ref[...], preferred_element_type=jnp.float32)
         + blab_ref[...])                                 # (B, L)
    z = y - jnp.max(y, axis=-1, keepdims=True)
    out_ref[...] = z - jnp.log(jnp.sum(jnp.exp(z), axis=-1, keepdims=True))


# --------------------------------------------------------------------------
# Wrapper: one-time weight re-layout + a single pallas_call.
# --------------------------------------------------------------------------
def bilstm_comp_forward(params, sentence1, sentence2, *, batch_size, hidden_dim):
    emb = params["embedding"]
    E = emb.shape[1]
    H = hidden_dim
    L = params["w_label"].shape[0]
    S1 = sentence1.shape[0]
    S2 = sentence2.shape[0]
    B = batch_size

    # Fused gate-column order: [i_f i_r | f_f f_r | o_f o_r | g_f g_r], each H wide.
    order = (0, 1, 3, 2)  # original per-direction gate order is [i f g o]

    def fuse_cols(mf, mr):
        # mf, mr: (K, 4H) with columns [i f g o]; -> (K, 8H) in fused layout.
        parts = []
        for g in order:
            parts.append(mf[:, g * H:(g + 1) * H])
            parts.append(mr[:, g * H:(g + 1) * H])
        return jnp.concatenate(parts, axis=1)

    wi_cat = fuse_cols(params["w_ih"].T, params["w_ih_r"].T)      # (E, 8H)
    b_cat = fuse_cols(params["b_fwd"], params["b_rev"])           # (1, 8H)

    # Block-diagonal recurrent weights: rows 0:H act on h_fwd, H:2H on h_rev.
    whf, whr = params["w_hh"].T, params["w_hh_r"].T               # (H, 4H)
    zero = jnp.zeros((H, H), jnp.float32)
    blocks = []
    for g in order:
        blocks.append(jnp.concatenate([whf[:, g * H:(g + 1) * H], zero], axis=0))
        blocks.append(jnp.concatenate([zero, whr[:, g * H:(g + 1) * H]], axis=0))
    whh_blk = jnp.concatenate(blocks, axis=1)                     # (2H, 8H)

    wlab = params["w_label"].T                                    # (4H, L)
    blab = params["b_label"].reshape(1, L)

    kernel = functools.partial(fused_bilstm_kernel, s1=S1, s2=S2,
                               batch=B, hidden=H, emb_dim=E)

    return pl.pallas_call(
        kernel,
        out_shape=jax.ShapeDtypeStruct((B, L), jnp.float32),
        in_specs=[
            pl.BlockSpec(memory_space=pltpu.MemorySpace.SMEM),   # sentence1 ids
            pl.BlockSpec(memory_space=pltpu.MemorySpace.SMEM),   # sentence2 ids
            pl.BlockSpec(memory_space=pltpu.MemorySpace.VMEM),   # embedding table
            pl.BlockSpec(memory_space=pltpu.MemorySpace.VMEM),   # fused W_ih (E, 8H)
            pl.BlockSpec(memory_space=pltpu.MemorySpace.VMEM),   # block-diag W_hh (2H, 8H)
            pl.BlockSpec(memory_space=pltpu.MemorySpace.VMEM),   # fused bias (1, 8H)
            pl.BlockSpec(memory_space=pltpu.MemorySpace.VMEM),   # w_label^T
            pl.BlockSpec(memory_space=pltpu.MemorySpace.VMEM),   # b_label
        ],
        out_specs=pl.BlockSpec(memory_space=pltpu.MemorySpace.VMEM),
        scratch_shapes=[
            pltpu.VMEM((S1 * B, E), jnp.float32),                # gathered x1
            pltpu.VMEM((S2 * B, E), jnp.float32),                # gathered x2
        ],
    )(sentence1.astype(jnp.int32), sentence2.astype(jnp.int32),
      emb, wi_cat, whh_blk, b_cat, wlab, blab)


# --------------------------------------------------------------------------
# Pure-JAX reference (sanity check against the Pallas kernel).
# --------------------------------------------------------------------------
def _ref_lstm_dir(x, w_ih, w_hh, bias, h0, c0, reverse):
    H = h0.shape[-1]
    xs = x[::-1] if reverse else x

    def step(carry, xt):
        h, c = carry
        gates = xt @ w_ih.T + h @ w_hh.T + bias[0]
        i = jax.nn.sigmoid(gates[:, 0:H])
        f = jax.nn.sigmoid(gates[:, H:2 * H])
        g = jnp.tanh(gates[:, 2 * H:3 * H])
        o = jax.nn.sigmoid(gates[:, 3 * H:4 * H])
        c = f * c + i * g
        h = o * jnp.tanh(c)
        return (h, c), h

    (hf, cf), outs = jax.lax.scan(step, (h0, c0), xs)
    if reverse:
        outs = outs[::-1]
    return outs, hf, cf


def _ref_forward(params, s1, s2, batch_size, hidden_dim):
    emb = params["embedding"]
    x1 = jnp.take(emb, s1, axis=0)
    x2 = jnp.take(emb, s2, axis=0)
    h0 = jnp.zeros((2, batch_size, hidden_dim), jnp.float32)
    c0 = jnp.zeros_like(h0)

    def bi(x, h0, c0):
        of, hf, cf = _ref_lstm_dir(x, params["w_ih"], params["w_hh"],
                                   params["b_fwd"], h0[0], c0[0], False)
        orr, hr, cr = _ref_lstm_dir(x, params["w_ih_r"], params["w_hh_r"],
                                    params["b_rev"], h0[1], c0[1], True)
        return (jnp.concatenate([of, orr], 2),
                jnp.stack([hf, hr]), jnp.stack([cf, cr]))

    o1, h1, c1 = bi(x1, h0, c0)
    o2, _, _ = bi(x2, h1, c1)
    feat = jnp.concatenate([o1, o2], 2)[-1]
    y = feat @ params["w_label"].T + params["b_label"]
    return jax.nn.log_softmax(y, axis=1)


# --------------------------------------------------------------------------
# Deterministic synthetic parameters (PyTorch-style uniform(-1/sqrt(H), 1/sqrt(H))).
# --------------------------------------------------------------------------
def make_params(key, vocab_size, embedding_dim, hidden_dim, label_size):
    ks = jax.random.split(key, 12)
    s = 1.0 / jnp.sqrt(hidden_dim)
    u = lambda k, shape, sc: jax.random.uniform(k, shape, jnp.float32, -sc, sc)
    H, E, L = hidden_dim, embedding_dim, label_size
    return {
        "embedding": jax.random.normal(ks[0], (vocab_size, E), jnp.float32),
        "w_ih":   u(ks[1], (4 * H, E), s),
        "w_hh":   u(ks[2], (4 * H, H), s),
        "b_fwd":  (u(ks[3], (1, 4 * H), s) + u(ks[4], (1, 4 * H), s)),  # b_ih + b_hh
        "w_ih_r": u(ks[5], (4 * H, E), s),
        "w_hh_r": u(ks[6], (4 * H, H), s),
        "b_rev":  (u(ks[7], (1, 4 * H), s) + u(ks[8], (1, 4 * H), s)),
        "w_label": u(ks[9], (L, 4 * H), 1.0 / jnp.sqrt(4 * H)),
        "b_label": u(ks[10], (L,), 1.0 / jnp.sqrt(4 * H)),
    }


if __name__ == "__main__":
    embedding_dim = 16
    hidden_dim = 32
    vocab_size = 100
    label_size = 5
    batch_size = 2
    seq_len = 8

    key = jax.random.PRNGKey(0)
    kp, k1, k2 = jax.random.split(key, 3)
    params = make_params(kp, vocab_size, embedding_dim, hidden_dim, label_size)

    sentence1 = jax.random.randint(k1, (seq_len, batch_size), 0, vocab_size, jnp.int32)
    sentence2 = jax.random.randint(k2, (seq_len, batch_size), 0, vocab_size, jnp.int32)

    fwd = jax.jit(functools.partial(bilstm_comp_forward,
                                    batch_size=batch_size, hidden_dim=hidden_dim))
    log_probs = fwd(params, sentence1, sentence2)
    jax.block_until_ready(log_probs)

    ref = _ref_forward(params, sentence1, sentence2, batch_size, hidden_dim)
    assert log_probs.shape == (batch_size, label_size)
    assert jnp.allclose(log_probs, ref, atol=2e-4, rtol=2e-4)

    print("KERNEL_OK")
</pallas_src>

<mosaic_0001>
module attributes {stable_mosaic.version = 11 : i64} {
  func.func @fused_bilstm_kernel(%arg0: memref<8x2xi32, #tpu.memory_space<smem>>, %arg1: memref<8x2xi32, #tpu.memory_space<smem>>, %arg2: memref<100x16xf32, #tpu.memory_space<vmem>>, %arg3: memref<16x256xf32, #tpu.memory_space<vmem>>, %arg4: memref<64x256xf32, #tpu.memory_space<vmem>>, %arg5: memref<1x256xf32, #tpu.memory_space<vmem>>, %arg6: memref<128x5xf32, #tpu.memory_space<vmem>>, %arg7: memref<1x5xf32, #tpu.memory_space<vmem>>, %arg8: memref<2x5xf32, #tpu.memory_space<vmem>>, %arg9: memref<16x16xf32, #tpu.memory_space<vmem>>, %arg10: memref<16x16xf32, #tpu.memory_space<vmem>>) attributes {dimension_semantics = [], scalar_prefetch = 0 : i64, scratch_operands = 2 : i64, tpu.core_type = #tpu.core_type<tc>} {
    %c0 = arith.constant 0 : index
    %c0_0 = arith.constant 0 : index
    %0 = memref.load %arg0[%c0, %c0_0] : memref<8x2xi32, #tpu.memory_space<smem>>
    %1 = arith.index_cast %0 : i32 to index
    %c0_1 = arith.constant 0 : index
    %2 = vector.load %arg2[%1, %c0_1] : memref<100x16xf32, #tpu.memory_space<vmem>>, vector<1x16xf32>
    %c0_2 = arith.constant 0 : index
    %c0_3 = arith.constant 0 : index
    %3 = vector.load %arg9[%c0_2, %c0_3] : memref<16x16xf32, #tpu.memory_space<vmem>>, vector<1x16xf32>
    tpu.vector_store %arg9[%c0_2, %c0_3], %2 {strides = array<i32>} : memref<16x16xf32, #tpu.memory_space<vmem>>, vector<1x16xf32>,
    %c0_4 = arith.constant 0 : index
    %c1 = arith.constant 1 : index
    %4 = memref.load %arg0[%c0_4, %c1] : memref<8x2xi32, #tpu.memory_space<smem>>
    %5 = arith.index_cast %4 : i32 to index
    %c0_5 = arith.constant 0 : index
    %6 = vector.load %arg2[%5, %c0_5] : memref<100x16xf32, #tpu.memory_space<vmem>>, vector<1x16xf32>
    %c1_6 = arith.constant 1 : index
    %c0_7 = arith.constant 0 : index
    %7 = vector.load %arg9[%c1_6, %c0_7] : memref<16x16xf32, #tpu.memory_space<vmem>>, vector<1x16xf32>
    tpu.vector_store %arg9[%c1_6, %c0_7], %6 {strides = array<i32>} : memref<16x16xf32, #tpu.memory_space<vmem>>, vector<1x16xf32>,
    %c1_8 = arith.constant 1 : index
    %c0_9 = arith.constant 0 : index
    %8 = memref.load %arg0[%c1_8, %c0_9] : memref<8x2xi32, #tpu.memory_space<smem>>
    %9 = arith.index_cast %8 : i32 to index
    %c0_10 = arith.constant 0 : index
    %10 = vector.load %arg2[%9, %c0_10] : memref<100x16xf32, #tpu.memory_space<vmem>>, vector<1x16xf32>
    %c2 = arith.constant 2 : index
    %c0_11 = arith.constant 0 : index
    %11 = vector.load %arg9[%c2, %c0_11] : memref<16x16xf32, #tpu.memory_space<vmem>>, vector<1x16xf32>
    tpu.vector_store %arg9[%c2, %c0_11], %10 {strides = array<i32>} : memref<16x16xf32, #tpu.memory_space<vmem>>, vector<1x16xf32>,
    %c1_12 = arith.constant 1 : index
    %c1_13 = arith.constant 1 : index
    %12 = memref.load %arg0[%c1_12, %c1_13] : memref<8x2xi32, #tpu.memory_space<smem>>
    %13 = arith.index_cast %12 : i32 to index
    %c0_14 = arith.constant 0 : index
    %14 = vector.load %arg2[%13, %c0_14] : memref<100x16xf32, #tpu.memory_space<vmem>>, vector<1x16xf32>
    %c3 = arith.constant 3 : index
    %c0_15 = arith.constant 0 : index
    %15 = vector.load %arg9[%c3, %c0_15] : memref<16x16xf32, #tpu.memory_space<vmem>>, vector<1x16xf32>
    tpu.vector_store %arg9[%c3, %c0_15], %14 {strides = array<i32>} : memref<16x16xf32, #tpu.memory_space<vmem>>, vector<1x16xf32>,
    %c2_16 = arith.constant 2 : index
    %c0_17 = arith.constant 0 : index
    %16 = memref.load %arg0[%c2_16, %c0_17] : memref<8x2xi32, #tpu.memory_space<smem>>
    %17 = arith.index_cast %16 : i32 to index
    %c0_18 = arith.constant 0 : index
    %18 = vector.load %arg2[%17, %c0_18] : memref<100x16xf32, #tpu.memory_space<vmem>>, vector<1x16xf32>
    %c4 = arith.constant 4 : index
    %c0_19 = arith.constant 0 : index
    %19 = vector.load %arg9[%c4, %c0_19] : memref<16x16xf32, #tpu.memory_space<vmem>>, vector<1x16xf32>
    tpu.vector_store %arg9[%c4, %c0_19], %18 {strides = array<i32>} : memref<16x16xf32, #tpu.memory_space<vmem>>, vector<1x16xf32>,
    %c2_20 = arith.constant 2 : index
    %c1_21 = arith.constant 1 : index
    %20 = memref.load %arg0[%c2_20, %c1_21] : memref<8x2xi32, #tpu.memory_space<smem>>
    %21 = arith.index_cast %20 : i32 to index
    %c0_22 = arith.constant 0 : index
    %22 = vector.load %arg2[%21, %c0_22] : memref<100x16xf32, #tpu.memory_space<vmem>>, vector<1x16xf32>
    %c5 = arith.constant 5 : index
    %c0_23 = arith.constant 0 : index
    %23 = vector.load %arg9[%c5, %c0_23] : memref<16x16xf32, #tpu.memory_space<vmem>>, vector<1x16xf32>
    tpu.vector_store %arg9[%c5, %c0_23], %22 {strides = array<i32>} : memref<16x16xf32, #tpu.memory_space<vmem>>, vector<1x16xf32>,
    %c3_24 = arith.constant 3 : index
    %c0_25 = arith.constant 0 : index
    %24 = memref.load %arg0[%c3_24, %c0_25] : memref<8x2xi32, #tpu.memory_space<smem>>
    %25 = arith.index_cast %24 : i32 to index
    %c0_26 = arith.constant 0 : index
    %26 = vector.load %arg2[%25, %c0_26] : memref<100x16xf32, #tpu.memory_space<vmem>>, vector<1x16xf32>
    %c6 = arith.constant 6 : index
    %c0_27 = arith.constant 0 : index
    %27 = vector.load %arg9[%c6, %c0_27] : memref<16x16xf32, #tpu.memory_space<vmem>>, vector<1x16xf32>
    tpu.vector_store %arg9[%c6, %c0_27], %26 {strides = array<i32>} : memref<16x16xf32, #tpu.memory_space<vmem>>, vector<1x16xf32>,
    %c3_28 = arith.constant 3 : index
    %c1_29 = arith.constant 1 : index
    %28 = memref.load %arg0[%c3_28, %c1_29] : memref<8x2xi32, #tpu.memory_space<smem>>
    %29 = arith.index_cast %28 : i32 to index
    %c0_30 = arith.constant 0 : index
    %30 = vector.load %arg2[%29, %c0_30] : memref<100x16xf32, #tpu.memory_space<vmem>>, vector<1x16xf32>
    %c7 = arith.constant 7 : index
    %c0_31 = arith.constant 0 : index
    %31 = vector.load %arg9[%c7, %c0_31] : memref<16x16xf32, #tpu.memory_space<vmem>>, vector<1x16xf32>
    tpu.vector_store %arg9[%c7, %c0_31], %30 {strides = array<i32>} : memref<16x16xf32, #tpu.memory_space<vmem>>, vector<1x16xf32>,
    %c4_32 = arith.constant 4 : index
    %c0_33 = arith.constant 0 : index
    %32 = memref.load %arg0[%c4_32, %c0_33] : memref<8x2xi32, #tpu.memory_space<smem>>
    %33 = arith.index_cast %32 : i32 to index
    %c0_34 = arith.constant 0 : index
    %34 = vector.load %arg2[%33, %c0_34] : memref<100x16xf32, #tpu.memory_space<vmem>>, vector<1x16xf32>
    %c8 = arith.constant 8 : index
    %c0_35 = arith.constant 0 : index
    %35 = vector.load %arg9[%c8, %c0_35] : memref<16x16xf32, #tpu.memory_space<vmem>>, vector<1x16xf32>
    tpu.vector_store %arg9[%c8, %c0_35], %34 {strides = array<i32>} : memref<16x16xf32, #tpu.memory_space<vmem>>, vector<1x16xf32>,
    %c4_36 = arith.constant 4 : index
    %c1_37 = arith.constant 1 : index
    %36 = memref.load %arg0[%c4_36, %c1_37] : memref<8x2xi32, #tpu.memory_space<smem>>
    %37 = arith.index_cast %36 : i32 to index
    %c0_38 = arith.constant 0 : index
    %38 = vector.load %arg2[%37, %c0_38] : memref<100x16xf32, #tpu.memory_space<vmem>>, vector<1x16xf32>
    %c9 = arith.constant 9 : index
    %c0_39 = arith.constant 0 : index
    %39 = vector.load %arg9[%c9, %c0_39] : memref<16x16xf32, #tpu.memory_space<vmem>>, vector<1x16xf32>
    tpu.vector_store %arg9[%c9, %c0_39], %38 {strides = array<i32>} : memref<16x16xf32, #tpu.memory_space<vmem>>, vector<1x16xf32>,
    %c5_40 = arith.constant 5 : index
    %c0_41 = arith.constant 0 : index
    %40 = memref.load %arg0[%c5_40, %c0_41] : memref<8x2xi32, #tpu.memory_space<smem>>
    %41 = arith.index_cast %40 : i32 to index
    %c0_42 = arith.constant 0 : index
    %42 = vector.load %arg2[%41, %c0_42] : memref<100x16xf32, #tpu.memory_space<vmem>>, vector<1x16xf32>
    %c10 = arith.constant 10 : index
    %c0_43 = arith.constant 0 : index
    %43 = vector.load %arg9[%c10, %c0_43] : memref<16x16xf32, #tpu.memory_space<vmem>>, vector<1x16xf32>
    tpu.vector_store %arg9[%c10, %c0_43], %42 {strides = array<i32>} : memref<16x16xf32, #tpu.memory_space<vmem>>, vector<1x16xf32>,
    %c5_44 = arith.constant 5 : index
    %c1_45 = arith.constant 1 : index
    %44 = memref.load %arg0[%c5_44, %c1_45] : memref<8x2xi32, #tpu.memory_space<smem>>
    %45 = arith.index_cast %44 : i32 to index
    %c0_46 = arith.constant 0 : index
    %46 = vector.load %arg2[%45, %c0_46] : memref<100x16xf32, #tpu.memory_space<vmem>>, vector<1x16xf32>
    %c11 = arith.constant 11 : index
    %c0_47 = arith.constant 0 : index
    %47 = vector.load %arg9[%c11, %c0_47] : memref<16x16xf32, #tpu.memory_space<vmem>>, vector<1x16xf32>
    tpu.vector_store %arg9[%c11, %c0_47], %46 {strides = array<i32>} : memref<16x16xf32, #tpu.memory_space<vmem>>, vector<1x16xf32>,
    %c6_48 = arith.constant 6 : index
    %c0_49 = arith.constant 0 : index
    %48 = memref.load %arg0[%c6_48, %c0_49] : memref<8x2xi32, #tpu.memory_space<smem>>
    %49 = arith.index_cast %48 : i32 to index
    %c0_50 = arith.constant 0 : index
    %50 = vector.load %arg2[%49, %c0_50] : memref<100x16xf32, #tpu.memory_space<vmem>>, vector<1x16xf32>
    %c12 = arith.constant 12 : index
    %c0_51 = arith.constant 0 : index
    %51 = vector.load %arg9[%c12, %c0_51] : memref<16x16xf32, #tpu.memory_space<vmem>>, vector<1x16xf32>
    tpu.vector_store %arg9[%c12, %c0_51], %50 {strides = array<i32>} : memref<16x16xf32, #tpu.memory_space<vmem>>, vector<1x16xf32>,
    %c6_52 = arith.constant 6 : index
    %c1_53 = arith.constant 1 : index
    %52 = memref.load %arg0[%c6_52, %c1_53] : memref<8x2xi32, #tpu.memory_space<smem>>
    %53 = arith.index_cast %52 : i32 to index
    %c0_54 = arith.constant 0 : index
    %54 = vector.load %arg2[%53, %c0_54] : memref<100x16xf32, #tpu.memory_space<vmem>>, vector<1x16xf32>
    %c13 = arith.constant 13 : index
    %c0_55 = arith.constant 0 : index
    %55 = vector.load %arg9[%c13, %c0_55] : memref<16x16xf32, #tpu.memory_space<vmem>>, vector<1x16xf32>
    tpu.vector_store %arg9[%c13, %c0_55], %54 {strides = array<i32>} : memref<16x16xf32, #tpu.memory_space<vmem>>, vector<1x16xf32>,
    %c7_56 = arith.constant 7 : index
    %c0_57 = arith.constant 0 : index
    %56 = memref.load %arg0[%c7_56, %c0_57] : memref<8x2xi32, #tpu.memory_space<smem>>
    %57 = arith.index_cast %56 : i32 to index
    %c0_58 = arith.constant 0 : index
    %58 = vector.load %arg2[%57, %c0_58] : memref<100x16xf32, #tpu.memory_space<vmem>>, vector<1x16xf32>
    %c14 = arith.constant 14 : index
    %c0_59 = arith.constant 0 : index
    %59 = vector.load %arg9[%c14, %c0_59] : memref<16x16xf32, #tpu.memory_space<vmem>>, vector<1x16xf32>
    tpu.vector_store %arg9[%c14, %c0_59], %58 {strides = array<i32>} : memref<16x16xf32, #tpu.memory_space<vmem>>, vector<1x16xf32>,
    %c7_60 = arith.constant 7 : index
    %c1_61 = arith.constant 1 : index
    %60 = memref.load %arg0[%c7_60, %c1_61] : memref<8x2xi32, #tpu.memory_space<smem>>
    %61 = arith.index_cast %60 : i32 to index
    %c0_62 = arith.constant 0 : index
    %62 = vector.load %arg2[%61, %c0_62] : memref<100x16xf32, #tpu.memory_space<vmem>>, vector<1x16xf32>
    %c15 = arith.constant 15 : index
    %c0_63 = arith.constant 0 : index
    %63 = vector.load %arg9[%c15, %c0_63] : memref<16x16xf32, #tpu.memory_space<vmem>>, vector<1x16xf32>
    tpu.vector_store %arg9[%c15, %c0_63], %62 {strides = array<i32>} : memref<16x16xf32, #tpu.memory_space<vmem>>, vector<1x16xf32>,
    %c0_64 = arith.constant 0 : index
    %c0_65 = arith.constant 0 : index
    %64 = memref.load %arg1[%c0_64, %c0_65] : memref<8x2xi32, #tpu.memory_space<smem>>
    %65 = arith.index_cast %64 : i32 to index
    %c0_66 = arith.constant 0 : index
    %66 = vector.load %arg2[%65, %c0_66] : memref<100x16xf32, #tpu.memory_space<vmem>>, vector<1x16xf32>
    %c0_67 = arith.constant 0 : index
    %c0_68 = arith.constant 0 : index
    %67 = vector.load %arg10[%c0_67, %c0_68] : memref<16x16xf32, #tpu.memory_space<vmem>>, vector<1x16xf32>
    tpu.vector_store %arg10[%c0_67, %c0_68], %66 {strides = array<i32>} : memref<16x16xf32, #tpu.memory_space<vmem>>, vector<1x16xf32>,
    %c0_69 = arith.constant 0 : index
    %c1_70 = arith.constant 1 : index
    %68 = memref.load %arg1[%c0_69, %c1_70] : memref<8x2xi32, #tpu.memory_space<smem>>
    %69 = arith.index_cast %68 : i32 to index
    %c0_71 = arith.constant 0 : index
    %70 = vector.load %arg2[%69, %c0_71] : memref<100x16xf32, #tpu.memory_space<vmem>>, vector<1x16xf32>
    %c1_72 = arith.constant 1 : index
    %c0_73 = arith.constant 0 : index
    %71 = vector.load %arg10[%c1_72, %c0_73] : memref<16x16xf32, #tpu.memory_space<vmem>>, vector<1x16xf32>
    tpu.vector_store %arg10[%c1_72, %c0_73], %70 {strides = array<i32>} : memref<16x16xf32, #tpu.memory_space<vmem>>, vector<1x16xf32>,
    %c1_74 = arith.constant 1 : index
    %c0_75 = arith.constant 0 : index
    %72 = memref.load %arg1[%c1_74, %c0_75] : memref<8x2xi32, #tpu.memory_space<smem>>
    %73 = arith.index_cast %72 : i32 to index
    %c0_76 = arith.constant 0 : index
    %74 = vector.load %arg2[%73, %c0_76] : memref<100x16xf32, #tpu.memory_space<vmem>>, vector<1x16xf32>
    %c2_77 = arith.constant 2 : index
    %c0_78 = arith.constant 0 : index
    %75 = vector.load %arg10[%c2_77, %c0_78] : memref<16x16xf32, #tpu.memory_space<vmem>>, vector<1x16xf32>
    tpu.vector_store %arg10[%c2_77, %c0_78], %74 {strides = array<i32>} : memref<16x16xf32, #tpu.memory_space<vmem>>, vector<1x16xf32>,
    %c1_79 = arith.constant 1 : index
    %c1_80 = arith.constant 1 : index
    %76 = memref.load %arg1[%c1_79, %c1_80] : memref<8x2xi32, #tpu.memory_space<smem>>
    %77 = arith.index_cast %76 : i32 to index
    %c0_81 = arith.constant 0 : index
    %78 = vector.load %arg2[%77, %c0_81] : memref<100x16xf32, #tpu.memory_space<vmem>>, vector<1x16xf32>
    %c3_82 = arith.constant 3 : index
    %c0_83 = arith.constant 0 : index
    %79 = vector.load %arg10[%c3_82, %c0_83] : memref<16x16xf32, #tpu.memory_space<vmem>>, vector<1x16xf32>
    tpu.vector_store %arg10[%c3_82, %c0_83], %78 {strides = array<i32>} : memref<16x16xf32, #tpu.memory_space<vmem>>, vector<1x16xf32>,
    %c2_84 = arith.constant 2 : index
    %c0_85 = arith.constant 0 : index
    %80 = memref.load %arg1[%c2_84, %c0_85] : memref<8x2xi32, #tpu.memory_space<smem>>
    %81 = arith.index_cast %80 : i32 to index
    %c0_86 = arith.constant 0 : index
    %82 = vector.load %arg2[%81, %c0_86] : memref<100x16xf32, #tpu.memory_space<vmem>>, vector<1x16xf32>
    %c4_87 = arith.constant 4 : index
    %c0_88 = arith.constant 0 : index
    %83 = vector.load %arg10[%c4_87, %c0_88] : memref<16x16xf32, #tpu.memory_space<vmem>>, vector<1x16xf32>
    tpu.vector_store %arg10[%c4_87, %c0_88], %82 {strides = array<i32>} : memref<16x16xf32, #tpu.memory_space<vmem>>, vector<1x16xf32>,
    %c2_89 = arith.constant 2 : index
    %c1_90 = arith.constant 1 : index
    %84 = memref.load %arg1[%c2_89, %c1_90] : memref<8x2xi32, #tpu.memory_space<smem>>
    %85 = arith.index_cast %84 : i32 to index
    %c0_91 = arith.constant 0 : index
    %86 = vector.load %arg2[%85, %c0_91] : memref<100x16xf32, #tpu.memory_space<vmem>>, vector<1x16xf32>
    %c5_92 = arith.constant 5 : index
    %c0_93 = arith.constant 0 : index
    %87 = vector.load %arg10[%c5_92, %c0_93] : memref<16x16xf32, #tpu.memory_space<vmem>>, vector<1x16xf32>
    tpu.vector_store %arg10[%c5_92, %c0_93], %86 {strides = array<i32>} : memref<16x16xf32, #tpu.memory_space<vmem>>, vector<1x16xf32>,
    %c3_94 = arith.constant 3 : index
    %c0_95 = arith.constant 0 : index
    %88 = memref.load %arg1[%c3_94, %c0_95] : memref<8x2xi32, #tpu.memory_space<smem>>
    %89 = arith.index_cast %88 : i32 to index
    %c0_96 = arith.constant 0 : index
    %90 = vector.load %arg2[%89, %c0_96] : memref<100x16xf32, #tpu.memory_space<vmem>>, vector<1x16xf32>
    %c6_97 = arith.constant 6 : index
    %c0_98 = arith.constant 0 : index
    %91 = vector.load %arg10[%c6_97, %c0_98] : memref<16x16xf32, #tpu.memory_space<vmem>>, vector<1x16xf32>
    tpu.vector_store %arg10[%c6_97, %c0_98], %90 {strides = array<i32>} : memref<16x16xf32, #tpu.memory_space<vmem>>, vector<1x16xf32>,
    %c3_99 = arith.constant 3 : index
    %c1_100 = arith.constant 1 : index
    %92 = memref.load %arg1[%c3_99, %c1_100] : memref<8x2xi32, #tpu.memory_space<smem>>
    %93 = arith.index_cast %92 : i32 to index
    %c0_101 = arith.constant 0 : index
    %94 = vector.load %arg2[%93, %c0_101] : memref<100x16xf32, #tpu.memory_space<vmem>>, vector<1x16xf32>
    %c7_102 = arith.constant 7 : index
    %c0_103 = arith.constant 0 : index
    %95 = vector.load %arg10[%c7_102, %c0_103] : memref<16x16xf32, #tpu.memory_space<vmem>>, vector<1x16xf32>
    tpu.vector_store %arg10[%c7_102, %c0_103], %94 {strides = array<i32>} : memref<16x16xf32, #tpu.memory_space<vmem>>, vector<1x16xf32>,
    %c4_104 = arith.constant 4 : index
    %c0_105 = arith.constant 0 : index
    %96 = memref.load %arg1[%c4_104, %c0_105] : memref<8x2xi32, #tpu.memory_space<smem>>
    %97 = arith.index_cast %96 : i32 to index
    %c0_106 = arith.constant 0 : index
    %98 = vector.load %arg2[%97, %c0_106] : memref<100x16xf32, #tpu.memory_space<vmem>>, vector<1x16xf32>
    %c8_107 = arith.constant 8 : index
    %c0_108 = arith.constant 0 : index
    %99 = vector.load %arg10[%c8_107, %c0_108] : memref<16x16xf32, #tpu.memory_space<vmem>>, vector<1x16xf32>
    tpu.vector_store %arg10[%c8_107, %c0_108], %98 {strides = array<i32>} : memref<16x16xf32, #tpu.memory_space<vmem>>, vector<1x16xf32>,
    %c4_109 = arith.constant 4 : index
    %c1_110 = arith.constant 1 : index
    %100 = memref.load %arg1[%c4_109, %c1_110] : memref<8x2xi32, #tpu.memory_space<smem>>
    %101 = arith.index_cast %100 : i32 to index
    %c0_111 = arith.constant 0 : index
    %102 = vector.load %arg2[%101, %c0_111] : memref<100x16xf32, #tpu.memory_space<vmem>>, vector<1x16xf32>
    %c9_112 = arith.constant 9 : index
    %c0_113 = arith.constant 0 : index
    %103 = vector.load %arg10[%c9_112, %c0_113] : memref<16x16xf32, #tpu.memory_space<vmem>>, vector<1x16xf32>
    tpu.vector_store %arg10[%c9_112, %c0_113], %102 {strides = array<i32>} : memref<16x16xf32, #tpu.memory_space<vmem>>, vector<1x16xf32>,
    %c5_114 = arith.constant 5 : index
    %c0_115 = arith.constant 0 : index
    %104 = memref.load %arg1[%c5_114, %c0_115] : memref<8x2xi32, #tpu.memory_space<smem>>
    %105 = arith.index_cast %104 : i32 to index
    %c0_116 = arith.constant 0 : index
    %106 = vector.load %arg2[%105, %c0_116] : memref<100x16xf32, #tpu.memory_space<vmem>>, vector<1x16xf32>
    %c10_117 = arith.constant 10 : index
    %c0_118 = arith.constant 0 : index
    %107 = vector.load %arg10[%c10_117, %c0_118] : memref<16x16xf32, #tpu.memory_space<vmem>>, vector<1x16xf32>
    tpu.vector_store %arg10[%c10_117, %c0_118], %106 {strides = array<i32>} : memref<16x16xf32, #tpu.memory_space<vmem>>, vector<1x16xf32>,
    %c5_119 = arith.constant 5 : index
    %c1_120 = arith.constant 1 : index
    %108 = memref.load %arg1[%c5_119, %c1_120] : memref<8x2xi32, #tpu.memory_space<smem>>
    %109 = arith.index_cast %108 : i32 to index
    %c0_121 = arith.constant 0 : index
    %110 = vector.load %arg2[%109, %c0_121] : memref<100x16xf32, #tpu.memory_space<vmem>>, vector<1x16xf32>
    %c11_122 = arith.constant 11 : index
    %c0_123 = arith.constant 0 : index
    %111 = vector.load %arg10[%c11_122, %c0_123] : memref<16x16xf32, #tpu.memory_space<vmem>>, vector<1x16xf32>
    tpu.vector_store %arg10[%c11_122, %c0_123], %110 {strides = array<i32>} : memref<16x16xf32, #tpu.memory_space<vmem>>, vector<1x16xf32>,
    %c6_124 = arith.constant 6 : index
    %c0_125 = arith.constant 0 : index
    %112 = memref.load %arg1[%c6_124, %c0_125] : memref<8x2xi32, #tpu.memory_space<smem>>
    %113 = arith.index_cast %112 : i32 to index
    %c0_126 = arith.constant 0 : index
    %114 = vector.load %arg2[%113, %c0_126] : memref<100x16xf32, #tpu.memory_space<vmem>>, vector<1x16xf32>
    %c12_127 = arith.constant 12 : index
    %c0_128 = arith.constant 0 : index
    %115 = vector.load %arg10[%c12_127, %c0_128] : memref<16x16xf32, #tpu.memory_space<vmem>>, vector<1x16xf32>
    tpu.vector_store %arg10[%c12_127, %c0_128], %114 {strides = array<i32>} : memref<16x16xf32, #tpu.memory_space<vmem>>, vector<1x16xf32>,
    %c6_129 = arith.constant 6 : index
    %c1_130 = arith.constant 1 : index
    %116 = memref.load %arg1[%c6_129, %c1_130] : memref<8x2xi32, #tpu.memory_space<smem>>
    %117 = arith.index_cast %116 : i32 to index
    %c0_131 = arith.constant 0 : index
    %118 = vector.load %arg2[%117, %c0_131] : memref<100x16xf32, #tpu.memory_space<vmem>>, vector<1x16xf32>
    %c13_132 = arith.constant 13 : index
    %c0_133 = arith.constant 0 : index
    %119 = vector.load %arg10[%c13_132, %c0_133] : memref<16x16xf32, #tpu.memory_space<vmem>>, vector<1x16xf32>
    tpu.vector_store %arg10[%c13_132, %c0_133], %118 {strides = array<i32>} : memref<16x16xf32, #tpu.memory_space<vmem>>, vector<1x16xf32>,
    %c7_134 = arith.constant 7 : index
    %c0_135 = arith.constant 0 : index
    %120 = memref.load %arg1[%c7_134, %c0_135] : memref<8x2xi32, #tpu.memory_space<smem>>
    %121 = arith.index_cast %120 : i32 to index
    %c0_136 = arith.constant 0 : index
    %122 = vector.load %arg2[%121, %c0_136] : memref<100x16xf32, #tpu.memory_space<vmem>>, vector<1x16xf32>
    %c14_137 = arith.constant 14 : index
    %c0_138 = arith.constant 0 : index
    %123 = vector.load %arg10[%c14_137, %c0_138] : memref<16x16xf32, #tpu.memory_space<vmem>>, vector<1x16xf32>
    tpu.vector_store %arg10[%c14_137, %c0_138], %122 {strides = array<i32>} : memref<16x16xf32, #tpu.memory_space<vmem>>, vector<1x16xf32>,
    %c7_139 = arith.constant 7 : index
    %c1_140 = arith.constant 1 : index
    %124 = memref.load %arg1[%c7_139, %c1_140] : memref<8x2xi32, #tpu.memory_space<smem>>
    %125 = arith.index_cast %124 : i32 to index
    %c0_141 = arith.constant 0 : index
    %126 = vector.load %arg2[%125, %c0_141] : memref<100x16xf32, #tpu.memory_space<vmem>>, vector<1x16xf32>
    %c15_142 = arith.constant 15 : index
    %c0_143 = arith.constant 0 : index
    %127 = vector.load %arg10[%c15_142, %c0_143] : memref<16x16xf32, #tpu.memory_space<vmem>>, vector<1x16xf32>
    tpu.vector_store %arg10[%c15_142, %c0_143], %126 {strides = array<i32>} : memref<16x16xf32, #tpu.memory_space<vmem>>, vector<1x16xf32>,
    %c0_144 = arith.constant 0 : index
    %c0_145 = arith.constant 0 : index
    %128 = vector.load %arg5[%c0_144, %c0_145] : memref<1x256xf32, #tpu.memory_space<vmem>>, vector<1x256xf32>
    %c0_146 = arith.constant 0 : index
    %c0_147 = arith.constant 0 : index
    %129 = vector.load %arg9[%c0_146, %c0_147] : memref<16x16xf32, #tpu.memory_space<vmem>>, vector<16x16xf32>
    %c0_148 = arith.constant 0 : index
    %c0_149 = arith.constant 0 : index
    %130 = vector.load %arg3[%c0_148, %c0_149] : memref<16x256xf32, #tpu.memory_space<vmem>>, vector<16x256xf32>
    %cst = arith.constant dense<0.000000e+00> : vector<16x256xf32>
    %131 = tpu.matmul %129, %130, %cst {dimension_numbers = #tpu.dot_dimension_numbers<[1], [0], [0], [1], [0, 0, 1, 1], [], []>} : vector<16x16xf32>, vector<16x256xf32>, vector<16x256xf32> -> vector<16x256xf32>
    %132 = vector.broadcast %128 : vector<1x256xf32> to vector<16x256xf32>
    %133 = arith.addf %131, %132 : vector<16x256xf32>
    %c0_150 = arith.constant 0 : index
    %c0_151 = arith.constant 0 : index
    %134 = vector.load %arg10[%c0_150, %c0_151] : memref<16x16xf32, #tpu.memory_space<vmem>>, vector<16x16xf32>
    %c0_152 = arith.constant 0 : index
    %c0_153 = arith.constant 0 : index
    %135 = vector.load %arg3[%c0_152, %c0_153] : memref<16x256xf32, #tpu.memory_space<vmem>>, vector<16x256xf32>
    %cst_154 = arith.constant dense<0.000000e+00> : vector<16x256xf32>
    %136 = tpu.matmul %134, %135, %cst_154 {dimension_numbers = #tpu.dot_dimension_numbers<[1], [0], [0], [1], [0, 0, 1, 1], [], []>} : vector<16x16xf32>, vector<16x256xf32>, vector<16x256xf32> -> vector<16x256xf32>
    %137 = vector.broadcast %128 : vector<1x256xf32> to vector<16x256xf32>
    %138 = arith.addf %136, %137 : vector<16x256xf32>
    %c0_155 = arith.constant 0 : index
    %c0_156 = arith.constant 0 : index
    %139 = vector.load %arg4[%c0_155, %c0_156] : memref<64x256xf32, #tpu.memory_space<vmem>>, vector<64x256xf32>
    %140 = tpu.iota {dimensions = array<i32: 1>} : vector<2x256xi32>
    %c64_i32 = arith.constant 64 : i32
    %c0_i32 = arith.constant 0 : i32
    %141 = arith.cmpi eq, %c64_i32, %c0_i32 : i32
    %c1_i32 = arith.constant 1 : i32
    %142 = arith.select %141, %c1_i32, %c64_i32 : i32
    %143 = vector.broadcast %142 : i32 to vector<2x256xi32>
    %144 = arith.remsi %140, %143 : vector<2x256xi32>
    %c0_i32_157 = arith.constant 0 : i32
    %145 = vector.broadcast %c0_i32_157 : i32 to vector<2x256xi32>
    %146 = arith.cmpi ne, %144, %145 : vector<2x256xi32>
    %c0_i32_158 = arith.constant 0 : i32
    %147 = vector.broadcast %c0_i32_158 : i32 to vector<2x256xi32>
    %148 = arith.cmpi slt, %144, %147 : vector<2x256xi32>
    %c0_i32_159 = arith.constant 0 : i32
    %149 = arith.cmpi slt, %142, %c0_i32_159 : i32
    %150 = vector.broadcast %149 : i1 to vector<2x256xi1>
    %151 = vector.broadcast %150 : vector<2x256xi1> to vector<2x256xi1>
    %152 = arith.xori %148, %151 : vector<2x256xi1>
    %153 = arith.andi %152, %146 : vector<2x256xi1>
    %154 = vector.broadcast %142 : i32 to vector<2x256xi32>
    %155 = arith.addi %144, %154 : vector<2x256xi32>
    %156 = arith.select %153, %155, %144 : vector<2x256xi1>, vector<2x256xi32>
    %c32_i32 = arith.constant 32 : i32
    %157 = vector.broadcast %c32_i32 : i32 to vector<2x256xi32>
    %158 = arith.cmpi slt, %156, %157 : vector<2x256xi32>
    %cst_160 = arith.constant 0.000000e+00 : f32
    %159 = vector.broadcast %cst_160 : f32 to vector<2x64xf32>
    %cst_161 = arith.constant 0.000000e+00 : f32
    %160 = vector.broadcast %cst_161 : f32 to vector<2x64xf32>
    %161 = vector.extract_strided_slice %133 {offsets = [0, 0], sizes = [2, 256], strides = [1, 1]} : vector<16x256xf32> to vector<2x256xf32>
    %162 = vector.extract_strided_slice %133 {offsets = [14, 0], sizes = [2, 256], strides = [1, 1]} : vector<16x256xf32> to vector<2x256xf32>
    %163 = arith.select %158, %161, %162 : vector<2x256xi1>, vector<2x256xf32>
    %cst_162 = arith.constant dense<0.000000e+00> : vector<2x256xf32>
    %164 = tpu.matmul %159, %139, %cst_162 {dimension_numbers = #tpu.dot_dimension_numbers<[1], [0], [0], [1], [0, 0, 1, 1], [], []>} : vector<2x64xf32>, vector<64x256xf32>, vector<2x256xf32> -> vector<2x256xf32>
    %165 = arith.addf %163, %164 : vector<2x256xf32>
    %166 = vector.extract_strided_slice %165 {offsets = [0, 0], sizes = [2, 192], strides = [1, 1]} : vector<2x256xf32> to vector<2x192xf32>
    %167 = arith.negf %166 : vector<2x192xf32>
    %168 = math.exp %167 : vector<2x192xf32>
    %cst_163 = arith.constant 1.000000e+00 : f32
    %169 = vector.broadcast %cst_163 : f32 to vector<2x192xf32>
    %170 = arith.addf %169, %168 : vector<2x192xf32>
    %171 = arith.divf %169, %170 : vector<2x192xf32>
    %172 = vector.extract_strided_slice %165 {offsets = [0, 192], sizes = [2, 64], strides = [1, 1]} : vector<2x256xf32> to vector<2x64xf32>
    %173 = math.tanh %172 : vector<2x64xf32>
    %174 = vector.extract_strided_slice %171 {offsets = [0, 0], sizes = [2, 64], strides = [1, 1]} : vector<2x192xf32> to vector<2x64xf32>
    %175 = vector.extract_strided_slice %171 {offsets = [0, 64], sizes = [2, 64], strides = [1, 1]} : vector<2x192xf32> to vector<2x64xf32>
    %176 = vector.extract_strided_slice %171 {offsets = [0, 128], sizes = [2, 64], strides = [1, 1]} : vector<2x192xf32> to vector<2x64xf32>
    %177 = arith.mulf %175, %160 : vector<2x64xf32>
    %178 = arith.mulf %174, %173 : vector<2x64xf32>
    %179 = arith.addf %177, %178 : vector<2x64xf32>
    %180 = math.tanh %179 : vector<2x64xf32>
    %181 = arith.mulf %176, %180 : vector<2x64xf32>
    %182 = vector.extract_strided_slice %181 {offsets = [0, 32], sizes = [2, 32], strides = [1, 1]} : vector<2x64xf32> to vector<2x32xf32>
    %183 = vector.extract_strided_slice %133 {offsets = [2, 0], sizes = [2, 256], strides = [1, 1]} : vector<16x256xf32> to vector<2x256xf32>
    %184 = vector.extract_strided_slice %133 {offsets = [12, 0], sizes = [2, 256], strides = [1, 1]} : vector<16x256xf32> to vector<2x256xf32>
    %185 = arith.select %158, %183, %184 : vector<2x256xi1>, vector<2x256xf32>
    %cst_164 = arith.constant dense<0.000000e+00> : vector<2x256xf32>
    %186 = tpu.matmul %181, %139, %cst_164 {dimension_numbers = #tpu.dot_dimension_numbers<[1], [0], [0], [1], [0, 0, 1, 1], [], []>} : vector<2x64xf32>, vector<64x256xf32>, vector<2x256xf32> -> vector<2x256xf32>
    %187 = arith.addf %185, %186 : vector<2x256xf32>
    %188 = vector.extract_strided_slice %187 {offsets = [0, 0], sizes = [2, 192], strides = [1, 1]} : vector<2x256xf32> to vector<2x192xf32>
    %189 = arith.negf %188 : vector<2x192xf32>
    %190 = math.exp %189 : vector<2x192xf32>
    %cst_165 = arith.constant 1.000000e+00 : f32
    %191 = vector.broadcast %cst_165 : f32 to vector<2x192xf32>
    %192 = arith.addf %191, %190 : vector<2x192xf32>
    %193 = arith.divf %191, %192 : vector<2x192xf32>
    %194 = vector.extract_strided_slice %187 {offsets = [0, 192], sizes = [2, 64], strides = [1, 1]} : vector<2x256xf32> to vector<2x64xf32>
    %195 = math.tanh %194 : vector<2x64xf32>
    %196 = vector.extract_strided_slice %193 {offsets = [0, 0], sizes = [2, 64], strides = [1, 1]} : vector<2x192xf32> to vector<2x64xf32>
    %197 = vector.extract_strided_slice %193 {offsets = [0, 64], sizes = [2, 64], strides = [1, 1]} : vector<2x192xf32> to vector<2x64xf32>
    %198 = vector.extract_strided_slice %193 {offsets = [0, 128], sizes = [2, 64], strides = [1, 1]} : vector<2x192xf32> to vector<2x64xf32>
    %199 = arith.mulf %197, %179 : vector<2x64xf32>
    %200 = arith.mulf %196, %195 : vector<2x64xf32>
    %201 = arith.addf %199, %200 : vector<2x64xf32>
    %202 = math.tanh %201 : vector<2x64xf32>
    %203 = arith.mulf %198, %202 : vector<2x64xf32>
    %204 = vector.extract_strided_slice %133 {offsets = [4, 0], sizes = [2, 256], strides = [1, 1]} : vector<16x256xf32> to vector<2x256xf32>
    %205 = vector.extract_strided_slice %133 {offsets = [10, 0], sizes = [2, 256], strides = [1, 1]} : vector<16x256xf32> to vector<2x256xf32>
    %206 = arith.select %158, %204, %205 : vector<2x256xi1>, vector<2x256xf32>
    %cst_166 = arith.constant dense<0.000000e+00> : vector<2x256xf32>
    %207 = tpu.matmul %203, %139, %cst_166 {dimension_numbers = #tpu.dot_dimension_numbers<[1], [0], [0], [1], [0, 0, 1, 1], [], []>} : vector<2x64xf32>, vector<64x256xf32>, vector<2x256xf32> -> vector<2x256xf32>
    %208 = arith.addf %206, %207 : vector<2x256xf32>
    %209 = vector.extract_strided_slice %208 {offsets = [0, 0], sizes = [2, 192], strides = [1, 1]} : vector<2x256xf32> to vector<2x192xf32>
    %210 = arith.negf %209 : vector<2x192xf32>
    %211 = math.exp %210 : vector<2x192xf32>
    %cst_167 = arith.constant 1.000000e+00 : f32
    %212 = vector.broadcast %cst_167 : f32 to vector<2x192xf32>
    %213 = arith.addf %212, %211 : vector<2x192xf32>
    %214 = arith.divf %212, %213 : vector<2x192xf32>
    %215 = vector.extract_strided_slice %208 {offsets = [0, 192], sizes = [2, 64], strides = [1, 1]} : vector<2x256xf32> to vector<2x64xf32>
    %216 = math.tanh %215 : vector<2x64xf32>
    %217 = vector.extract_strided_slice %214 {offsets = [0, 0], sizes = [2, 64], strides = [1, 1]} : vector<2x192xf32> to vector<2x64xf32>
    %218 = vector.extract_strided_slice %214 {offsets = [0, 64], sizes = [2, 64], strides = [1, 1]} : vector<2x192xf32> to vector<2x64xf32>
    %219 = vector.extract_strided_slice %214 {offsets = [0, 128], sizes = [2, 64], strides = [1, 1]} : vector<2x192xf32> to vector<2x64xf32>
    %220 = arith.mulf %218, %201 : vector<2x64xf32>
    %221 = arith.mulf %217, %216 : vector<2x64xf32>
    %222 = arith.addf %220, %221 : vector<2x64xf32>
    %223 = math.tanh %222 : vector<2x64xf32>
    %224 = arith.mulf %219, %223 : vector<2x64xf32>
    %225 = vector.extract_strided_slice %133 {offsets = [6, 0], sizes = [2, 256], strides = [1, 1]} : vector<16x256xf32> to vector<2x256xf32>
    %226 = vector.extract_strided_slice %133 {offsets = [8, 0], sizes = [2, 256], strides = [1, 1]} : vector<16x256xf32> to vector<2x256xf32>
    %227 = arith.select %158, %225, %226 : vector<2x256xi1>, vector<2x256xf32>
    %cst_168 = arith.constant dense<0.000000e+00> : vector<2x256xf32>
    %228 = tpu.matmul %224, %139, %cst_168 {dimension_numbers = #tpu.dot_dimension_numbers<[1], [0], [0], [1], [0, 0, 1, 1], [], []>} : vector<2x64xf32>, vector<64x256xf32>, vector<2x256xf32> -> vector<2x256xf32>
    %229 = arith.addf %227, %228 : vector<2x256xf32>
    %230 = vector.extract_strided_slice %229 {offsets = [0, 0], sizes = [2, 192], strides = [1, 1]} : vector<2x256xf32> to vector<2x192xf32>
    %231 = arith.negf %230 : vector<2x192xf32>
    %232 = math.exp %231 : vector<2x192xf32>
    %cst_169 = arith.constant 1.000000e+00 : f32
    %233 = vector.broadcast %cst_169 : f32 to vector<2x192xf32>
    %234 = arith.addf %233, %232 : vector<2x192xf32>
    %235 = arith.divf %233, %234 : vector<2x192xf32>
    %236 = vector.extract_strided_slice %229 {offsets = [0, 192], sizes = [2, 64], strides = [1, 1]} : vector<2x256xf32> to vector<2x64xf32>
    %237 = math.tanh %236 : vector<2x64xf32>
    %238 = vector.extract_strided_slice %235 {offsets = [0, 0], sizes = [2, 64], strides = [1, 1]} : vector<2x192xf32> to vector<2x64xf32>
    %239 = vector.extract_strided_slice %235 {offsets = [0, 64], sizes = [2, 64], strides = [1, 1]} : vector<2x192xf32> to vector<2x64xf32>
    %240 = vector.extract_strided_slice %235 {offsets = [0, 128], sizes = [2, 64], strides = [1, 1]} : vector<2x192xf32> to vector<2x64xf32>
    %241 = arith.mulf %239, %222 : vector<2x64xf32>
    %242 = arith.mulf %238, %237 : vector<2x64xf32>
    %243 = arith.addf %241, %242 : vector<2x64xf32>
    %244 = math.tanh %243 : vector<2x64xf32>
    %245 = arith.mulf %240, %244 : vector<2x64xf32>
    %246 = vector.extract_strided_slice %133 {offsets = [8, 0], sizes = [2, 256], strides = [1, 1]} : vector<16x256xf32> to vector<2x256xf32>
    %247 = vector.extract_strided_slice %133 {offsets = [6, 0], sizes = [2, 256], strides = [1, 1]} : vector<16x256xf32> to vector<2x256xf32>
    %248 = arith.select %158, %246, %247 : vector<2x256xi1>, vector<2x256xf32>
    %cst_170 = arith.constant dense<0.000000e+00> : vector<2x256xf32>
    %249 = tpu.matmul %245, %139, %cst_170 {dimension_numbers = #tpu.dot_dimension_numbers<[1], [0], [0], [1], [0, 0, 1, 1], [], []>} : vector<2x64xf32>, vector<64x256xf32>, vector<2x256xf32> -> vector<2x256xf32>
    %250 = arith.addf %248, %249 : vector<2x256xf32>
    %251 = vector.extract_strided_slice %250 {offsets = [0, 0], sizes = [2, 192], strides = [1, 1]} : vector<2x256xf32> to vector<2x192xf32>
    %252 = arith.negf %251 : vector<2x192xf32>
    %253 = math.exp %252 : vector<2x192xf32>
    %cst_171 = arith.constant 1.000000e+00 : f32
    %254 = vector.broadcast %cst_171 : f32 to vector<2x192xf32>
    %255 = arith.addf %254, %253 : vector<2x192xf32>
    %256 = arith.divf %254, %255 : vector<2x192xf32>
    %257 = vector.extract_strided_slice %250 {offsets = [0, 192], sizes = [2, 64], strides = [1, 1]} : vector<2x256xf32> to vector<2x64xf32>
    %258 = math.tanh %257 : vector<2x64xf32>
    %259 = vector.extract_strided_slice %256 {offsets = [0, 0], sizes = [2, 64], strides = [1, 1]} : vector<2x192xf32> to vector<2x64xf32>
    %260 = vector.extract_strided_slice %256 {offsets = [0, 64], sizes = [2, 64], strides = [1, 1]} : vector<2x192xf32> to vector<2x64xf32>
    %261 = vector.extract_strided_slice %256 {offsets = [0, 128], sizes = [2, 64], strides = [1, 1]} : vector<2x192xf32> to vector<2x64xf32>
    %262 = arith.mulf %260, %243 : vector<2x64xf32>
    %263 = arith.mulf %259, %258 : vector<2x64xf32>
    %264 = arith.addf %262, %263 : vector<2x64xf32>
    %265 = math.tanh %264 : vector<2x64xf32>
    %266 = arith.mulf %261, %265 : vector<2x64xf32>
    %267 = vector.extract_strided_slice %133 {offsets = [10, 0], sizes = [2, 256], strides = [1, 1]} : vector<16x256xf32> to vector<2x256xf32>
    %268 = vector.extract_strided_slice %133 {offsets = [4, 0], sizes = [2, 256], strides = [1, 1]} : vector<16x256xf32> to vector<2x256xf32>
    %269 = arith.select %158, %267, %268 : vector<2x256xi1>, vector<2x256xf32>
    %cst_172 = arith.constant dense<0.000000e+00> : vector<2x256xf32>
    %270 = tpu.matmul %266, %139, %cst_172 {dimension_numbers = #tpu.dot_dimension_numbers<[1], [0], [0], [1], [0, 0, 1, 1], [], []>} : vector<2x64xf32>, vector<64x256xf32>, vector<2x256xf32> -> vector<2x256xf32>
    %271 = arith.addf %269, %270 : vector<2x256xf32>
    %272 = vector.extract_strided_slice %271 {offsets = [0, 0], sizes = [2, 192], strides = [1, 1]} : vector<2x256xf32> to vector<2x192xf32>
    %273 = arith.negf %272 : vector<2x192xf32>
    %274 = math.exp %273 : vector<2x192xf32>
    %cst_173 = arith.constant 1.000000e+00 : f32
    %275 = vector.broadcast %cst_173 : f32 to vector<2x192xf32>
    %276 = arith.addf %275, %274 : vector<2x192xf32>
    %277 = arith.divf %275, %276 : vector<2x192xf32>
    %278 = vector.extract_strided_slice %271 {offsets = [0, 192], sizes = [2, 64], strides = [1, 1]} : vector<2x256xf32> to vector<2x64xf32>
    %279 = math.tanh %278 : vector<2x64xf32>
    %280 = vector.extract_strided_slice %277 {offsets = [0, 0], sizes = [2, 64], strides = [1, 1]} : vector<2x192xf32> to vector<2x64xf32>
    %281 = vector.extract_strided_slice %277 {offsets = [0, 64], sizes = [2, 64], strides = [1, 1]} : vector<2x192xf32> to vector<2x64xf32>
    %282 = vector.extract_strided_slice %277 {offsets = [0, 128], sizes = [2, 64], strides = [1, 1]} : vector<2x192xf32> to vector<2x64xf32>
    %283 = arith.mulf %281, %264 : vector<2x64xf32>
    %284 = arith.mulf %280, %279 : vector<2x64xf32>
    %285 = arith.addf %283, %284 : vector<2x64xf32>
    %286 = math.tanh %285 : vector<2x64xf32>
    %287 = arith.mulf %282, %286 : vector<2x64xf32>
    %288 = vector.extract_strided_slice %133 {offsets = [12, 0], sizes = [2, 256], strides = [1, 1]} : vector<16x256xf32> to vector<2x256xf32>
    %289 = vector.extract_strided_slice %133 {offsets = [2, 0], sizes = [2, 256], strides = [1, 1]} : vector<16x256xf32> to vector<2x256xf32>
    %290 = arith.select %158, %288, %289 : vector<2x256xi1>, vector<2x256xf32>
    %cst_174 = arith.constant dense<0.000000e+00> : vector<2x256xf32>
    %291 = tpu.matmul %287, %139, %cst_174 {dimension_numbers = #tpu.dot_dimension_numbers<[1], [0], [0], [1], [0, 0, 1, 1], [], []>} : vector<2x64xf32>, vector<64x256xf32>, vector<2x256xf32> -> vector<2x256xf32>
    %292 = arith.addf %290, %291 : vector<2x256xf32>
    %293 = vector.extract_strided_slice %292 {offsets = [0, 0], sizes = [2, 192], strides = [1, 1]} : vector<2x256xf32> to vector<2x192xf32>
    %294 = arith.negf %293 : vector<2x192xf32>
    %295 = math.exp %294 : vector<2x192xf32>
    %cst_175 = arith.constant 1.000000e+00 : f32
    %296 = vector.broadcast %cst_175 : f32 to vector<2x192xf32>
    %297 = arith.addf %296, %295 : vector<2x192xf32>
    %298 = arith.divf %296, %297 : vector<2x192xf32>
    %299 = vector.extract_strided_slice %292 {offsets = [0, 192], sizes = [2, 64], strides = [1, 1]} : vector<2x256xf32> to vector<2x64xf32>
    %300 = math.tanh %299 : vector<2x64xf32>
    %301 = vector.extract_strided_slice %298 {offsets = [0, 0], sizes = [2, 64], strides = [1, 1]} : vector<2x192xf32> to vector<2x64xf32>
    %302 = vector.extract_strided_slice %298 {offsets = [0, 64], sizes = [2, 64], strides = [1, 1]} : vector<2x192xf32> to vector<2x64xf32>
    %303 = vector.extract_strided_slice %298 {offsets = [0, 128], sizes = [2, 64], strides = [1, 1]} : vector<2x192xf32> to vector<2x64xf32>
    %304 = arith.mulf %302, %285 : vector<2x64xf32>
    %305 = arith.mulf %301, %300 : vector<2x64xf32>
    %306 = arith.addf %304, %305 : vector<2x64xf32>
    %307 = math.tanh %306 : vector<2x64xf32>
    %308 = arith.mulf %303, %307 : vector<2x64xf32>
    %309 = vector.extract_strided_slice %133 {offsets = [14, 0], sizes = [2, 256], strides = [1, 1]} : vector<16x256xf32> to vector<2x256xf32>
    %310 = vector.extract_strided_slice %133 {offsets = [0, 0], sizes = [2, 256], strides = [1, 1]} : vector<16x256xf32> to vector<2x256xf32>
    %311 = arith.select %158, %309, %310 : vector<2x256xi1>, vector<2x256xf32>
    %cst_176 = arith.constant dense<0.000000e+00> : vector<2x256xf32>
    %312 = tpu.matmul %308, %139, %cst_176 {dimension_numbers = #tpu.dot_dimension_numbers<[1], [0], [0], [1], [0, 0, 1, 1], [], []>} : vector<2x64xf32>, vector<64x256xf32>, vector<2x256xf32> -> vector<2x256xf32>
    %313 = arith.addf %311, %312 : vector<2x256xf32>
    %314 = vector.extract_strided_slice %313 {offsets = [0, 0], sizes = [2, 192], strides = [1, 1]} : vector<2x256xf32> to vector<2x192xf32>
    %315 = arith.negf %314 : vector<2x192xf32>
    %316 = math.exp %315 : vector<2x192xf32>
    %cst_177 = arith.constant 1.000000e+00 : f32
    %317 = vector.broadcast %cst_177 : f32 to vector<2x192xf32>
    %318 = arith.addf %317, %316 : vector<2x192xf32>
    %319 = arith.divf %317, %318 : vector<2x192xf32>
    %320 = vector.extract_strided_slice %313 {offsets = [0, 192], sizes = [2, 64], strides = [1, 1]} : vector<2x256xf32> to vector<2x64xf32>
    %321 = math.tanh %320 : vector<2x64xf32>
    %322 = vector.extract_strided_slice %319 {offsets = [0, 0], sizes = [2, 64], strides = [1, 1]} : vector<2x192xf32> to vector<2x64xf32>
    %323 = vector.extract_strided_slice %319 {offsets = [0, 64], sizes = [2, 64], strides = [1, 1]} : vector<2x192xf32> to vector<2x64xf32>
    %324 = vector.extract_strided_slice %319 {offsets = [0, 128], sizes = [2, 64], strides = [1, 1]} : vector<2x192xf32> to vector<2x64xf32>
    %325 = arith.mulf %323, %306 : vector<2x64xf32>
    %326 = arith.mulf %322, %321 : vector<2x64xf32>
    %327 = arith.addf %325, %326 : vector<2x64xf32>
    %328 = math.tanh %327 : vector<2x64xf32>
    %329 = arith.mulf %324, %328 : vector<2x64xf32>
    %330 = vector.extract_strided_slice %329 {offsets = [0, 0], sizes = [2, 32], strides = [1, 1]} : vector<2x64xf32> to vector<2x32xf32>
    %331 = vector.extract_strided_slice %138 {offsets = [0, 0], sizes = [2, 256], strides = [1, 1]} : vector<16x256xf32> to vector<2x256xf32>
    %332 = vector.extract_strided_slice %138 {offsets = [14, 0], sizes = [2, 256], strides = [1, 1]} : vector<16x256xf32> to vector<2x256xf32>
    %333 = arith.select %158, %331, %332 : vector<2x256xi1>, vector<2x256xf32>
    %cst_178 = arith.constant dense<0.000000e+00> : vector<2x256xf32>
    %334 = tpu.matmul %329, %139, %cst_178 {dimension_numbers = #tpu.dot_dimension_numbers<[1], [0], [0], [1], [0, 0, 1, 1], [], []>} : vector<2x64xf32>, vector<64x256xf32>, vector<2x256xf32> -> vector<2x256xf32>
    %335 = arith.addf %333, %334 : vector<2x256xf32>
    %336 = vector.extract_strided_slice %335 {offsets = [0, 0], sizes = [2, 192], strides = [1, 1]} : vector<2x256xf32> to vector<2x192xf32>
    %337 = arith.negf %336 : vector<2x192xf32>
    %338 = math.exp %337 : vector<2x192xf32>
    %cst_179 = arith.constant 1.000000e+00 : f32
    %339 = vector.broadcast %cst_179 : f32 to vector<2x192xf32>
    %340 = arith.addf %339, %338 : vector<2x192xf32>
    %341 = arith.divf %339, %340 : vector<2x192xf32>
    %342 = vector.extract_strided_slice %335 {offsets = [0, 192], sizes = [2, 64], strides = [1, 1]} : vector<2x256xf32> to vector<2x64xf32>
    %343 = math.tanh %342 : vector<2x64xf32>
    %344 = vector.extract_strided_slice %341 {offsets = [0, 0], sizes = [2, 64], strides = [1, 1]} : vector<2x192xf32> to vector<2x64xf32>
    %345 = vector.extract_strided_slice %341 {offsets = [0, 64], sizes = [2, 64], strides = [1, 1]} : vector<2x192xf32> to vector<2x64xf32>
    %346 = vector.extract_strided_slice %341 {offsets = [0, 128], sizes = [2, 64], strides = [1, 1]} : vector<2x192xf32> to vector<2x64xf32>
    %347 = arith.mulf %345, %327 : vector<2x64xf32>
    %348 = arith.mulf %344, %343 : vector<2x64xf32>
    %349 = arith.addf %347, %348 : vector<2x64xf32>
    %350 = math.tanh %349 : vector<2x64xf32>
    %351 = arith.mulf %346, %350 : vector<2x64xf32>
    %352 = vector.extract_strided_slice %351 {offsets = [0, 32], sizes = [2, 32], strides = [1, 1]} : vector<2x64xf32> to vector<2x32xf32>
    %353 = vector.extract_strided_slice %138 {offsets = [2, 0], sizes = [2, 256], strides = [1, 1]} : vector<16x256xf32> to vector<2x256xf32>
    %354 = vector.extract_strided_slice %138 {offsets = [12, 0], sizes = [2, 256], strides = [1, 1]} : vector<16x256xf32> to vector<2x256xf32>
    %355 = arith.select %158, %353, %354 : vector<2x256xi1>, vector<2x256xf32>
    %cst_180 = arith.constant dense<0.000000e+00> : vector<2x256xf32>
    %356 = tpu.matmul %351, %139, %cst_180 {dimension_numbers = #tpu.dot_dimension_numbers<[1], [0], [0], [1], [0, 0, 1, 1], [], []>} : vector<2x64xf32>, vector<64x256xf32>, vector<2x256xf32> -> vector<2x256xf32>
    %357 = arith.addf %355, %356 : vector<2x256xf32>
    %358 = vector.extract_strided_slice %357 {offsets = [0, 0], sizes = [2, 192], strides = [1, 1]} : vector<2x256xf32> to vector<2x192xf32>
    %359 = arith.negf %358 : vector<2x192xf32>
    %360 = math.exp %359 : vector<2x192xf32>
    %cst_181 = arith.constant 1.000000e+00 : f32
    %361 = vector.broadcast %cst_181 : f32 to vector<2x192xf32>
    %362 = arith.addf %361, %360 : vector<2x192xf32>
    %363 = arith.divf %361, %362 : vector<2x192xf32>
    %364 = vector.extract_strided_slice %357 {offsets = [0, 192], sizes = [2, 64], strides = [1, 1]} : vector<2x256xf32> to vector<2x64xf32>
    %365 = math.tanh %364 : vector<2x64xf32>
    %366 = vector.extract_strided_slice %363 {offsets = [0, 0], sizes = [2, 64], strides = [1, 1]} : vector<2x192xf32> to vector<2x64xf32>
    %367 = vector.extract_strided_slice %363 {offsets = [0, 64], sizes = [2, 64], strides = [1, 1]} : vector<2x192xf32> to vector<2x64xf32>
    %368 = vector.extract_strided_slice %363 {offsets = [0, 128], sizes = [2, 64], strides = [1, 1]} : vector<2x192xf32> to vector<2x64xf32>
    %369 = arith.mulf %367, %349 : vector<2x64xf32>
    %370 = arith.mulf %366, %365 : vector<2x64xf32>
    %371 = arith.addf %369, %370 : vector<2x64xf32>
    %372 = math.tanh %371 : vector<2x64xf32>
    %373 = arith.mulf %368, %372 : vector<2x64xf32>
    %374 = vector.extract_strided_slice %138 {offsets = [4, 0], sizes = [2, 256], strides = [1, 1]} : vector<16x256xf32> to vector<2x256xf32>
    %375 = vector.extract_strided_slice %138 {offsets = [10, 0], sizes = [2, 256], strides = [1, 1]} : vector<16x256xf32> to vector<2x256xf32>
    %376 = arith.select %158, %374, %375 : vector<2x256xi1>, vector<2x256xf32>
    %cst_182 = arith.constant dense<0.000000e+00> : vector<2x256xf32>
    %377 = tpu.matmul %373, %139, %cst_182 {dimension_numbers = #tpu.dot_dimension_numbers<[1], [0], [0], [1], [0, 0, 1, 1], [], []>} : vector<2x64xf32>, vector<64x256xf32>, vector<2x256xf32> -> vector<2x256xf32>
    %378 = arith.addf %376, %377 : vector<2x256xf32>
    %379 = vector.extract_strided_slice %378 {offsets = [0, 0], sizes = [2, 192], strides = [1, 1]} : vector<2x256xf32> to vector<2x192xf32>
    %380 = arith.negf %379 : vector<2x192xf32>
    %381 = math.exp %380 : vector<2x192xf32>
    %cst_183 = arith.constant 1.000000e+00 : f32
    %382 = vector.broadcast %cst_183 : f32 to vector<2x192xf32>
    %383 = arith.addf %382, %381 : vector<2x192xf32>
    %384 = arith.divf %382, %383 : vector<2x192xf32>
    %385 = vector.extract_strided_slice %378 {offsets = [0, 192], sizes = [2, 64], strides = [1, 1]} : vector<2x256xf32> to vector<2x64xf32>
    %386 = math.tanh %385 : vector<2x64xf32>
    %387 = vector.extract_strided_slice %384 {offsets = [0, 0], sizes = [2, 64], strides = [1, 1]} : vector<2x192xf32> to vector<2x64xf32>
    %388 = vector.extract_strided_slice %384 {offsets = [0, 64], sizes = [2, 64], strides = [1, 1]} : vector<2x192xf32> to vector<2x64xf32>
    %389 = vector.extract_strided_slice %384 {offsets = [0, 128], sizes = [2, 64], strides = [1, 1]} : vector<2x192xf32> to vector<2x64xf32>
    %390 = arith.mulf %388, %371 : vector<2x64xf32>
    %391 = arith.mulf %387, %386 : vector<2x64xf32>
    %392 = arith.addf %390, %391 : vector<2x64xf32>
    %393 = math.tanh %392 : vector<2x64xf32>
    %394 = arith.mulf %389, %393 : vector<2x64xf32>
    %395 = vector.extract_strided_slice %138 {offsets = [6, 0], sizes = [2, 256], strides = [1, 1]} : vector<16x256xf32> to vector<2x256xf32>
    %396 = vector.extract_strided_slice %138 {offsets = [8, 0], sizes = [2, 256], strides = [1, 1]} : vector<16x256xf32> to vector<2x256xf32>
    %397 = arith.select %158, %395, %396 : vector<2x256xi1>, vector<2x256xf32>
    %cst_184 = arith.constant dense<0.000000e+00> : vector<2x256xf32>
    %398 = tpu.matmul %394, %139, %cst_184 {dimension_numbers = #tpu.dot_dimension_numbers<[1], [0], [0], [1], [0, 0, 1, 1], [], []>} : vector<2x64xf32>, vector<64x256xf32>, vector<2x256xf32> -> vector<2x256xf32>
    %399 = arith.addf %397, %398 : vector<2x256xf32>
    %400 = vector.extract_strided_slice %399 {offsets = [0, 0], sizes = [2, 192], strides = [1, 1]} : vector<2x256xf32> to vector<2x192xf32>
    %401 = arith.negf %400 : vector<2x192xf32>
    %402 = math.exp %401 : vector<2x192xf32>
    %cst_185 = arith.constant 1.000000e+00 : f32
    %403 = vector.broadcast %cst_185 : f32 to vector<2x192xf32>
    %404 = arith.addf %403, %402 : vector<2x192xf32>
    %405 = arith.divf %403, %404 : vector<2x192xf32>
    %406 = vector.extract_strided_slice %399 {offsets = [0, 192], sizes = [2, 64], strides = [1, 1]} : vector<2x256xf32> to vector<2x64xf32>
    %407 = math.tanh %406 : vector<2x64xf32>
    %408 = vector.extract_strided_slice %405 {offsets = [0, 0], sizes = [2, 64], strides = [1, 1]} : vector<2x192xf32> to vector<2x64xf32>
    %409 = vector.extract_strided_slice %405 {offsets = [0, 64], sizes = [2, 64], strides = [1, 1]} : vector<2x192xf32> to vector<2x64xf32>
    %410 = vector.extract_strided_slice %405 {offsets = [0, 128], sizes = [2, 64], strides = [1, 1]} : vector<2x192xf32> to vector<2x64xf32>
    %411 = arith.mulf %409, %392 : vector<2x64xf32>
    %412 = arith.mulf %408, %407 : vector<2x64xf32>
    %413 = arith.addf %411, %412 : vector<2x64xf32>
    %414 = math.tanh %413 : vector<2x64xf32>
    %415 = arith.mulf %410, %414 : vector<2x64xf32>
    %416 = vector.extract_strided_slice %138 {offsets = [8, 0], sizes = [2, 256], strides = [1, 1]} : vector<16x256xf32> to vector<2x256xf32>
    %417 = vector.extract_strided_slice %138 {offsets = [6, 0], sizes = [2, 256], strides = [1, 1]} : vector<16x256xf32> to vector<2x256xf32>
    %418 = arith.select %158, %416, %417 : vector<2x256xi1>, vector<2x256xf32>
    %cst_186 = arith.constant dense<0.000000e+00> : vector<2x256xf32>
    %419 = tpu.matmul %415, %139, %cst_186 {dimension_numbers = #tpu.dot_dimension_numbers<[1], [0], [0], [1], [0, 0, 1, 1], [], []>} : vector<2x64xf32>, vector<64x256xf32>, vector<2x256xf32> -> vector<2x256xf32>
    %420 = arith.addf %418, %419 : vector<2x256xf32>
    %421 = vector.extract_strided_slice %420 {offsets = [0, 0], sizes = [2, 192], strides = [1, 1]} : vector<2x256xf32> to vector<2x192xf32>
    %422 = arith.negf %421 : vector<2x192xf32>
    %423 = math.exp %422 : vector<2x192xf32>
    %cst_187 = arith.constant 1.000000e+00 : f32
    %424 = vector.broadcast %cst_187 : f32 to vector<2x192xf32>
    %425 = arith.addf %424, %423 : vector<2x192xf32>
    %426 = arith.divf %424, %425 : vector<2x192xf32>
    %427 = vector.extract_strided_slice %420 {offsets = [0, 192], sizes = [2, 64], strides = [1, 1]} : vector<2x256xf32> to vector<2x64xf32>
    %428 = math.tanh %427 : vector<2x64xf32>
    %429 = vector.extract_strided_slice %426 {offsets = [0, 0], sizes = [2, 64], strides = [1, 1]} : vector<2x192xf32> to vector<2x64xf32>
    %430 = vector.extract_strided_slice %426 {offsets = [0, 64], sizes = [2, 64], strides = [1, 1]} : vector<2x192xf32> to vector<2x64xf32>
    %431 = vector.extract_strided_slice %426 {offsets = [0, 128], sizes = [2, 64], strides = [1, 1]} : vector<2x192xf32> to vector<2x64xf32>
    %432 = arith.mulf %430, %413 : vector<2x64xf32>
    %433 = arith.mulf %429, %428 : vector<2x64xf32>
    %434 = arith.addf %432, %433 : vector<2x64xf32>
    %435 = math.tanh %434 : vector<2x64xf32>
    %436 = arith.mulf %431, %435 : vector<2x64xf32>
    %437 = vector.extract_strided_slice %138 {offsets = [10, 0], sizes = [2, 256], strides = [1, 1]} : vector<16x256xf32> to vector<2x256xf32>
    %438 = vector.extract_strided_slice %138 {offsets = [4, 0], sizes = [2, 256], strides = [1, 1]} : vector<16x256xf32> to vector<2x256xf32>
    %439 = arith.select %158, %437, %438 : vector<2x256xi1>, vector<2x256xf32>
    %cst_188 = arith.constant dense<0.000000e+00> : vector<2x256xf32>
    %440 = tpu.matmul %436, %139, %cst_188 {dimension_numbers = #tpu.dot_dimension_numbers<[1], [0], [0], [1], [0, 0, 1, 1], [], []>} : vector<2x64xf32>, vector<64x256xf32>, vector<2x256xf32> -> vector<2x256xf32>
    %441 = arith.addf %439, %440 : vector<2x256xf32>
    %442 = vector.extract_strided_slice %441 {offsets = [0, 0], sizes = [2, 192], strides = [1, 1]} : vector<2x256xf32> to vector<2x192xf32>
    %443 = arith.negf %442 : vector<2x192xf32>
    %444 = math.exp %443 : vector<2x192xf32>
    %cst_189 = arith.constant 1.000000e+00 : f32
    %445 = vector.broadcast %cst_189 : f32 to vector<2x192xf32>
    %446 = arith.addf %445, %444 : vector<2x192xf32>
    %447 = arith.divf %445, %446 : vector<2x192xf32>
    %448 = vector.extract_strided_slice %441 {offsets = [0, 192], sizes = [2, 64], strides = [1, 1]} : vector<2x256xf32> to vector<2x64xf32>
    %449 = math.tanh %448 : vector<2x64xf32>
    %450 = vector.extract_strided_slice %447 {offsets = [0, 0], sizes = [2, 64], strides = [1, 1]} : vector<2x192xf32> to vector<2x64xf32>
    %451 = vector.extract_strided_slice %447 {offsets = [0, 64], sizes = [2, 64], strides = [1, 1]} : vector<2x192xf32> to vector<2x64xf32>
    %452 = vector.extract_strided_slice %447 {offsets = [0, 128], sizes = [2, 64], strides = [1, 1]} : vector<2x192xf32> to vector<2x64xf32>
    %453 = arith.mulf %451, %434 : vector<2x64xf32>
    %454 = arith.mulf %450, %449 : vector<2x64xf32>
    %455 = arith.addf %453, %454 : vector<2x64xf32>
    %456 = math.tanh %455 : vector<2x64xf32>
    %457 = arith.mulf %452, %456 : vector<2x64xf32>
    %458 = vector.extract_strided_slice %138 {offsets = [12, 0], sizes = [2, 256], strides = [1, 1]} : vector<16x256xf32> to vector<2x256xf32>
    %459 = vector.extract_strided_slice %138 {offsets = [2, 0], sizes = [2, 256], strides = [1, 1]} : vector<16x256xf32> to vector<2x256xf32>
    %460 = arith.select %158, %458, %459 : vector<2x256xi1>, vector<2x256xf32>
    %cst_190 = arith.constant dense<0.000000e+00> : vector<2x256xf32>
    %461 = tpu.matmul %457, %139, %cst_190 {dimension_numbers = #tpu.dot_dimension_numbers<[1], [0], [0], [1], [0, 0, 1, 1], [], []>} : vector<2x64xf32>, vector<64x256xf32>, vector<2x256xf32> -> vector<2x256xf32>
    %462 = arith.addf %460, %461 : vector<2x256xf32>
    %463 = vector.extract_strided_slice %462 {offsets = [0, 0], sizes = [2, 192], strides = [1, 1]} : vector<2x256xf32> to vector<2x192xf32>
    %464 = arith.negf %463 : vector<2x192xf32>
    %465 = math.exp %464 : vector<2x192xf32>
    %cst_191 = arith.constant 1.000000e+00 : f32
    %466 = vector.broadcast %cst_191 : f32 to vector<2x192xf32>
    %467 = arith.addf %466, %465 : vector<2x192xf32>
    %468 = arith.divf %466, %467 : vector<2x192xf32>
    %469 = vector.extract_strided_slice %462 {offsets = [0, 192], sizes = [2, 64], strides = [1, 1]} : vector<2x256xf32> to vector<2x64xf32>
    %470 = math.tanh %469 : vector<2x64xf32>
    %471 = vector.extract_strided_slice %468 {offsets = [0, 0], sizes = [2, 64], strides = [1, 1]} : vector<2x192xf32> to vector<2x64xf32>
    %472 = vector.extract_strided_slice %468 {offsets = [0, 64], sizes = [2, 64], strides = [1, 1]} : vector<2x192xf32> to vector<2x64xf32>
    %473 = vector.extract_strided_slice %468 {offsets = [0, 128], sizes = [2, 64], strides = [1, 1]} : vector<2x192xf32> to vector<2x64xf32>
    %474 = arith.mulf %472, %455 : vector<2x64xf32>
    %475 = arith.mulf %471, %470 : vector<2x64xf32>
    %476 = arith.addf %474, %475 : vector<2x64xf32>
    %477 = math.tanh %476 : vector<2x64xf32>
    %478 = arith.mulf %473, %477 : vector<2x64xf32>
    %479 = vector.extract_strided_slice %138 {offsets = [14, 0], sizes = [2, 256], strides = [1, 1]} : vector<16x256xf32> to vector<2x256xf32>
    %480 = vector.extract_strided_slice %138 {offsets = [0, 0], sizes = [2, 256], strides = [1, 1]} : vector<16x256xf32> to vector<2x256xf32>
    %481 = arith.select %158, %479, %480 : vector<2x256xi1>, vector<2x256xf32>
    %cst_192 = arith.constant dense<0.000000e+00> : vector<2x256xf32>
    %482 = tpu.matmul %478, %139, %cst_192 {dimension_numbers = #tpu.dot_dimension_numbers<[1], [0], [0], [1], [0, 0, 1, 1], [], []>} : vector<2x64xf32>, vector<64x256xf32>, vector<2x256xf32> -> vector<2x256xf32>
    %483 = arith.addf %481, %482 : vector<2x256xf32>
    %484 = vector.extract_strided_slice %483 {offsets = [0, 0], sizes = [2, 192], strides = [1, 1]} : vector<2x256xf32> to vector<2x192xf32>
    %485 = arith.negf %484 : vector<2x192xf32>
    %486 = math.exp %485 : vector<2x192xf32>
    %cst_193 = arith.constant 1.000000e+00 : f32
    %487 = vector.broadcast %cst_193 : f32 to vector<2x192xf32>
    %488 = arith.addf %487, %486 : vector<2x192xf32>
    %489 = arith.divf %487, %488 : vector<2x192xf32>
    %490 = vector.extract_strided_slice %483 {offsets = [0, 192], sizes = [2, 64], strides = [1, 1]} : vector<2x256xf32> to vector<2x64xf32>
    %491 = math.tanh %490 : vector<2x64xf32>
    %492 = vector.extract_strided_slice %489 {offsets = [0, 0], sizes = [2, 64], strides = [1, 1]} : vector<2x192xf32> to vector<2x64xf32>
    %493 = vector.extract_strided_slice %489 {offsets = [0, 64], sizes = [2, 64], strides = [1, 1]} : vector<2x192xf32> to vector<2x64xf32>
    %494 = vector.extract_strided_slice %489 {offsets = [0, 128], sizes = [2, 64], strides = [1, 1]} : vector<2x192xf32> to vector<2x64xf32>
    %495 = arith.mulf %493, %476 : vector<2x64xf32>
    %496 = arith.mulf %492, %491 : vector<2x64xf32>
    %497 = arith.addf %495, %496 : vector<2x64xf32>
    %498 = math.tanh %497 : vector<2x64xf32>
    %499 = arith.mulf %494, %498 : vector<2x64xf32>
    %500 = vector.extract_strided_slice %499 {offsets = [0, 0], sizes = [2, 32], strides = [1, 1]} : vector<2x64xf32> to vector<2x32xf32>
    %501 = tpu.concatenate %330, %182, %500, %352 in 1 : vector<2x32xf32>, vector<2x32xf32>, vector<2x32xf32>, vector<2x32xf32> -> vector<2x128xf32>
    %c0_194 = arith.constant 0 : index
    %c0_195 = arith.constant 0 : index
    %502 = vector.load %arg6[%c0_194, %c0_195] : memref<128x5xf32, #tpu.memory_space<vmem>>, vector<128x5xf32>
    %cst_196 = arith.constant dense<0.000000e+00> : vector<2x5xf32>
    %503 = tpu.matmul %501, %502, %cst_196 {dimension_numbers = #tpu.dot_dimension_numbers<[1], [0], [0], [1], [0, 0, 1, 1], [], []>} : vector<2x128xf32>, vector<128x5xf32>, vector<2x5xf32> -> vector<2x5xf32>
    %c0_197 = arith.constant 0 : index
    %c0_198 = arith.constant 0 : index
    %504 = vector.load %arg7[%c0_197, %c0_198] : memref<1x5xf32, #tpu.memory_space<vmem>>, vector<1x5xf32>
    %505 = vector.broadcast %504 : vector<1x5xf32> to vector<2x5xf32>
    %506 = arith.addf %503, %505 : vector<2x5xf32>
    %cst_199 = arith.constant dense<0xFF800000> : vector<2xf32>
    %507 = vector.multi_reduction <maximumf>, %506, %cst_199 [1] : vector<2x5xf32> to vector<2xf32>
    %508 = vector.shape_cast %507 : vector<2xf32> to vector<2x1xf32>
    %509 = vector.broadcast %508 : vector<2x1xf32> to vector<2x5xf32>
    %510 = arith.subf %506, %509 : vector<2x5xf32>
    %511 = math.exp %510 : vector<2x5xf32>
    %cst_200 = arith.constant dense<0.000000e+00> : vector<2xf32>
    %512 = vector.multi_reduction <add>, %511, %cst_200 [1] : vector<2x5xf32> to vector<2xf32>
    %513 = vector.shape_cast %512 : vector<2xf32> to vector<2x1xf32>
    %514 = math.log %513 : vector<2x1xf32>
    %515 = vector.broadcast %514 : vector<2x1xf32> to vector<2x5xf32>
    %516 = arith.subf %510, %515 : vector<2x5xf32>
    %c0_201 = arith.constant 0 : index
    %c0_202 = arith.constant 0 : index
    %517 = vector.load %arg8[%c0_201, %c0_202] : memref<2x5xf32, #tpu.memory_space<vmem>>, vector<2x5xf32>
    tpu.vector_store %arg8[%c0_201, %c0_202], %516 {strides = array<i32>} : memref<2x5xf32, #tpu.memory_space<vmem>>, vector<2x5xf32>,
    return
  }
}

</mosaic_0001>

<llo_original>
// kernel: bilstm_comp_forward.1
$region0: #{bilstm_comp_forward.1}
  #allocation0 [shape = 'u32[]', space=smem, size = 0x4, offset = 0x4, fixed_abs, tag = 'smem constant byte address 0x4 - core index']
  #allocation1 [shape = 'u32[144,128]{1,0:T(1,128)}', space=vmem, size = 0x12000, scoped, tag = 'internal scratch']
  #allocation2 [shape = 'f32[16,16]{1,0:T(8,128)}', space=vmem, size = 0x2000, scoped, tag = 'scratch operand']
  #allocation3 [shape = 'f32[16,16]{1,0:T(8,128)}', space=vmem, size = 0x2000, scoped, tag = 'scratch operand']
  %s0 = inlined_call_operand.vmem [shape: s32[8,2], index: 0, kind: input, shape index: {}]
  %s1 = inlined_call_operand.vmem [shape: s32[8,2], index: 1, kind: input, shape index: {}]
  %s2 = inlined_call_operand.vmem [shape: f32[100,16], index: 2, kind: input, shape index: {}]
  %s3 = inlined_call_operand.vmem [shape: f32[16,256], index: 3, kind: input, shape index: {}]
  %s4 = inlined_call_operand.vmem [shape: f32[64,256], index: 4, kind: input, shape index: {}]
  %s5 = inlined_call_operand.vmem [shape: f32[1,256], index: 5, kind: input, shape index: {}]
  %s6 = inlined_call_operand.vmem [shape: f32[128,5], index: 6, kind: input, shape index: {}]
  %s7 = inlined_call_operand.vmem [shape: f32[1,5], index: 7, kind: input, shape index: {}]
  %s8 = inlined_call_operand.hbm [shape: f32[2,5], index: 8, kind: output, shape index: {}]
  %s9 = sld [smem:[#allocation0]]
  $region50: #{bilstm_comp_forward.1} parent=0
    _
  %s11 = ssub.s32 1, %s9
  %s12 = scalar_select 0, %s11, %s9
  $region1: #{bilstm_comp_forward.1} parent=0
    #allocation4 [shape = 'u8[4096]{0}', space=smem, size = 0x1000, scoped, tag = 'input window, operand 0, single buffered']
    #allocation5 [shape = 's32[1]{0}', space=sflag, size = 0x4, scoped, tag = 'scoped memory for bilstm_comp_forward.1']
    #allocation6 [shape = 's32[1]{0}', space=sflag, size = 0x4, scoped, tag = 'scoped memory for bilstm_comp_forward.1']
    #allocation7 [shape = 'u8[4096]{0}', space=smem, size = 0x1000, scoped, tag = 'input window, operand 1, single buffered']
    #allocation8 [shape = 's32[1]{0}', space=sflag, size = 0x4, scoped, tag = 'scoped memory for bilstm_comp_forward.1']
    #allocation9 [shape = 'u8[1024]{0}', space=vmem, size = 0x400, scoped, tag = 'output window, operand 0, single buffered']
    %13 = vsyncpa [#allocation6], 0
    %14 = vsyncpa [#allocation8], 0
    %15 = vsyncpa [#allocation5], 0
    // Predicated region
    $region2: #{bilstm_comp_forward.1} parent=1 // pred_check
      _
    $region3: #{bilstm_comp_forward.1} parent=1 // pred_check_branch
      %17 = sbr.rel (0) target = $region5
    $region4: #{bilstm_comp_forward.1} parent=1 // pred_region
      %s19 = ssub.s32 128, 128
      %20 = vsyncadd [#allocation6], %s19
      %s22 = sshll.u32 %s0, 4
      %s23 = int_to_ptr.vmem [resolvable:$true] %s22
      %25 = dma.vmem_to_smem %s23, 128, [#allocation4], [#allocation6]
    $region5: #{bilstm_comp_forward.1} parent=1 // pred_fallthru
      _
    // Predicated region
    $region6: #{bilstm_comp_forward.1} parent=1 // pred_check
      _
    $region7: #{bilstm_comp_forward.1} parent=1 // pred_check_branch
      %27 = sbr.rel (0) target = $region9
    $region8: #{bilstm_comp_forward.1} parent=1 // pred_region
      %s29 = ssub.s32 128, 128
      %30 = vsyncadd [#allocation8], %s29
      %s32 = sshll.u32 %s1, 4
      %s33 = int_to_ptr.vmem [resolvable:$true] %s32
      %35 = dma.vmem_to_smem %s33, 128, [#allocation7], [#allocation8]
    $region9: #{bilstm_comp_forward.1} parent=1 // pred_fallthru
      _
    // Predicated region
    $region10: #{bilstm_comp_forward.1} parent=1 // pred_check
      _
    $region11: #{bilstm_comp_forward.1} parent=1 // pred_check_branch
      %37 = sbr.rel (0) target = $region13
    $region12: #{bilstm_comp_forward.1} parent=1 // pred_region
      _
    $region13: #{bilstm_comp_forward.1} parent=1 // pred_fallthru
      _
    // Predicated region
    $region14: #{bilstm_comp_forward.1} parent=1 // pred_check
      _
    $region15: #{bilstm_comp_forward.1} parent=1 // pred_check_branch
      %39 = sbr.rel (0) target = $region17
    $region16: #{bilstm_comp_forward.1} parent=1 // pred_region
      _
    $region17: #{bilstm_comp_forward.1} parent=1 // pred_fallthru
      _
    // Predicated region
    $region18: #{bilstm_comp_forward.1} parent=1 // pred_check
      _
    $region19: #{bilstm_comp_forward.1} parent=1 // pred_check_branch
      %41 = sbr.rel (0) target = $region21
    $region20: #{bilstm_comp_forward.1} parent=1 // pred_region
      _
    $region21: #{bilstm_comp_forward.1} parent=1 // pred_fallthru
      _
    // Predicated region
    $region22: #{bilstm_comp_forward.1} parent=1 // pred_check
      _
    $region23: #{bilstm_comp_forward.1} parent=1 // pred_check_branch
      %43 = sbr.rel (0) target = $region25
    $region24: #{bilstm_comp_forward.1} parent=1 // pred_region
      _
    $region25: #{bilstm_comp_forward.1} parent=1 // pred_fallthru
      _
    // Predicated region
    $region26: #{bilstm_comp_forward.1} parent=1 // pred_check
      _
    $region27: #{bilstm_comp_forward.1} parent=1 // pred_check_branch
      %45 = sbr.rel (0) target = $region29
    $region28: #{bilstm_comp_forward.1} parent=1 // pred_region
      _
    $region29: #{bilstm_comp_forward.1} parent=1 // pred_fallthru
      _
    // Predicated region
    $region30: #{bilstm_comp_forward.1} parent=1 // pred_check
      _
    $region31: #{bilstm_comp_forward.1} parent=1 // pred_check_branch
      %47 = sbr.rel (0) target = $region33
    $region32: #{bilstm_comp_forward.1} parent=1 // pred_region
      _
    $region33: #{bilstm_comp_forward.1} parent=1 // pred_fallthru
      _
    // Predicated region
    $region34: #{bilstm_comp_forward.1} parent=1 // pred_check
      _
    $region35: #{bilstm_comp_forward.1} parent=1 // pred_check_branch
      %49 = sbr.rel (0) target = $region37
    $region36: #{bilstm_comp_forward.1} parent=1 // pred_region
      %50 = dma.done [#allocation6], 128
    $region37: #{bilstm_comp_forward.1} parent=1 // pred_fallthru
      _
    // Predicated region
    $region38: #{bilstm_comp_forward.1} parent=1 // pred_check
      _
    $region39: #{bilstm_comp_forward.1} parent=1 // pred_check_branch
      %52 = sbr.rel (0) target = $region41
    $region40: #{bilstm_comp_forward.1} parent=1 // pred_region
      %53 = dma.done [#allocation8], 128
    $region41: #{bilstm_comp_forward.1} parent=1 // pred_fallthru
      _
    %54 = sfence
    %s55 = sld [smem:[#allocation4]]
    %s56 = scalar_lea.vmem %s2, %s55
    %v57 = vld [vmem:[%s56] sm:$0x1]
    %vm58 = vcmask 122880
    %59 = vst.msk [vmem:[#allocation2] sm:$0x1] %vm58, %v57
    %s60 = sld [smem:[#allocation4 + $0x1]]
    %s61 = scalar_lea.vmem %s2, %s60
    %v62 = vld [vmem:[%s61] sm:$0x1]
    %63 = vst.msk [vmem:[#allocation2 + $0x1] sm:$0x1] %vm58, %v62
    %s64 = sld [smem:[#allocation4 + $0x80]]
    %s65 = scalar_lea.vmem %s2, %s64
    %v66 = vld [vmem:[%s65] sm:$0x1]
    %67 = vst.msk [vmem:[#allocation2 + $0x2] sm:$0x1] %vm58, %v66
    %s68 = sld [smem:[#allocation4 + $0x81]]
    %s69 = scalar_lea.vmem %s2, %s68
    %v70 = vld [vmem:[%s69] sm:$0x1]
    %71 = vst.msk [vmem:[#allocation2 + $0x3] sm:$0x1] %vm58, %v70
    %s72 = sld [smem:[#allocation4 + $0x100]]
    %s73 = scalar_lea.vmem %s2, %s72
    %v74 = vld [vmem:[%s73] sm:$0x1]
    %75 = vst.msk [vmem:[#allocation2 + $0x4] sm:$0x1] %vm58, %v74
    %s76 = sld [smem:[#allocation4 + $0x101]]
    %s77 = scalar_lea.vmem %s2, %s76
    %v78 = vld [vmem:[%s77] sm:$0x1]
    %79 = vst.msk [vmem:[#allocation2 + $0x5] sm:$0x1] %vm58, %v78
    %s80 = sld [smem:[#allocation4 + $0x180]]
    %s81 = scalar_lea.vmem %s2, %s80
    %v82 = vld [vmem:[%s81] sm:$0x1]
    %83 = vst.msk [vmem:[#allocation2 + $0x6] sm:$0x1] %vm58, %v82
    %s84 = sld [smem:[#allocation4 + $0x181]]
    %s85 = scalar_lea.vmem %s2, %s84
    %v86 = vld [vmem:[%s85] sm:$0x1]
    %87 = vst.msk [vmem:[#allocation2 + $0x7] sm:$0x1] %vm58, %v86
    %s88 = sld [smem:[#allocation4 + $0x200]]
    %s89 = scalar_lea.vmem %s2, %s88
    %v90 = vld [vmem:[%s89] sm:$0x1]
    %91 = vst.msk [vmem:[#allocation2 + $0x8] sm:$0x1] %vm58, %v90
    %s92 = sld [smem:[#allocation4 + $0x201]]
    %s93 = scalar_lea.vmem %s2, %s92
    %v94 = vld [vmem:[%s93] sm:$0x1]
    %95 = vst.msk [vmem:[#allocation2 + $0x9] sm:$0x1] %vm58, %v94
    %s96 = sld [smem:[#allocation4 + $0x280]]
    %s97 = scalar_lea.vmem %s2, %s96
    %v98 = vld [vmem:[%s97] sm:$0x1]
    %99 = vst.msk [vmem:[#allocation2 + $0xa] sm:$0x1] %vm58, %v98
    %s100 = sld [smem:[#allocation4 + $0x281]]
    %s101 = scalar_lea.vmem %s2, %s100
    %v102 = vld [vmem:[%s101] sm:$0x1]
    %103 = vst.msk [vmem:[#allocation2 + $0xb] sm:$0x1] %vm58, %v102
    %s104 = sld [smem:[#allocation4 + $0x300]]
    %s105 = scalar_lea.vmem %s2, %s104
    %v106 = vld [vmem:[%s105] sm:$0x1]
    %107 = vst.msk [vmem:[#allocation2 + $0xc] sm:$0x1] %vm58, %v106
    %s108 = sld [smem:[#allocation4 + $0x301]]
    %s109 = scalar_lea.vmem %s2, %s108
    %v110 = vld [vmem:[%s109] sm:$0x1]
    %111 = vst.msk [vmem:[#allocation2 + $0xd] sm:$0x1] %vm58, %v110
    %s112 = sld [smem:[#allocation4 + $0x380]]
    %s113 = scalar_lea.vmem %s2, %s112
    %v114 = vld [vmem:[%s113] sm:$0x1]
    %115 = vst.msk [vmem:[#allocation2 + $0xe] sm:$0x1] %vm58, %v114
    %s116 = sld [smem:[#allocation4 + $0x381]]
    %s117 = scalar_lea.vmem %s2, %s116
    %v118 = vld [vmem:[%s117] sm:$0x1]
    %119 = vst.msk [vmem:[#allocation2 + $0xf] sm:$0x1] %vm58, %v118
    %s120 = sld [smem:[#allocation7]]
    %s121 = scalar_lea.vmem %s2, %s120
    %v122 = vld [vmem:[%s121] sm:$0x1]
    %123 = vst.msk [vmem:[#allocation3] sm:$0x1] %vm58, %v122
    %s124 = sld [smem:[#allocation7 + $0x1]]
    %s125 = scalar_lea.vmem %s2, %s124
    %v126 = vld [vmem:[%s125] sm:$0x1]
    %127 = vst.msk [vmem:[#allocation3 + $0x1] sm:$0x1] %vm58, %v126
    %s128 = sld [smem:[#allocation7 + $0x80]]
    %s129 = scalar_lea.vmem %s2, %s128
    %v130 = vld [vmem:[%s129] sm:$0x1]
    %131 = vst.msk [vmem:[#allocation3 + $0x2] sm:$0x1] %vm58, %v130
    %s132 = sld [smem:[#allocation7 + $0x81]]
    %s133 = scalar_lea.vmem %s2, %s132
    %v134 = vld [vmem:[%s133] sm:$0x1]
    %135 = vst.msk [vmem:[#allocation3 + $0x3] sm:$0x1] %vm58, %v134
    %s136 = sld [smem:[#allocation7 + $0x100]]
    %s137 = scalar_lea.vmem %s2, %s136
    %v138 = vld [vmem:[%s137] sm:$0x1]
    %139 = vst.msk [vmem:[#allocation3 + $0x4] sm:$0x1] %vm58, %v138
    %s140 = sld [smem:[#allocation7 + $0x101]]
    %s141 = scalar_lea.vmem %s2, %s140
    %v142 = vld [vmem:[%s141] sm:$0x1]
    %143 = vst.msk [vmem:[#allocation3 + $0x5] sm:$0x1] %vm58, %v142
    %s144 = sld [smem:[#allocation7 + $0x180]]
    %s145 = scalar_lea.vmem %s2, %s144
    %v146 = vld [vmem:[%s145] sm:$0x1]
    %147 = vst.msk [vmem:[#allocation3 + $0x6] sm:$0x1] %vm58, %v146
    %s148 = sld [smem:[#allocation7 + $0x181]]
    %s149 = scalar_lea.vmem %s2, %s148
    %v150 = vld [vmem:[%s149] sm:$0x1]
    %151 = vst.msk [vmem:[#allocation3 + $0x7] sm:$0x1] %vm58, %v150
    %s152 = sld [smem:[#allocation7 + $0x200]]
    %s153 = scalar_lea.vmem %s2, %s152
    %v154 = vld [vmem:[%s153] sm:$0x1]
    %155 = vst.msk [vmem:[#allocation3 + $0x8] sm:$0x1] %vm58, %v154
    %s156 = sld [smem:[#allocation7 + $0x201]]
    %s157 = scalar_lea.vmem %s2, %s156
    %v158 = vld [vmem:[%s157] sm:$0x1]
    %159 = vst.msk [vmem:[#allocation3 + $0x9] sm:$0x1] %vm58, %v158
    %s160 = sld [smem:[#allocation7 + $0x280]]
    %s161 = scalar_lea.vmem %s2, %s160
    %v162 = vld [vmem:[%s161] sm:$0x1]
    %163 = vst.msk [vmem:[#allocation3 + $0xa] sm:$0x1] %vm58, %v162
    %s164 = sld [smem:[#allocation7 + $0x281]]
    %s165 = scalar_lea.vmem %s2, %s164
    %v166 = vld [vmem:[%s165] sm:$0x1]
    %167 = vst.msk [vmem:[#allocation3 + $0xb] sm:$0x1] %vm58, %v166
    %s168 = sld [smem:[#allocation7 + $0x300]]
    %s169 = scalar_lea.vmem %s2, %s168
    %v170 = vld [vmem:[%s169] sm:$0x1]
    %171 = vst.msk [vmem:[#allocation3 + $0xc] sm:$0x1] %vm58, %v170
    %s172 = sld [smem:[#allocation7 + $0x301]]
    %s173 = scalar_lea.vmem %s2, %s172
    %v174 = vld [vmem:[%s173] sm:$0x1]
    %175 = vst.msk [vmem:[#allocation3 + $0xd] sm:$0x1] %vm58, %v174
    %s176 = sld [smem:[#allocation7 + $0x380]]
    %s177 = scalar_lea.vmem %s2, %s176
    %v178 = vld [vmem:[%s177] sm:$0x1]
    %179 = vst.msk [vmem:[#allocation3 + $0xe] sm:$0x1] %vm58, %v178
    %s180 = sld [smem:[#allocation7 + $0x381]]
    %s181 = scalar_lea.vmem %s2, %s180
    %v182 = vld [vmem:[%s181] sm:$0x1]
    %183 = vst.msk [vmem:[#allocation3 + $0xf] sm:$0x1] %vm58, %v182
    %v184 = vld [vmem:[%s5] sm:$0x3]
    %v185 = vld [vmem:[#allocation2] sm:$0xff]
    %v186 = vld [vmem:[#allocation2 + $0x8] sm:$0xff]
    %v187 = vld [vmem:[%s3] sm:$0xff]
    %v188 = vld [vmem:[%s3 + $0x8] sm:$0xff]
    %v189 = vld [vmem:[%s3 + $0x10] sm:$0xff]
    %v190 = vld [vmem:[%s3 + $0x18] sm:$0xff]
    %v192 = vlaneseq
    %v193 = vshrl.u32 %v192, 7
    %v194 = vsub.s32 0, %v193
    %v195 = vrot.slane %v184, %v194
    %v196 = vlaneseq
    %v197 = vshrl.u32 %v196, 7
    %v198 = vsub.s32 1, %v197
    %v199 = vrot.slane %v184, %v198
    %vm202 = vcmask 130048
    %v204 = vsel %vm202, %v185, 0
    %v207 = vsel %vm202, %v186, 0
    %209 = vmatprep.subr.mxu0 %v188
    %210 = vmatpush1.msra.mxu0 %v187
    %211 = vmatprep.subr.mxu0 %v190
    %212 = vmatpush1.msra.mxu0 %v189
    %213 = vmatprep.subr.mxu0 0.0
    %214 = vmatpush1.msra.mxu0 0.0
    %215 = vmatprep.subr.mxu0 0.0
    %216 = vmatpush1.msra.mxu0 0.0
    %217 = vmatprep.subr.mxu0 0.0
    %218 = vmatpush1.msra.mxu0 0.0
    %219 = vmatprep.subr.mxu0 0.0
    %220 = vmatpush1.msra.mxu0 0.0
    %221 = vmatprep.subr.mxu0 0.0
    %222 = vmatpush1.msra.mxu0 0.0
    %223 = vmatprep.subr.mxu0 0.0
    %224 = vmatpush1.msra.mxu0 0.0
    %225 = vmatprep.subr.mxu0 0.0
    %226 = vmatpush1.msra.mxu0 0.0
    %227 = vmatprep.subr.mxu0 0.0
    %228 = vmatpush1.msra.mxu0 0.0
    %229 = vmatprep.subr.mxu0 0.0
    %230 = vmatpush1.msra.mxu0 0.0
    %231 = vmatprep.subr.mxu0 0.0
    %232 = vmatpush1.msra.mxu0 0.0
    %233 = vmatprep.subr.mxu0 0.0
    %234 = vmatpush1.msra.mxu0 0.0
    %235 = vmatprep.subr.mxu0 0.0
    %236 = vmatpush1.msra.mxu0 0.0
    %237 = vmatprep.subr.mxu0 0.0
    %238 = vmatpush1.msra.mxu0 0.0
    %239 = vmatprep.subr.mxu0 0.0
    %240 = vmatpush1.msra.mxu0 0.0
    %241 = vmatprep.subr.mxu0 0.0
    %242 = vmatpush1.msra.mxu0 0.0
    %243 = vmatprep.subr.mxu0 0.0
    %244 = vmatpush1.msra.mxu0 0.0
    %245 = vmatprep.subr.mxu0 0.0
    %246 = vmatpush1.msra.mxu0 0.0
    %247 = vmatprep.subr.mxu0 0.0
    %248 = vmatpush1.msra.mxu0 0.0
    %249 = vmatprep.subr.mxu0 0.0
    %250 = vmatpush1.msra.mxu0 0.0
    %251 = vmatprep.subr.mxu0 0.0
    %252 = vmatpush1.msra.mxu0 0.0
    %253 = vmatprep.subr.mxu0 0.0
    %254 = vmatpush1.msra.mxu0 0.0
    %255 = vmatprep.subr.mxu0 0.0
    %256 = vmatpush1.msra.mxu0 0.0
    %257 = vmatprep.subr.mxu0 0.0
    %258 = vmatpush1.msra.mxu0 0.0
    %259 = vmatprep.subr.mxu0 0.0
    %260 = vmatpush1.msra.mxu0 0.0
    %261 = vmatprep.subr.mxu0 0.0
    %262 = vmatpush1.msra.mxu0 0.0
    %263 = vmatprep.subr.mxu0 0.0
    %264 = vmatpush1.msra.mxu0 0.0
    %265 = vmatprep.subr.mxu0 0.0
    %266 = vmatpush1.msra.mxu0 0.0
    %267 = vmatprep.subr.mxu0 0.0
    %268 = vmatpush1.msra.mxu0 0.0
    %269 = vmatprep.subr.mxu0 0.0
    %270 = vmatpush1.msra.mxu0 0.0
    %271 = vmatprep.subr.mxu0 0.0
    %272 = vmatpush1.msra.mxu0 0.0
    %273 = vmatprep.mubr.f32.mxu0 0.0
    %274 = vmatmul.mubr.f32.gmra.mrb[0].mxu0 %v204
    %v275 = vpop.f32.mrb[0].mxu0
    %v276 = vadd.f32 %v195, %v275
    %v277 = vpop.f32.mrb[0].mxu0
    %v278 = vadd.f32 %v199, %v277
    %279 = vmatprep.mubr.f32.mxu0 0.0
    %280 = vmatmul.mubr.f32.gmra.mrb[0].mxu0 %v207
    %v281 = vpop.f32.mrb[0].mxu0
    %v282 = vadd.f32 %v195, %v281
    %v283 = vpop.f32.mrb[0].mxu0
    %v284 = vadd.f32 %v199, %v283
    %285 = vdwg.mxu0
    %v286 = vld [vmem:[#allocation3] sm:$0xff]
    %v287 = vld [vmem:[#allocation3 + $0x8] sm:$0xff]
    %v289 = vsel %vm202, %v286, 0
    %v292 = vsel %vm202, %v287, 0
    %294 = vmatprep.subr.mxu0 %v188
    %295 = vmatpush1.msra.mxu0 %v187
    %296 = vmatprep.subr.mxu0 %v190
    %297 = vmatpush1.msra.mxu0 %v189
    %298 = vmatprep.subr.mxu0 0.0
    %299 = vmatpush1.msra.mxu0 0.0
    %300 = vmatprep.subr.mxu0 0.0
    %301 = vmatpush1.msra.mxu0 0.0
    %302 = vmatprep.subr.mxu0 0.0
    %303 = vmatpush1.msra.mxu0 0.0
    %304 = vmatprep.subr.mxu0 0.0
    %305 = vmatpush1.msra.mxu0 0.0
    %306 = vmatprep.subr.mxu0 0.0
    %307 = vmatpush1.msra.mxu0 0.0
    %308 = vmatprep.subr.mxu0 0.0
    %309 = vmatpush1.msra.mxu0 0.0
    %310 = vmatprep.subr.mxu0 0.0
    %311 = vmatpush1.msra.mxu0 0.0
    %312 = vmatprep.subr.mxu0 0.0
    %313 = vmatpush1.msra.mxu0 0.0
    %314 = vmatprep.subr.mxu0 0.0
    %315 = vmatpush1.msra.mxu0 0.0
    %316 = vmatprep.subr.mxu0 0.0
    %317 = vmatpush1.msra.mxu0 0.0
    %318 = vmatprep.subr.mxu0 0.0
    %319 = vmatpush1.msra.mxu0 0.0
    %320 = vmatprep.subr.mxu0 0.0
    %321 = vmatpush1.msra.mxu0 0.0
    %322 = vmatprep.subr.mxu0 0.0
    %323 = vmatpush1.msra.mxu0 0.0
    %324 = vmatprep.subr.mxu0 0.0
    %325 = vmatpush1.msra.mxu0 0.0
    %326 = vmatprep.subr.mxu0 0.0
    %327 = vmatpush1.msra.mxu0 0.0
    %328 = vmatprep.subr.mxu0 0.0
    %329 = vmatpush1.msra.mxu0 0.0
    %330 = vmatprep.subr.mxu0 0.0
    %331 = vmatpush1.msra.mxu0 0.0
    %332 = vmatprep.subr.mxu0 0.0
    %333 = vmatpush1.msra.mxu0 0.0
    %334 = vmatprep.subr.mxu0 0.0
    %335 = vmatpush1.msra.mxu0 0.0
    %336 = vmatprep.subr.mxu0 0.0
    %337 = vmatpush1.msra.mxu0 0.0
    %338 = vmatprep.subr.mxu0 0.0
    %339 = vmatpush1.msra.mxu0 0.0
    %340 = vmatprep.subr.mxu0 0.0
    %341 = vmatpush1.msra.mxu0 0.0
    %342 = vmatprep.subr.mxu0 0.0
    %343 = vmatpush1.msra.mxu0 0.0
    %344 = vmatprep.subr.mxu0 0.0
    %345 = vmatpush1.msra.mxu0 0.0
    %346 = vmatprep.subr.mxu0 0.0
    %347 = vmatpush1.msra.mxu0 0.0
    %348 = vmatprep.subr.mxu0 0.0
    %349 = vmatpush1.msra.mxu0 0.0
    %350 = vmatprep.subr.mxu0 0.0
    %351 = vmatpush1.msra.mxu0 0.0
    %352 = vmatprep.subr.mxu0 0.0
    %353 = vmatpush1.msra.mxu0 0.0
    %354 = vmatprep.subr.mxu0 0.0
    %355 = vmatpush1.msra.mxu0 0.0
    %356 = vmatprep.subr.mxu0 0.0
    %357 = vmatpush1.msra.mxu0 0.0
    %358 = vmatprep.mubr.f32.mxu0 0.0
    %359 = vmatmul.mubr.f32.gmra.mrb[0].mxu0 %v289
    %v360 = vpop.f32.mrb[0].mxu0
    %v361 = vadd.f32 %v195, %v360
    %v362 = vpop.f32.mrb[0].mxu0
    %v363 = vadd.f32 %v199, %v362
    %364 = vmatprep.mubr.f32.mxu0 0.0
    %365 = vmatmul.mubr.f32.gmra.mrb[0].mxu0 %v292
    %v366 = vpop.f32.mrb[0].mxu0
    %v367 = vadd.f32 %v195, %v366
    %v368 = vpop.f32.mrb[0].mxu0
    %v369 = vadd.f32 %v199, %v368
    %370 = vdwg.mxu0
    %v371 = vld [vmem:[%s4] sm:$0xff]
    %v372 = vld [vmem:[%s4 + $0x8] sm:$0xff]
    %v373 = vld [vmem:[%s4 + $0x10] sm:$0xff]
    %v374 = vld [vmem:[%s4 + $0x18] sm:$0xff]
    %v375 = vld [vmem:[%s4 + $0x20] sm:$0xff]
    %v376 = vld [vmem:[%s4 + $0x28] sm:$0xff]
    %v377 = vld [vmem:[%s4 + $0x30] sm:$0xff]
    %v378 = vld [vmem:[%s4 + $0x38] sm:$0xff]
    %v379 = vld [vmem:[%s4 + $0x40] sm:$0xff]
    %v380 = vld [vmem:[%s4 + $0x48] sm:$0xff]
    %v381 = vld [vmem:[%s4 + $0x50] sm:$0xff]
    %v382 = vld [vmem:[%s4 + $0x58] sm:$0xff]
    %v383 = vld [vmem:[%s4 + $0x60] sm:$0xff]
    %v384 = vld [vmem:[%s4 + $0x68] sm:$0xff]
    %v385 = vld [vmem:[%s4 + $0x70] sm:$0xff]
    %v386 = vld [vmem:[%s4 + $0x78] sm:$0xff]
    %v387 = vlaneseq
    %v388 = vand.u32 %v387, 127
    %v389 = vadd.s32 %v388, 128
    %vm390 = vcmp.lt.s32.totalorder %v388, 0
    %v391 = vsub.s32 0, %v388
    %v392 = vsel %vm390, %v391, %v388
    %v393 = vshrl.u32 %v392, 6
    %v394 = vand.u32 %v392, 63
    %v395 = vsub.s32 0, %v394
    %v396 = vsel %vm390, %v395, %v394
    %vm397 = vcmp.lt.s32.totalorder %v389, 0
    %v398 = vsub.s32 0, %v389
    %v399 = vsel %vm397, %v398, %v389
    %v400 = vshrl.u32 %v399, 6
    %v401 = vand.u32 %v399, 63
    %v402 = vsub.s32 0, %v401
    %v403 = vsel %vm397, %v402, %v401
    %vm404 = vcmp.ne.s32.totalorder %v396, 0
    %vm405 = vcmp.ne.s32.totalorder %v403, 0
    %vm406 = vcmp.lt.s32.totalorder %v396, 0
    %vm407 = vcmp.lt.s32.totalorder %v403, 0
    %vm408 = vmand %vm406, %vm404
    %vm409 = vmand %vm407, %vm405
    %v410 = vadd.s32 %v396, 64
    %v411 = vadd.s32 %v403, 64
    %v412 = vsel %vm408, %v410, %v396
    %v413 = vsel %vm409, %v411, %v403
    %vm414 = vcmp.lt.s32.totalorder %v412, 32
    %vm415 = vcmp.lt.s32.totalorder %v413, 32
    %v418 = vrot.slane %v282, 6
    %v419 = vrot.slane %v284, 6
    %v422 = vsel %vm414, %v276, %v418
    %v423 = vsel %vm415, %v278, %v419
    %vm424 = vcmask 523264
    %v426 = vsel %vm424, 0.0, 0
    %428 = vmatprep.subr.mxu0 %v372
    %429 = vmatpush1.msra.mxu0 %v371
    %430 = vmatprep.subr.mxu0 %v374
    %431 = vmatpush1.msra.mxu0 %v373
    %432 = vmatprep.subr.mxu0 %v376
    %433 = vmatpush1.msra.mxu0 %v375
    %434 = vmatprep.subr.mxu0 %v378
    %435 = vmatpush1.msra.mxu0 %v377
    %436 = vmatprep.subr.mxu0 %v380
    %437 = vmatpush1.msra.mxu0 %v379
    %438 = vmatprep.subr.mxu0 %v382
    %439 = vmatpush1.msra.mxu0 %v381
    %440 = vmatprep.subr.mxu0 %v384
    %441 = vmatpush1.msra.mxu0 %v383
    %442 = vmatprep.subr.mxu0 %v386
    %443 = vmatpush1.msra.mxu0 %v385
    %444 = vmatprep.subr.mxu0 0.0
    %445 = vmatpush1.msra.mxu0 0.0
    %446 = vmatprep.subr.mxu0 0.0
    %447 = vmatpush1.msra.mxu0 0.0
    %448 = vmatprep.subr.mxu0 0.0
    %449 = vmatpush1.msra.mxu0 0.0
    %450 = vmatprep.subr.mxu0 0.0
    %451 = vmatpush1.msra.mxu0 0.0
    %452 = vmatprep.subr.mxu0 0.0
    %453 = vmatpush1.msra.mxu0 0.0
    %454 = vmatprep.subr.mxu0 0.0
    %455 = vmatpush1.msra.mxu0 0.0
    %456 = vmatprep.subr.mxu0 0.0
    %457 = vmatpush1.msra.mxu0 0.0
    %458 = vmatprep.subr.mxu0 0.0
    %459 = vmatpush1.msra.mxu0 0.0
    %460 = vmatprep.subr.mxu0 0.0
    %461 = vmatpush1.msra.mxu0 0.0
    %462 = vmatprep.subr.mxu0 0.0
    %463 = vmatpush1.msra.mxu0 0.0
    %464 = vmatprep.subr.mxu0 0.0
    %465 = vmatpush1.msra.mxu0 0.0
    %466 = vmatprep.subr.mxu0 0.0
    %467 = vmatpush1.msra.mxu0 0.0
    %468 = vmatprep.subr.mxu0 0.0
    %469 = vmatpush1.msra.mxu0 0.0
    %470 = vmatprep.subr.mxu0 0.0
    %471 = vmatpush1.msra.mxu0 0.0
    %472 = vmatprep.subr.mxu0 0.0
    %473 = vmatpush1.msra.mxu0 0.0
    %474 = vmatprep.subr.mxu0 0.0
    %475 = vmatpush1.msra.mxu0 0.0
    %476 = vmatprep.subr.mxu0 0.0
    %477 = vmatpush1.msra.mxu0 0.0
    %478 = vmatprep.subr.mxu0 0.0
    %479 = vmatpush1.msra.mxu0 0.0
    %480 = vmatprep.subr.mxu0 0.0
    %481 = vmatpush1.msra.mxu0 0.0
    %482 = vmatprep.subr.mxu0 0.0
    %483 = vmatpush1.msra.mxu0 0.0
    %484 = vmatprep.subr.mxu0 0.0
    %485 = vmatpush1.msra.mxu0 0.0
    %486 = vmatprep.subr.mxu0 0.0
    %487 = vmatpush1.msra.mxu0 0.0
    %488 = vmatprep.subr.mxu0 0.0
    %489 = vmatpush1.msra.mxu0 0.0
    %490 = vmatprep.subr.mxu0 0.0
    %491 = vmatpush1.msra.mxu0 0.0
    %492 = vmatprep.mubr.f32.mxu0 0.0
    %493 = vmatmul.mubr.f32.gmra.mrb[0].mxu0 %v426
    %v494 = vpop.f32.mrb[0].mxu0
    %v495 = vadd.f32 0.0, %v494
    %v496 = vpop.f32.mrb[0].mxu0
    %v497 = vadd.f32 0.0, %v496
    %498 = vdwg.mxu0
    %v499 = vadd.f32 %v422, %v495
    %v500 = vadd.f32 %v423, %v497
    %v501 = vxor.u32 %v499, 2147483648
    %v502 = vxor.u32 %v500, 2147483648
    %v503 = vmul.f32 %v501, 1.442695
    %v504 = vpow.pop %v503
    %v505 = vmul.f32 %v502, 1.442695
    %v506 = vpow.pop %v505
    %v507 = vadd.f32 %v504, 1.0
    %v508 = vadd.f32 %v506, 1.0
    %v509 = vrcp.pop %v507
    %v510 = vmul.f32 1.0, %v509
    %v511 = vrcp.pop %v508
    %v512 = vmul.f32 1.0, %v511
    %v513 = vtanh.pop %v500
    %v514 = vmul.f32 %v510, 0.0
    %516 = vrot.lane.b32.xlu0 %v513, 64
    %v517 = vpop.permute.xlu0 %516
    %v519 = vmul.f32 %v510, %v517
    %521 = vrot.lane.b32.xlu0 %v519, 64
    %v522 = vpop.permute.xlu0 %521
    %v524 = vadd.f32 %v514, %v522
    %v525 = vtanh.pop %v524
    %527 = vrot.lane.b32.xlu0 %v525, 64
    %v528 = vpop.permute.xlu0 %527
    %v530 = vmul.f32 %v512, %v528
    %v531 = vrot.slane %v282, 2
    %v532 = vrot.slane %v284, 2
    %v535 = vsel %vm414, %v276, %v531
    %v536 = vsel %vm415, %v278, %v532
    %v538 = vsel %vm424, %v530, 0
    %540 = vmatprep.subr.mxu0 %v372
    %541 = vmatpush1.msra.mxu0 %v371
    %542 = vmatprep.subr.mxu0 %v374
    %543 = vmatpush1.msra.mxu0 %v373
    %544 = vmatprep.subr.mxu0 %v376
    %545 = vmatpush1.msra.mxu0 %v375
    %546 = vmatprep.subr.mxu0 %v378
    %547 = vmatpush1.msra.mxu0 %v377
    %548 = vmatprep.subr.mxu0 %v380
    %549 = vmatpush1.msra.mxu0 %v379
    %550 = vmatprep.subr.mxu0 %v382
    %551 = vmatpush1.msra.mxu0 %v381
    %552 = vmatprep.subr.mxu0 %v384
    %553 = vmatpush1.msra.mxu0 %v383
    %554 = vmatprep.subr.mxu0 %v386
    %555 = vmatpush1.msra.mxu0 %v385
    %556 = vmatprep.subr.mxu0 0.0
    %557 = vmatpush1.msra.mxu0 0.0
    %558 = vmatprep.subr.mxu0 0.0
    %559 = vmatpush1.msra.mxu0 0.0
    %560 = vmatprep.subr.mxu0 0.0
    %561 = vmatpush1.msra.mxu0 0.0
    %562 = vmatprep.subr.mxu0 0.0
    %563 = vmatpush1.msra.mxu0 0.0
    %564 = vmatprep.subr.mxu0 0.0
    %565 = vmatpush1.msra.mxu0 0.0
    %566 = vmatprep.subr.mxu0 0.0
    %567 = vmatpush1.msra.mxu0 0.0
    %568 = vmatprep.subr.mxu0 0.0
    %569 = vmatpush1.msra.mxu0 0.0
    %570 = vmatprep.subr.mxu0 0.0
    %571 = vmatpush1.msra.mxu0 0.0
    %572 = vmatprep.subr.mxu0 0.0
    %573 = vmatpush1.msra.mxu0 0.0
    %574 = vmatprep.subr.mxu0 0.0
    %575 = vmatpush1.msra.mxu0 0.0
    %576 = vmatprep.subr.mxu0 0.0
    %577 = vmatpush1.msra.mxu0 0.0
    %578 = vmatprep.subr.mxu0 0.0
    %579 = vmatpush1.msra.mxu0 0.0
    %580 = vmatprep.subr.mxu0 0.0
    %581 = vmatpush1.msra.mxu0 0.0
    %582 = vmatprep.subr.mxu0 0.0
    %583 = vmatpush1.msra.mxu0 0.0
    %584 = vmatprep.subr.mxu0 0.0
    %585 = vmatpush1.msra.mxu0 0.0
    %586 = vmatprep.subr.mxu0 0.0
    %587 = vmatpush1.msra.mxu0 0.0
    %588 = vmatprep.subr.mxu0 0.0
    %589 = vmatpush1.msra.mxu0 0.0
    %590 = vmatprep.subr.mxu0 0.0
    %591 = vmatpush1.msra.mxu0 0.0
    %592 = vmatprep.subr.mxu0 0.0
    %593 = vmatpush1.msra.mxu0 0.0
    %594 = vmatprep.subr.mxu0 0.0
    %595 = vmatpush1.msra.mxu0 0.0
    %596 = vmatprep.subr.mxu0 0.0
    %597 = vmatpush1.msra.mxu0 0.0
    %598 = vmatprep.subr.mxu0 0.0
    %599 = vmatpush1.msra.mxu0 0.0
    %600 = vmatprep.subr.mxu0 0.0
    %601 = vmatpush1.msra.mxu0 0.0
    %602 = vmatprep.subr.mxu0 0.0
    %603 = vmatpush1.msra.mxu0 0.0
    %604 = vmatprep.mubr.f32.mxu0 0.0
    %605 = vmatmul.mubr.f32.gmra.mrb[0].mxu0 %v538
    %v606 = vpop.f32.mrb[0].mxu0
    %v607 = vadd.f32 0.0, %v606
    %v608 = vpop.f32.mrb[0].mxu0
    %v609 = vadd.f32 0.0, %v608
    %610 = vdwg.mxu0
    %v613 = vrot.slane %v607, 6
    %v614 = vrot.slane %v609, 6
    %v617 = vadd.f32 %v535, %v613
    %v618 = vadd.f32 %v536, %v614
    %v619 = vxor.u32 %v617, 2147483648
    %v620 = vxor.u32 %v618, 2147483648
    %v621 = vmul.f32 %v619, 1.442695
    %v622 = vpow.pop %v621
    %v623 = vmul.f32 %v620, 1.442695
    %v624 = vpow.pop %v623
    %v625 = vadd.f32 %v622, 1.0
    %v626 = vadd.f32 %v624, 1.0
    %v627 = vrcp.pop %v625
    %v628 = vmul.f32 1.0, %v627
    %v629 = vrcp.pop %v626
    %v630 = vmul.f32 1.0, %v629
    %v631 = vtanh.pop %v618
    %v633 = vrot.slane %v524, 6
    %v635 = vmul.f32 %v628, %v633
    %637 = vrot.lane.b32.xlu0 %v631, 64
    %v638 = vpop.permute.xlu0 %637
    %v640 = vmul.f32 %v628, %v638
    %642 = vrot.lane.b32.xlu0 %v640, 64
    %v643 = vpop.permute.xlu0 %642
    %v645 = vadd.f32 %v635, %v643
    %v646 = vtanh.pop %v645
    %648 = vrot.lane.b32.xlu0 %v646, 64
    %v649 = vpop.permute.xlu0 %648
    %v651 = vmul.f32 %v630, %v649
    %v653 = vrot.slane %v651, 2
    %v654 = vsel %vm424, %v653, 0
    %656 = vmatprep.subr.mxu0 %v372
    %657 = vmatpush1.msra.mxu0 %v371
    %658 = vmatprep.subr.mxu0 %v374
    %659 = vmatpush1.msra.mxu0 %v373
    %660 = vmatprep.subr.mxu0 %v376
    %661 = vmatpush1.msra.mxu0 %v375
    %662 = vmatprep.subr.mxu0 %v378
    %663 = vmatpush1.msra.mxu0 %v377
    %664 = vmatprep.subr.mxu0 %v380
    %665 = vmatpush1.msra.mxu0 %v379
    %666 = vmatprep.subr.mxu0 %v382
    %667 = vmatpush1.msra.mxu0 %v381
    %668 = vmatprep.subr.mxu0 %v384
    %669 = vmatpush1.msra.mxu0 %v383
    %670 = vmatprep.subr.mxu0 %v386
    %671 = vmatpush1.msra.mxu0 %v385
    %672 = vmatprep.subr.mxu0 0.0
    %673 = vmatpush1.msra.mxu0 0.0
    %674 = vmatprep.subr.mxu0 0.0
    %675 = vmatpush1.msra.mxu0 0.0
    %676 = vmatprep.subr.mxu0 0.0
    %677 = vmatpush1.msra.mxu0 0.0
    %678 = vmatprep.subr.mxu0 0.0
    %679 = vmatpush1.msra.mxu0 0.0
    %680 = vmatprep.subr.mxu0 0.0
    %681 = vmatpush1.msra.mxu0 0.0
    %682 = vmatprep.subr.mxu0 0.0
    %683 = vmatpush1.msra.mxu0 0.0
    %684 = vmatprep.subr.mxu0 0.0
    %685 = vmatpush1.msra.mxu0 0.0
    %686 = vmatprep.subr.mxu0 0.0
    %687 = vmatpush1.msra.mxu0 0.0
    %688 = vmatprep.subr.mxu0 0.0
    %689 = vmatpush1.msra.mxu0 0.0
    %690 = vmatprep.subr.mxu0 0.0
    %691 = vmatpush1.msra.mxu0 0.0
    %692 = vmatprep.subr.mxu0 0.0
    %693 = vmatpush1.msra.mxu0 0.0
    %694 = vmatprep.subr.mxu0 0.0
    %695 = vmatpush1.msra.mxu0 0.0
    %696 = vmatprep.subr.mxu0 0.0
    %697 = vmatpush1.msra.mxu0 0.0
    %698 = vmatprep.subr.mxu0 0.0
    %699 = vmatpush1.msra.mxu0 0.0
    %700 = vmatprep.subr.mxu0 0.0
    %701 = vmatpush1.msra.mxu0 0.0
    %702 = vmatprep.subr.mxu0 0.0
    %703 = vmatpush1.msra.mxu0 0.0
    %704 = vmatprep.subr.mxu0 0.0
    %705 = vmatpush1.msra.mxu0 0.0
    %706 = vmatprep.subr.mxu0 0.0
    %707 = vmatpush1.msra.mxu0 0.0
    %708 = vmatprep.subr.mxu0 0.0
    %709 = vmatpush1.msra.mxu0 0.0
    %710 = vmatprep.subr.mxu0 0.0
    %711 = vmatpush1.msra.mxu0 0.0
    %712 = vmatprep.subr.mxu0 0.0
    %713 = vmatpush1.msra.mxu0 0.0
    %714 = vmatprep.subr.mxu0 0.0
    %715 = vmatpush1.msra.mxu0 0.0
    %716 = vmatprep.subr.mxu0 0.0
    %717 = vmatpush1.msra.mxu0 0.0
    %718 = vmatprep.subr.mxu0 0.0
    %719 = vmatpush1.msra.mxu0 0.0
    %720 = vmatprep.mubr.f32.mxu0 0.0
    %721 = vmatmul.mubr.f32.gmra.mrb[0].mxu0 %v654
    %v722 = vpop.f32.mrb[0].mxu0
    %v723 = vadd.f32 0.0, %v722
    %v724 = vpop.f32.mrb[0].mxu0
    %v725 = vadd.f32 0.0, %v724
    %726 = vdwg.mxu0
    %v729 = vrot.slane %v723, 4
    %v730 = vrot.slane %v725, 4
    %v733 = vadd.f32 %v422, %v729
    %v734 = vadd.f32 %v423, %v730
    %v735 = vxor.u32 %v733, 2147483648
    %v736 = vxor.u32 %v734, 2147483648
    %v737 = vmul.f32 %v735, 1.442695
    %v738 = vpow.pop %v737
    %v739 = vmul.f32 %v736, 1.442695
    %v740 = vpow.pop %v739
    %v741 = vadd.f32 %v738, 1.0
    %v742 = vadd.f32 %v740, 1.0
    %v743 = vrcp.pop %v741
    %v744 = vmul.f32 1.0, %v743
    %v745 = vrcp.pop %v742
    %v746 = vmul.f32 1.0, %v745
    %v747 = vtanh.pop %v734
    %v749 = vrot.slane %v645, 6
    %v751 = vmul.f32 %v744, %v749
    %753 = vrot.lane.b32.xlu0 %v747, 64
    %v754 = vpop.permute.xlu0 %753
    %v756 = vmul.f32 %v744, %v754
    %758 = vrot.lane.b32.xlu0 %v756, 64
    %v759 = vpop.permute.xlu0 %758
    %v761 = vadd.f32 %v751, %v759
    %v762 = vtanh.pop %v761
    %764 = vrot.lane.b32.xlu0 %v762, 64
    %v765 = vpop.permute.xlu0 %764
    %v767 = vmul.f32 %v746, %v765
    %v769 = vrot.slane %v767, 4
    %v770 = vsel %vm424, %v769, 0
    %772 = vmatprep.subr.mxu0 %v372
    %773 = vmatpush1.msra.mxu0 %v371
    %774 = vmatprep.subr.mxu0 %v374
    %775 = vmatpush1.msra.mxu0 %v373
    %776 = vmatprep.subr.mxu0 %v376
    %777 = vmatpush1.msra.mxu0 %v375
    %778 = vmatprep.subr.mxu0 %v378
    %779 = vmatpush1.msra.mxu0 %v377
    %780 = vmatprep.subr.mxu0 %v380
    %781 = vmatpush1.msra.mxu0 %v379
    %782 = vmatprep.subr.mxu0 %v382
    %783 = vmatpush1.msra.mxu0 %v381
    %784 = vmatprep.subr.mxu0 %v384
    %785 = vmatpush1.msra.mxu0 %v383
    %786 = vmatprep.subr.mxu0 %v386
    %787 = vmatpush1.msra.mxu0 %v385
    %788 = vmatprep.subr.mxu0 0.0
    %789 = vmatpush1.msra.mxu0 0.0
    %790 = vmatprep.subr.mxu0 0.0
    %791 = vmatpush1.msra.mxu0 0.0
    %792 = vmatprep.subr.mxu0 0.0
    %793 = vmatpush1.msra.mxu0 0.0
    %794 = vmatprep.subr.mxu0 0.0
    %795 = vmatpush1.msra.mxu0 0.0
    %796 = vmatprep.subr.mxu0 0.0
    %797 = vmatpush1.msra.mxu0 0.0
    %798 = vmatprep.subr.mxu0 0.0
    %799 = vmatpush1.msra.mxu0 0.0
    %800 = vmatprep.subr.mxu0 0.0
    %801 = vmatpush1.msra.mxu0 0.0
    %802 = vmatprep.subr.mxu0 0.0
    %803 = vmatpush1.msra.mxu0 0.0
    %804 = vmatprep.subr.mxu0 0.0
    %805 = vmatpush1.msra.mxu0 0.0
    %806 = vmatprep.subr.mxu0 0.0
    %807 = vmatpush1.msra.mxu0 0.0
    %808 = vmatprep.subr.mxu0 0.0
    %809 = vmatpush1.msra.mxu0 0.0
    %810 = vmatprep.subr.mxu0 0.0
    %811 = vmatpush1.msra.mxu0 0.0
    %812 = vmatprep.subr.mxu0 0.0
    %813 = vmatpush1.msra.mxu0 0.0
    %814 = vmatprep.subr.mxu0 0.0
    %815 = vmatpush1.msra.mxu0 0.0
    %816 = vmatprep.subr.mxu0 0.0
    %817 = vmatpush1.msra.mxu0 0.0
    %818 = vmatprep.subr.mxu0 0.0
    %819 = vmatpush1.msra.mxu0 0.0
    %820 = vmatprep.subr.mxu0 0.0
    %821 = vmatpush1.msra.mxu0 0.0
    %822 = vmatprep.subr.mxu0 0.0
    %823 = vmatpush1.msra.mxu0 0.0
    %824 = vmatprep.subr.mxu0 0.0
    %825 = vmatpush1.msra.mxu0 0.0
    %826 = vmatprep.subr.mxu0 0.0
    %827 = vmatpush1.msra.mxu0 0.0
    %828 = vmatprep.subr.mxu0 0.0
    %829 = vmatpush1.msra.mxu0 0.0
    %830 = vmatprep.subr.mxu0 0.0
    %831 = vmatpush1.msra.mxu0 0.0
    %832 = vmatprep.subr.mxu0 0.0
    %833 = vmatpush1.msra.mxu0 0.0
    %834 = vmatprep.subr.mxu0 0.0
    %835 = vmatpush1.msra.mxu0 0.0
    %836 = vmatprep.mubr.f32.mxu0 0.0
    %837 = vmatmul.mubr.f32.gmra.mrb[0].mxu0 %v770
    %v838 = vpop.f32.mrb[0].mxu0
    %v839 = vadd.f32 0.0, %v838
    %v840 = vpop.f32.mrb[0].mxu0
    %v841 = vadd.f32 0.0, %v840
    %842 = vdwg.mxu0
    %v845 = vrot.slane %v839, 2
    %v846 = vrot.slane %v841, 2
    %v849 = vadd.f32 %v535, %v845
    %v850 = vadd.f32 %v536, %v846
    %v851 = vxor.u32 %v849, 2147483648
    %v852 = vxor.u32 %v850, 2147483648
    %v853 = vmul.f32 %v851, 1.442695
    %v854 = vpow.pop %v853
    %v855 = vmul.f32 %v852, 1.442695
    %v856 = vpow.pop %v855
    %v857 = vadd.f32 %v854, 1.0
    %v858 = vadd.f32 %v856, 1.0
    %v859 = vrcp.pop %v857
    %v860 = vmul.f32 1.0, %v859
    %v861 = vrcp.pop %v858
    %v862 = vmul.f32 1.0, %v861
    %v863 = vtanh.pop %v850
    %v865 = vrot.slane %v761, 6
    %v867 = vmul.f32 %v860, %v865
    %869 = vrot.lane.b32.xlu0 %v863, 64
    %v870 = vpop.permute.xlu0 %869
    %v872 = vmul.f32 %v860, %v870
    %874 = vrot.lane.b32.xlu0 %v872, 64
    %v875 = vpop.permute.xlu0 %874
    %v877 = vadd.f32 %v867, %v875
    %v878 = vtanh.pop %v877
    %880 = vrot.lane.b32.xlu0 %v878, 64
    %v881 = vpop.permute.xlu0 %880
    %v883 = vmul.f32 %v862, %v881
    %v886 = vrot.slane %v276, 6
    %v887 = vrot.slane %v278, 6
    %v890 = vsel %vm414, %v282, %v886
    %v891 = vsel %vm415, %v284, %v887
    %v893 = vrot.slane %v883, 6
    %v894 = vsel %vm424, %v893, 0
    %896 = vmatprep.subr.mxu0 %v372
    %897 = vmatpush1.msra.mxu0 %v371
    %898 = vmatprep.subr.mxu0 %v374
    %899 = vmatpush1.msra.mxu0 %v373
    %900 = vmatprep.subr.mxu0 %v376
    %901 = vmatpush1.msra.mxu0 %v375
    %902 = vmatprep.subr.mxu0 %v378
    %903 = vmatpush1.msra.mxu0 %v377
    %904 = vmatprep.subr.mxu0 %v380
    %905 = vmatpush1.msra.mxu0 %v379
    %906 = vmatprep.subr.mxu0 %v382
    %907 = vmatpush1.msra.mxu0 %v381
    %908 = vmatprep.subr.mxu0 %v384
    %909 = vmatpush1.msra.mxu0 %v383
    %910 = vmatprep.subr.mxu0 %v386
    %911 = vmatpush1.msra.mxu0 %v385
    %912 = vmatprep.subr.mxu0 0.0
    %913 = vmatpush1.msra.mxu0 0.0
    %914 = vmatprep.subr.mxu0 0.0
    %915 = vmatpush1.msra.mxu0 0.0
    %916 = vmatprep.subr.mxu0 0.0
    %917 = vmatpush1.msra.mxu0 0.0
    %918 = vmatprep.subr.mxu0 0.0
    %919 = vmatpush1.msra.mxu0 0.0
    %920 = vmatprep.subr.mxu0 0.0
    %921 = vmatpush1.msra.mxu0 0.0
    %922 = vmatprep.subr.mxu0 0.0
    %923 = vmatpush1.msra.mxu0 0.0
    %924 = vmatprep.subr.mxu0 0.0
    %925 = vmatpush1.msra.mxu0 0.0
    %926 = vmatprep.subr.mxu0 0.0
    %927 = vmatpush1.msra.mxu0 0.0
    %928 = vmatprep.subr.mxu0 0.0
    %929 = vmatpush1.msra.mxu0 0.0
    %930 = vmatprep.subr.mxu0 0.0
    %931 = vmatpush1.msra.mxu0 0.0
    %932 = vmatprep.subr.mxu0 0.0
    %933 = vmatpush1.msra.mxu0 0.0
    %934 = vmatprep.subr.mxu0 0.0
    %935 = vmatpush1.msra.mxu0 0.0
    %936 = vmatprep.subr.mxu0 0.0
    %937 = vmatpush1.msra.mxu0 0.0
    %938 = vmatprep.subr.mxu0 0.0
    %939 = vmatpush1.msra.mxu0 0.0
    %940 = vmatprep.subr.mxu0 0.0
    %941 = vmatpush1.msra.mxu0 0.0
    %942 = vmatprep.subr.mxu0 0.0
    %943 = vmatpush1.msra.mxu0 0.0
    %944 = vmatprep.subr.mxu0 0.0
    %945 = vmatpush1.msra.mxu0 0.0
    %946 = vmatprep.subr.mxu0 0.0
    %947 = vmatpush1.msra.mxu0 0.0
    %948 = vmatprep.subr.mxu0 0.0
    %949 = vmatpush1.msra.mxu0 0.0
    %950 = vmatprep.subr.mxu0 0.0
    %951 = vmatpush1.msra.mxu0 0.0
    %952 = vmatprep.subr.mxu0 0.0
    %953 = vmatpush1.msra.mxu0 0.0
    %954 = vmatprep.subr.mxu0 0.0
    %955 = vmatpush1.msra.mxu0 0.0
    %956 = vmatprep.subr.mxu0 0.0
    %957 = vmatpush1.msra.mxu0 0.0
    %958 = vmatprep.subr.mxu0 0.0
    %959 = vmatpush1.msra.mxu0 0.0
    %960 = vmatprep.mubr.f32.mxu0 0.0
    %961 = vmatmul.mubr.f32.gmra.mrb[0].mxu0 %v894
    %v962 = vpop.f32.mrb[0].mxu0
    %v963 = vadd.f32 0.0, %v962
    %v964 = vpop.f32.mrb[0].mxu0
    %v965 = vadd.f32 0.0, %v964
    %966 = vdwg.mxu0
    %v967 = vadd.f32 %v890, %v963
    %v968 = vadd.f32 %v891, %v965
    %v969 = vxor.u32 %v967, 2147483648
    %v970 = vxor.u32 %v968, 2147483648
    %v971 = vmul.f32 %v969, 1.442695
    %v972 = vpow.pop %v971
    %v973 = vmul.f32 %v970, 1.442695
    %v974 = vpow.pop %v973
    %v975 = vadd.f32 %v972, 1.0
    %v976 = vadd.f32 %v974, 1.0
    %v977 = vrcp.pop %v975
    %v978 = vmul.f32 1.0, %v977
    %v979 = vrcp.pop %v976
    %v980 = vmul.f32 1.0, %v979
    %v981 = vtanh.pop %v968
    %v983 = vrot.slane %v877, 6
    %v985 = vmul.f32 %v978, %v983
    %987 = vrot.lane.b32.xlu0 %v981, 64
    %v988 = vpop.permute.xlu0 %987
    %v990 = vmul.f32 %v978, %v988
    %992 = vrot.lane.b32.xlu0 %v990, 64
    %v993 = vpop.permute.xlu0 %992
    %v995 = vadd.f32 %v985, %v993
    %v996 = vtanh.pop %v995
    %998 = vrot.lane.b32.xlu0 %v996, 64
    %v999 = vpop.permute.xlu0 %998
    %v1001 = vmul.f32 %v980, %v999
    %v1002 = vrot.slane %v276, 2
    %v1003 = vrot.slane %v278, 2
    %v1006 = vsel %vm414, %v282, %v1002
    %v1007 = vsel %vm415, %v284, %v1003
    %v1009 = vsel %vm424, %v1001, 0
    %1011 = vmatprep.subr.mxu0 %v372
    %1012 = vmatpush1.msra.mxu0 %v371
    %1013 = vmatprep.subr.mxu0 %v374
    %1014 = vmatpush1.msra.mxu0 %v373
    %1015 = vmatprep.subr.mxu0 %v376
    %1016 = vmatpush1.msra.mxu0 %v375
    %1017 = vmatprep.subr.mxu0 %v378
    %1018 = vmatpush1.msra.mxu0 %v377
    %1019 = vmatprep.subr.mxu0 %v380
    %1020 = vmatpush1.msra.mxu0 %v379
    %1021 = vmatprep.subr.mxu0 %v382
    %1022 = vmatpush1.msra.mxu0 %v381
    %1023 = vmatprep.subr.mxu0 %v384
    %1024 = vmatpush1.msra.mxu0 %v383
    %1025 = vmatprep.subr.mxu0 %v386
    %1026 = vmatpush1.msra.mxu0 %v385
    %1027 = vmatprep.subr.mxu0 0.0
    %1028 = vmatpush1.msra.mxu0 0.0
    %1029 = vmatprep.subr.mxu0 0.0
    %1030 = vmatpush1.msra.mxu0 0.0
    %1031 = vmatprep.subr.mxu0 0.0
    %1032 = vmatpush1.msra.mxu0 0.0
    %1033 = vmatprep.subr.mxu0 0.0
    %1034 = vmatpush1.msra.mxu0 0.0
    %1035 = vmatprep.subr.mxu0 0.0
    %1036 = vmatpush1.msra.mxu0 0.0
    %1037 = vmatprep.subr.mxu0 0.0
    %1038 = vmatpush1.msra.mxu0 0.0
    %1039 = vmatprep.subr.mxu0 0.0
    %1040 = vmatpush1.msra.mxu0 0.0
    %1041 = vmatprep.subr.mxu0 0.0
    %1042 = vmatpush1.msra.mxu0 0.0
    %1043 = vmatprep.subr.mxu0 0.0
    %1044 = vmatpush1.msra.mxu0 0.0
    %1045 = vmatprep.subr.mxu0 0.0
    %1046 = vmatpush1.msra.mxu0 0.0
    %1047 = vmatprep.subr.mxu0 0.0
    %1048 = vmatpush1.msra.mxu0 0.0
    %1049 = vmatprep.subr.mxu0 0.0
    %1050 = vmatpush1.msra.mxu0 0.0
    %1051 = vmatprep.subr.mxu0 0.0
    %1052 = vmatpush1.msra.mxu0 0.0
    %1053 = vmatprep.subr.mxu0 0.0
    %1054 = vmatpush1.msra.mxu0 0.0
    %1055 = vmatprep.subr.mxu0 0.0
    %1056 = vmatpush1.msra.mxu0 0.0
    %1057 = vmatprep.subr.mxu0 0.0
    %1058 = vmatpush1.msra.mxu0 0.0
    %1059 = vmatprep.subr.mxu0 0.0
    %1060 = vmatpush1.msra.mxu0 0.0
    %1061 = vmatprep.subr.mxu0 0.0
    %1062 = vmatpush1.msra.mxu0 0.0
    %1063 = vmatprep.subr.mxu0 0.0
    %1064 = vmatpush1.msra.mxu0 0.0
    %1065 = vmatprep.subr.mxu0 0.0
    %1066 = vmatpush1.msra.mxu0 0.0
    %1067 = vmatprep.subr.mxu0 0.0
    %1068 = vmatpush1.msra.mxu0 0.0
    %1069 = vmatprep.subr.mxu0 0.0
    %1070 = vmatpush1.msra.mxu0 0.0
    %1071 = vmatprep.subr.mxu0 0.0
    %1072 = vmatpush1.msra.mxu0 0.0
    %1073 = vmatprep.subr.mxu0 0.0
    %1074 = vmatpush1.msra.mxu0 0.0
    %1075 = vmatprep.mubr.f32.mxu0 0.0
    %1076 = vmatmul.mubr.f32.gmra.mrb[0].mxu0 %v1009
    %v1077 = vpop.f32.mrb[0].mxu0
    %v1078 = vadd.f32 0.0, %v1077
    %v1079 = vpop.f32.mrb[0].mxu0
    %v1080 = vadd.f32 0.0, %v1079
    %1081 = vdwg.mxu0
    %v1084 = vrot.slane %v1078, 6
    %v1085 = vrot.slane %v1080, 6
    %v1088 = vadd.f32 %v1006, %v1084
    %v1089 = vadd.f32 %v1007, %v1085
    %v1090 = vxor.u32 %v1088, 2147483648
    %v1091 = vxor.u32 %v1089, 2147483648
    %v1092 = vmul.f32 %v1090, 1.442695
    %v1093 = vpow.pop %v1092
    %v1094 = vmul.f32 %v1091, 1.442695
    %v1095 = vpow.pop %v1094
    %v1096 = vadd.f32 %v1093, 1.0
    %v1097 = vadd.f32 %v1095, 1.0
    %v1098 = vrcp.pop %v1096
    %v1099 = vmul.f32 1.0, %v1098
    %v1100 = vrcp.pop %v1097
    %v1101 = vmul.f32 1.0, %v1100
    %v1102 = vtanh.pop %v1089
    %v1104 = vrot.slane %v995, 6
    %v1106 = vmul.f32 %v1099, %v1104
    %1108 = vrot.lane.b32.xlu0 %v1102, 64
    %v1109 = vpop.permute.xlu0 %1108
    %v1111 = vmul.f32 %v1099, %v1109
    %1113 = vrot.lane.b32.xlu0 %v1111, 64
    %v1114 = vpop.permute.xlu0 %1113
    %v1116 = vadd.f32 %v1106, %v1114
    %v1117 = vtanh.pop %v1116
    %1119 = vrot.lane.b32.xlu0 %v1117, 64
    %v1120 = vpop.permute.xlu0 %1119
    %v1122 = vmul.f32 %v1101, %v1120
    %v1124 = vrot.slane %v1122, 2
    %v1125 = vsel %vm424, %v1124, 0
    %1127 = vmatprep.subr.mxu0 %v372
    %1128 = vmatpush1.msra.mxu0 %v371
    %1129 = vmatprep.subr.mxu0 %v374
    %1130 = vmatpush1.msra.mxu0 %v373
    %1131 = vmatprep.subr.mxu0 %v376
    %1132 = vmatpush1.msra.mxu0 %v375
    %1133 = vmatprep.subr.mxu0 %v378
    %1134 = vmatpush1.msra.mxu0 %v377
    %1135 = vmatprep.subr.mxu0 %v380
    %1136 = vmatpush1.msra.mxu0 %v379
    %1137 = vmatprep.subr.mxu0 %v382
    %1138 = vmatpush1.msra.mxu0 %v381
    %1139 = vmatprep.subr.mxu0 %v384
    %1140 = vmatpush1.msra.mxu0 %v383
    %1141 = vmatprep.subr.mxu0 %v386
    %1142 = vmatpush1.msra.mxu0 %v385
    %1143 = vmatprep.subr.mxu0 0.0
    %1144 = vmatpush1.msra.mxu0 0.0
    %1145 = vmatprep.subr.mxu0 0.0
    %1146 = vmatpush1.msra.mxu0 0.0
    %1147 = vmatprep.subr.mxu0 0.0
    %1148 = vmatpush1.msra.mxu0 0.0
    %1149 = vmatprep.subr.mxu0 0.0
    %1150 = vmatpush1.msra.mxu0 0.0
    %1151 = vmatprep.subr.mxu0 0.0
    %1152 = vmatpush1.msra.mxu0 0.0
    %1153 = vmatprep.subr.mxu0 0.0
    %1154 = vmatpush1.msra.mxu0 0.0
    %1155 = vmatprep.subr.mxu0 0.0
    %1156 = vmatpush1.msra.mxu0 0.0
    %1157 = vmatprep.subr.mxu0 0.0
    %1158 = vmatpush1.msra.mxu0 0.0
    %1159 = vmatprep.subr.mxu0 0.0
    %1160 = vmatpush1.msra.mxu0 0.0
    %1161 = vmatprep.subr.mxu0 0.0
    %1162 = vmatpush1.msra.mxu0 0.0
    %1163 = vmatprep.subr.mxu0 0.0
    %1164 = vmatpush1.msra.mxu0 0.0
    %1165 = vmatprep.subr.mxu0 0.0
    %1166 = vmatpush1.msra.mxu0 0.0
    %1167 = vmatprep.subr.mxu0 0.0
    %1168 = vmatpush1.msra.mxu0 0.0
    %1169 = vmatprep.subr.mxu0 0.0
    %1170 = vmatpush1.msra.mxu0 0.0
    %1171 = vmatprep.subr.mxu0 0.0
    %1172 = vmatpush1.msra.mxu0 0.0
    %1173 = vmatprep.subr.mxu0 0.0
    %1174 = vmatpush1.msra.mxu0 0.0
    %1175 = vmatprep.subr.mxu0 0.0
    %1176 = vmatpush1.msra.mxu0 0.0
    %1177 = vmatprep.subr.mxu0 0.0
    %1178 = vmatpush1.msra.mxu0 0.0
    %1179 = vmatprep.subr.mxu0 0.0
    %1180 = vmatpush1.msra.mxu0 0.0
    %1181 = vmatprep.subr.mxu0 0.0
    %1182 = vmatpush1.msra.mxu0 0.0
    %1183 = vmatprep.subr.mxu0 0.0
    %1184 = vmatpush1.msra.mxu0 0.0
    %1185 = vmatprep.subr.mxu0 0.0
    %1186 = vmatpush1.msra.mxu0 0.0
    %1187 = vmatprep.subr.mxu0 0.0
    %1188 = vmatpush1.msra.mxu0 0.0
    %1189 = vmatprep.subr.mxu0 0.0
    %1190 = vmatpush1.msra.mxu0 0.0
    %1191 = vmatprep.mubr.f32.mxu0 0.0
    %1192 = vmatmul.mubr.f32.gmra.mrb[0].mxu0 %v1125
    %v1193 = vpop.f32.mrb[0].mxu0
    %v1194 = vadd.f32 0.0, %v1193
    %v1195 = vpop.f32.mrb[0].mxu0
    %v1196 = vadd.f32 0.0, %v1195
    %1197 = vdwg.mxu0
    %v1200 = vrot.slane %v1194, 4
    %v1201 = vrot.slane %v1196, 4
    %v1204 = vadd.f32 %v890, %v1200
    %v1205 = vadd.f32 %v891, %v1201
    %v1206 = vxor.u32 %v1204, 2147483648
    %v1207 = vxor.u32 %v1205, 2147483648
    %v1208 = vmul.f32 %v1206, 1.442695
    %v1209 = vpow.pop %v1208
    %v1210 = vmul.f32 %v1207, 1.442695
    %v1211 = vpow.pop %v1210
    %v1212 = vadd.f32 %v1209, 1.0
    %v1213 = vadd.f32 %v1211, 1.0
    %v1214 = vrcp.pop %v1212
    %v1215 = vmul.f32 1.0, %v1214
    %v1216 = vrcp.pop %v1213
    %v1217 = vmul.f32 1.0, %v1216
    %v1218 = vtanh.pop %v1205
    %v1220 = vrot.slane %v1116, 6
    %v1222 = vmul.f32 %v1215, %v1220
    %1224 = vrot.lane.b32.xlu0 %v1218, 64
    %v1225 = vpop.permute.xlu0 %1224
    %v1227 = vmul.f32 %v1215, %v1225
    %1229 = vrot.lane.b32.xlu0 %v1227, 64
    %v1230 = vpop.permute.xlu0 %1229
    %v1232 = vadd.f32 %v1222, %v1230
    %v1233 = vtanh.pop %v1232
    %1235 = vrot.lane.b32.xlu0 %v1233, 64
    %v1236 = vpop.permute.xlu0 %1235
    %v1238 = vmul.f32 %v1217, %v1236
    %v1240 = vrot.slane %v1238, 4
    %v1241 = vsel %vm424, %v1240, 0
    %1243 = vmatprep.subr.mxu0 %v372
    %1244 = vmatpush1.msra.mxu0 %v371
    %1245 = vmatprep.subr.mxu0 %v374
    %1246 = vmatpush1.msra.mxu0 %v373
    %1247 = vmatprep.subr.mxu0 %v376
    %1248 = vmatpush1.msra.mxu0 %v375
    %1249 = vmatprep.subr.mxu0 %v378
    %1250 = vmatpush1.msra.mxu0 %v377
    %1251 = vmatprep.subr.mxu0 %v380
    %1252 = vmatpush1.msra.mxu0 %v379
    %1253 = vmatprep.subr.mxu0 %v382
    %1254 = vmatpush1.msra.mxu0 %v381
    %1255 = vmatprep.subr.mxu0 %v384
    %1256 = vmatpush1.msra.mxu0 %v383
    %1257 = vmatprep.subr.mxu0 %v386
    %1258 = vmatpush1.msra.mxu0 %v385
    %1259 = vmatprep.subr.mxu0 0.0
    %1260 = vmatpush1.msra.mxu0 0.0
    %1261 = vmatprep.subr.mxu0 0.0
    %1262 = vmatpush1.msra.mxu0 0.0
    %1263 = vmatprep.subr.mxu0 0.0
    %1264 = vmatpush1.msra.mxu0 0.0
    %1265 = vmatprep.subr.mxu0 0.0
    %1266 = vmatpush1.msra.mxu0 0.0
    %1267 = vmatprep.subr.mxu0 0.0
    %1268 = vmatpush1.msra.mxu0 0.0
    %1269 = vmatprep.subr.mxu0 0.0
    %1270 = vmatpush1.msra.mxu0 0.0
    %1271 = vmatprep.subr.mxu0 0.0
    %1272 = vmatpush1.msra.mxu0 0.0
    %1273 = vmatprep.subr.mxu0 0.0
    %1274 = vmatpush1.msra.mxu0 0.0
    %1275 = vmatprep.subr.mxu0 0.0
    %1276 = vmatpush1.msra.mxu0 0.0
    %1277 = vmatprep.subr.mxu0 0.0
    %1278 = vmatpush1.msra.mxu0 0.0
    %1279 = vmatprep.subr.mxu0 0.0
    %1280 = vmatpush1.msra.mxu0 0.0
    %1281 = vmatprep.subr.mxu0 0.0
    %1282 = vmatpush1.msra.mxu0 0.0
    %1283 = vmatprep.subr.mxu0 0.0
    %1284 = vmatpush1.msra.mxu0 0.0
    %1285 = vmatprep.subr.mxu0 0.0
    %1286 = vmatpush1.msra.mxu0 0.0
    %1287 = vmatprep.subr.mxu0 0.0
    %1288 = vmatpush1.msra.mxu0 0.0
    %1289 = vmatprep.subr.mxu0 0.0
    %1290 = vmatpush1.msra.mxu0 0.0
    %1291 = vmatprep.subr.mxu0 0.0
    %1292 = vmatpush1.msra.mxu0 0.0
    %1293 = vmatprep.subr.mxu0 0.0
    %1294 = vmatpush1.msra.mxu0 0.0
    %1295 = vmatprep.subr.mxu0 0.0
    %1296 = vmatpush1.msra.mxu0 0.0
    %1297 = vmatprep.subr.mxu0 0.0
    %1298 = vmatpush1.msra.mxu0 0.0
    %1299 = vmatprep.subr.mxu0 0.0
    %1300 = vmatpush1.msra.mxu0 0.0
    %1301 = vmatprep.subr.mxu0 0.0
    %1302 = vmatpush1.msra.mxu0 0.0
    %1303 = vmatprep.subr.mxu0 0.0
    %1304 = vmatpush1.msra.mxu0 0.0
    %1305 = vmatprep.subr.mxu0 0.0
    %1306 = vmatpush1.msra.mxu0 0.0
    %1307 = vmatprep.mubr.f32.mxu0 0.0
    %1308 = vmatmul.mubr.f32.gmra.mrb[0].mxu0 %v1241
    %v1309 = vpop.f32.mrb[0].mxu0
    %v1310 = vadd.f32 0.0, %v1309
    %v1311 = vpop.f32.mrb[0].mxu0
    %v1312 = vadd.f32 0.0, %v1311
    %1313 = vdwg.mxu0
    %v1316 = vrot.slane %v1310, 2
    %v1317 = vrot.slane %v1312, 2
    %v1320 = vadd.f32 %v1006, %v1316
    %v1321 = vadd.f32 %v1007, %v1317
    %v1322 = vxor.u32 %v1320, 2147483648
    %v1323 = vxor.u32 %v1321, 2147483648
    %v1324 = vmul.f32 %v1322, 1.442695
    %v1325 = vpow.pop %v1324
    %v1326 = vmul.f32 %v1323, 1.442695
    %v1327 = vpow.pop %v1326
    %v1328 = vadd.f32 %v1325, 1.0
    %v1329 = vadd.f32 %v1327, 1.0
    %v1330 = vrcp.pop %v1328
    %v1331 = vmul.f32 1.0, %v1330
    %v1332 = vrcp.pop %v1329
    %v1333 = vmul.f32 1.0, %v1332
    %v1334 = vtanh.pop %v1321
    %v1336 = vrot.slane %v1232, 6
    %v1338 = vmul.f32 %v1331, %v1336
    %1340 = vrot.lane.b32.xlu0 %v1334, 64
    %v1341 = vpop.permute.xlu0 %1340
    %v1343 = vmul.f32 %v1331, %v1341
    %1345 = vrot.lane.b32.xlu0 %v1343, 64
    %v1346 = vpop.permute.xlu0 %1345
    %v1348 = vadd.f32 %v1338, %v1346
    %v1349 = vtanh.pop %v1348
    %1351 = vrot.lane.b32.xlu0 %v1349, 64
    %v1352 = vpop.permute.xlu0 %1351
    %v1354 = vmul.f32 %v1333, %v1352
    %v1357 = vrot.slane %v367, 6
    %v1358 = vrot.slane %v369, 6
    %v1361 = vsel %vm414, %v361, %v1357
    %v1362 = vsel %vm415, %v363, %v1358
    %v1364 = vrot.slane %v1354, 6
    %v1365 = vsel %vm424, %v1364, 0
    %1367 = vmatprep.subr.mxu0 %v372
    %1368 = vmatpush1.msra.mxu0 %v371
    %1369 = vmatprep.subr.mxu0 %v374
    %1370 = vmatpush1.msra.mxu0 %v373
    %1371 = vmatprep.subr.mxu0 %v376
    %1372 = vmatpush1.msra.mxu0 %v375
    %1373 = vmatprep.subr.mxu0 %v378
    %1374 = vmatpush1.msra.mxu0 %v377
    %1375 = vmatprep.subr.mxu0 %v380
    %1376 = vmatpush1.msra.mxu0 %v379
    %1377 = vmatprep.subr.mxu0 %v382
    %1378 = vmatpush1.msra.mxu0 %v381
    %1379 = vmatprep.subr.mxu0 %v384
    %1380 = vmatpush1.msra.mxu0 %v383
    %1381 = vmatprep.subr.mxu0 %v386
    %1382 = vmatpush1.msra.mxu0 %v385
    %1383 = vmatprep.subr.mxu0 0.0
    %1384 = vmatpush1.msra.mxu0 0.0
    %1385 = vmatprep.subr.mxu0 0.0
    %1386 = vmatpush1.msra.mxu0 0.0
    %1387 = vmatprep.subr.mxu0 0.0
    %1388 = vmatpush1.msra.mxu0 0.0
    %1389 = vmatprep.subr.mxu0 0.0
    %1390 = vmatpush1.msra.mxu0 0.0
    %1391 = vmatprep.subr.mxu0 0.0
    %1392 = vmatpush1.msra.mxu0 0.0
    %1393 = vmatprep.subr.mxu0 0.0
    %1394 = vmatpush1.msra.mxu0 0.0
    %1395 = vmatprep.subr.mxu0 0.0
    %1396 = vmatpush1.msra.mxu0 0.0
    %1397 = vmatprep.subr.mxu0 0.0
    %1398 = vmatpush1.msra.mxu0 0.0
    %1399 = vmatprep.subr.mxu0 0.0
    %1400 = vmatpush1.msra.mxu0 0.0
    %1401 = vmatprep.subr.mxu0 0.0
    %1402 = vmatpush1.msra.mxu0 0.0
    %1403 = vmatprep.subr.mxu0 0.0
    %1404 = vmatpush1.msra.mxu0 0.0
    %1405 = vmatprep.subr.mxu0 0.0
    %1406 = vmatpush1.msra.mxu0 0.0
    %1407 = vmatprep.subr.mxu0 0.0
    %1408 = vmatpush1.msra.mxu0 0.0
    %1409 = vmatprep.subr.mxu0 0.0
    %1410 = vmatpush1.msra.mxu0 0.0
    %1411 = vmatprep.subr.mxu0 0.0
    %1412 = vmatpush1.msra.mxu0 0.0
    %1413 = vmatprep.subr.mxu0 0.0
    %1414 = vmatpush1.msra.mxu0 0.0
    %1415 = vmatprep.subr.mxu0 0.0
    %1416 = vmatpush1.msra.mxu0 0.0
    %1417 = vmatprep.subr.mxu0 0.0
    %1418 = vmatpush1.msra.mxu0 0.0
    %1419 = vmatprep.subr.mxu0 0.0
    %1420 = vmatpush1.msra.mxu0 0.0
    %1421 = vmatprep.subr.mxu0 0.0
    %1422 = vmatpush1.msra.mxu0 0.0
    %1423 = vmatprep.subr.mxu0 0.0
    %1424 = vmatpush1.msra.mxu0 0.0
    %1425 = vmatprep.subr.mxu0 0.0
    %1426 = vmatpush1.msra.mxu0 0.0
    %1427 = vmatprep.subr.mxu0 0.0
    %1428 = vmatpush1.msra.mxu0 0.0
    %1429 = vmatprep.subr.mxu0 0.0
    %1430 = vmatpush1.msra.mxu0 0.0
    %1431 = vmatprep.mubr.f32.mxu0 0.0
    %1432 = vmatmul.mubr.f32.gmra.mrb[0].mxu0 %v1365
    %v1433 = vpop.f32.mrb[0].mxu0
    %v1434 = vadd.f32 0.0, %v1433
    %v1435 = vpop.f32.mrb[0].mxu0
    %v1436 = vadd.f32 0.0, %v1435
    %1437 = vdwg.mxu0
    %v1438 = vadd.f32 %v1361, %v1434
    %v1439 = vadd.f32 %v1362, %v1436
    %v1440 = vxor.u32 %v1438, 2147483648
    %v1441 = vxor.u32 %v1439, 2147483648
    %v1442 = vmul.f32 %v1440, 1.442695
    %v1443 = vpow.pop %v1442
    %v1444 = vmul.f32 %v1441, 1.442695
    %v1445 = vpow.pop %v1444
    %v1446 = vadd.f32 %v1443, 1.0
    %v1447 = vadd.f32 %v1445, 1.0
    %v1448 = vrcp.pop %v1446
    %v1449 = vmul.f32 1.0, %v1448
    %v1450 = vrcp.pop %v1447
    %v1451 = vmul.f32 1.0, %v1450
    %v1452 = vtanh.pop %v1439
    %v1454 = vrot.slane %v1348, 6
    %v1456 = vmul.f32 %v1449, %v1454
    %1458 = vrot.lane.b32.xlu0 %v1452, 64
    %v1459 = vpop.permute.xlu0 %1458
    %v1461 = vmul.f32 %v1449, %v1459
    %1463 = vrot.lane.b32.xlu0 %v1461, 64
    %v1464 = vpop.permute.xlu0 %1463
    %v1466 = vadd.f32 %v1456, %v1464
    %v1467 = vtanh.pop %v1466
    %1469 = vrot.lane.b32.xlu0 %v1467, 64
    %v1470 = vpop.permute.xlu0 %1469
    %v1472 = vmul.f32 %v1451, %v1470
    %v1473 = vrot.slane %v367, 2
    %v1474 = vrot.slane %v369, 2
    %v1477 = vsel %vm414, %v361, %v1473
    %v1478 = vsel %vm415, %v363, %v1474
    %v1480 = vsel %vm424, %v1472, 0
    %1482 = vmatprep.subr.mxu0 %v372
    %1483 = vmatpush1.msra.mxu0 %v371
    %1484 = vmatprep.subr.mxu0 %v374
    %1485 = vmatpush1.msra.mxu0 %v373
    %1486 = vmatprep.subr.mxu0 %v376
    %1487 = vmatpush1.msra.mxu0 %v375
    %1488 = vmatprep.subr.mxu0 %v378
    %1489 = vmatpush1.msra.mxu0 %v377
    %1490 = vmatprep.subr.mxu0 %v380
    %1491 = vmatpush1.msra.mxu0 %v379
    %1492 = vmatprep.subr.mxu0 %v382
    %1493 = vmatpush1.msra.mxu0 %v381
    %1494 = vmatprep.subr.mxu0 %v384
    %1495 = vmatpush1.msra.mxu0 %v383
    %1496 = vmatprep.subr.mxu0 %v386
    %1497 = vmatpush1.msra.mxu0 %v385
    %1498 = vmatprep.subr.mxu0 0.0
    %1499 = vmatpush1.msra.mxu0 0.0
    %1500 = vmatprep.subr.mxu0 0.0
    %1501 = vmatpush1.msra.mxu0 0.0
    %1502 = vmatprep.subr.mxu0 0.0
    %1503 = vmatpush1.msra.mxu0 0.0
    %1504 = vmatprep.subr.mxu0 0.0
    %1505 = vmatpush1.msra.mxu0 0.0
    %1506 = vmatprep.subr.mxu0 0.0
    %1507 = vmatpush1.msra.mxu0 0.0
    %1508 = vmatprep.subr.mxu0 0.0
    %1509 = vmatpush1.msra.mxu0 0.0
    %1510 = vmatprep.subr.mxu0 0.0
    %1511 = vmatpush1.msra.mxu0 0.0
    %1512 = vmatprep.subr.mxu0 0.0
    %1513 = vmatpush1.msra.mxu0 0.0
    %1514 = vmatprep.subr.mxu0 0.0
    %1515 = vmatpush1.msra.mxu0 0.0
    %1516 = vmatprep.subr.mxu0 0.0
    %1517 = vmatpush1.msra.mxu0 0.0
    %1518 = vmatprep.subr.mxu0 0.0
    %1519 = vmatpush1.msra.mxu0 0.0
    %1520 = vmatprep.subr.mxu0 0.0
    %1521 = vmatpush1.msra.mxu0 0.0
    %1522 = vmatprep.subr.mxu0 0.0
    %1523 = vmatpush1.msra.mxu0 0.0
    %1524 = vmatprep.subr.mxu0 0.0
    %1525 = vmatpush1.msra.mxu0 0.0
    %1526 = vmatprep.subr.mxu0 0.0
    %1527 = vmatpush1.msra.mxu0 0.0
    %1528 = vmatprep.subr.mxu0 0.0
    %1529 = vmatpush1.msra.mxu0 0.0
    %1530 = vmatprep.subr.mxu0 0.0
    %1531 = vmatpush1.msra.mxu0 0.0
    %1532 = vmatprep.subr.mxu0 0.0
    %1533 = vmatpush1.msra.mxu0 0.0
    %1534 = vmatprep.subr.mxu0 0.0
    %1535 = vmatpush1.msra.mxu0 0.0
    %1536 = vmatprep.subr.mxu0 0.0
    %1537 = vmatpush1.msra.mxu0 0.0
    %1538 = vmatprep.subr.mxu0 0.0
    %1539 = vmatpush1.msra.mxu0 0.0
    %1540 = vmatprep.subr.mxu0 0.0
    %1541 = vmatpush1.msra.mxu0 0.0
    %1542 = vmatprep.subr.mxu0 0.0
    %1543 = vmatpush1.msra.mxu0 0.0
    %1544 = vmatprep.subr.mxu0 0.0
    %1545 = vmatpush1.msra.mxu0 0.0
    %1546 = vmatprep.mubr.f32.mxu0 0.0
    %1547 = vmatmul.mubr.f32.gmra.mrb[0].mxu0 %v1480
    %v1548 = vpop.f32.mrb[0].mxu0
    %v1549 = vadd.f32 0.0, %v1548
    %v1550 = vpop.f32.mrb[0].mxu0
    %v1551 = vadd.f32 0.0, %v1550
    %1552 = vdwg.mxu0
    %v1555 = vrot.slane %v1549, 6
    %v1556 = vrot.slane %v1551, 6
    %v1559 = vadd.f32 %v1477, %v1555
    %v1560 = vadd.f32 %v1478, %v1556
    %v1561 = vxor.u32 %v1559, 2147483648
    %v1562 = vxor.u32 %v1560, 2147483648
    %v1563 = vmul.f32 %v1561, 1.442695
    %v1564 = vpow.pop %v1563
    %v1565 = vmul.f32 %v1562, 1.442695
    %v1566 = vpow.pop %v1565
    %v1567 = vadd.f32 %v1564, 1.0
    %v1568 = vadd.f32 %v1566, 1.0
    %v1569 = vrcp.pop %v1567
    %v1570 = vmul.f32 1.0, %v1569
    %v1571 = vrcp.pop %v1568
    %v1572 = vmul.f32 1.0, %v1571
    %v1573 = vtanh.pop %v1560
    %v1575 = vrot.slane %v1466, 6
    %v1577 = vmul.f32 %v1570, %v1575
    %1579 = vrot.lane.b32.xlu0 %v1573, 64
    %v1580 = vpop.permute.xlu0 %1579
    %v1582 = vmul.f32 %v1570, %v1580
    %1584 = vrot.lane.b32.xlu0 %v1582, 64
    %v1585 = vpop.permute.xlu0 %1584
    %v1587 = vadd.f32 %v1577, %v1585
    %v1588 = vtanh.pop %v1587
    %1590 = vrot.lane.b32.xlu0 %v1588, 64
    %v1591 = vpop.permute.xlu0 %1590
    %v1593 = vmul.f32 %v1572, %v1591
    %v1595 = vrot.slane %v1593, 2
    %v1596 = vsel %vm424, %v1595, 0
    %1598 = vmatprep.subr.mxu0 %v372
    %1599 = vmatpush1.msra.mxu0 %v371
    %1600 = vmatprep.subr.mxu0 %v374
    %1601 = vmatpush1.msra.mxu0 %v373
    %1602 = vmatprep.subr.mxu0 %v376
    %1603 = vmatpush1.msra.mxu0 %v375
    %1604 = vmatprep.subr.mxu0 %v378
    %1605 = vmatpush1.msra.mxu0 %v377
    %1606 = vmatprep.subr.mxu0 %v380
    %1607 = vmatpush1.msra.mxu0 %v379
    %1608 = vmatprep.subr.mxu0 %v382
    %1609 = vmatpush1.msra.mxu0 %v381
    %1610 = vmatprep.subr.mxu0 %v384
    %1611 = vmatpush1.msra.mxu0 %v383
    %1612 = vmatprep.subr.mxu0 %v386
    %1613 = vmatpush1.msra.mxu0 %v385
    %1614 = vmatprep.subr.mxu0 0.0
    %1615 = vmatpush1.msra.mxu0 0.0
    %1616 = vmatprep.subr.mxu0 0.0
    %1617 = vmatpush1.msra.mxu0 0.0
    %1618 = vmatprep.subr.mxu0 0.0
    %1619 = vmatpush1.msra.mxu0 0.0
    %1620 = vmatprep.subr.mxu0 0.0
    %1621 = vmatpush1.msra.mxu0 0.0
    %1622 = vmatprep.subr.mxu0 0.0
    %1623 = vmatpush1.msra.mxu0 0.0
    %1624 = vmatprep.subr.mxu0 0.0
    %1625 = vmatpush1.msra.mxu0 0.0
    %1626 = vmatprep.subr.mxu0 0.0
    %1627 = vmatpush1.msra.mxu0 0.0
    %1628 = vmatprep.subr.mxu0 0.0
    %1629 = vmatpush1.msra.mxu0 0.0
    %1630 = vmatprep.subr.mxu0 0.0
    %1631 = vmatpush1.msra.mxu0 0.0
    %1632 = vmatprep.subr.mxu0 0.0
    %1633 = vmatpush1.msra.mxu0 0.0
    %1634 = vmatprep.subr.mxu0 0.0
    %1635 = vmatpush1.msra.mxu0 0.0
    %1636 = vmatprep.subr.mxu0 0.0
    %1637 = vmatpush1.msra.mxu0 0.0
    %1638 = vmatprep.subr.mxu0 0.0
    %1639 = vmatpush1.msra.mxu0 0.0
    %1640 = vmatprep.subr.mxu0 0.0
    %1641 = vmatpush1.msra.mxu0 0.0
    %1642 = vmatprep.subr.mxu0 0.0
    %1643 = vmatpush1.msra.mxu0 0.0
    %1644 = vmatprep.subr.mxu0 0.0
    %1645 = vmatpush1.msra.mxu0 0.0
    %1646 = vmatprep.subr.mxu0 0.0
    %1647 = vmatpush1.msra.mxu0 0.0
    %1648 = vmatprep.subr.mxu0 0.0
    %1649 = vmatpush1.msra.mxu0 0.0
    %1650 = vmatprep.subr.mxu0 0.0
    %1651 = vmatpush1.msra.mxu0 0.0
    %1652 = vmatprep.subr.mxu0 0.0
    %1653 = vmatpush1.msra.mxu0 0.0
    %1654 = vmatprep.subr.mxu0 0.0
    %1655 = vmatpush1.msra.mxu0 0.0
    %1656 = vmatprep.subr.mxu0 0.0
    %1657 = vmatpush1.msra.mxu0 0.0
    %1658 = vmatprep.subr.mxu0 0.0
    %1659 = vmatpush1.msra.mxu0 0.0
    %1660 = vmatprep.subr.mxu0 0.0
    %1661 = vmatpush1.msra.mxu0 0.0
    %1662 = vmatprep.mubr.f32.mxu0 0.0
    %1663 = vmatmul.mubr.f32.gmra.mrb[0].mxu0 %v1596
    %v1664 = vpop.f32.mrb[0].mxu0
    %v1665 = vadd.f32 0.0, %v1664
    %v1666 = vpop.f32.mrb[0].mxu0
    %v1667 = vadd.f32 0.0, %v1666
    %1668 = vdwg.mxu0
    %v1671 = vrot.slane %v1665, 4
    %v1672 = vrot.slane %v1667, 4
    %v1675 = vadd.f32 %v1361, %v1671
    %v1676 = vadd.f32 %v1362, %v1672
    %v1677 = vxor.u32 %v1675, 2147483648
    %v1678 = vxor.u32 %v1676, 2147483648
    %v1679 = vmul.f32 %v1677, 1.442695
    %v1680 = vpow.pop %v1679
    %v1681 = vmul.f32 %v1678, 1.442695
    %v1682 = vpow.pop %v1681
    %v1683 = vadd.f32 %v1680, 1.0
    %v1684 = vadd.f32 %v1682, 1.0
    %v1685 = vrcp.pop %v1683
    %v1686 = vmul.f32 1.0, %v1685
    %v1687 = vrcp.pop %v1684
    %v1688 = vmul.f32 1.0, %v1687
    %v1689 = vtanh.pop %v1676
    %v1691 = vrot.slane %v1587, 6
    %v1693 = vmul.f32 %v1686, %v1691
    %1695 = vrot.lane.b32.xlu0 %v1689, 64
    %v1696 = vpop.permute.xlu0 %1695
    %v1698 = vmul.f32 %v1686, %v1696
    %1700 = vrot.lane.b32.xlu0 %v1698, 64
    %v1701 = vpop.permute.xlu0 %1700
    %v1703 = vadd.f32 %v1693, %v1701
    %v1704 = vtanh.pop %v1703
    %1706 = vrot.lane.b32.xlu0 %v1704, 64
    %v1707 = vpop.permute.xlu0 %1706
    %v1709 = vmul.f32 %v1688, %v1707
    %v1711 = vrot.slane %v1709, 4
    %v1712 = vsel %vm424, %v1711, 0
    %1714 = vmatprep.subr.mxu0 %v372
    %1715 = vmatpush1.msra.mxu0 %v371
    %1716 = vmatprep.subr.mxu0 %v374
    %1717 = vmatpush1.msra.mxu0 %v373
    %1718 = vmatprep.subr.mxu0 %v376
    %1719 = vmatpush1.msra.mxu0 %v375
    %1720 = vmatprep.subr.mxu0 %v378
    %1721 = vmatpush1.msra.mxu0 %v377
    %1722 = vmatprep.subr.mxu0 %v380
    %1723 = vmatpush1.msra.mxu0 %v379
    %1724 = vmatprep.subr.mxu0 %v382
    %1725 = vmatpush1.msra.mxu0 %v381
    %1726 = vmatprep.subr.mxu0 %v384
    %1727 = vmatpush1.msra.mxu0 %v383
    %1728 = vmatprep.subr.mxu0 %v386
    %1729 = vmatpush1.msra.mxu0 %v385
    %1730 = vmatprep.subr.mxu0 0.0
    %1731 = vmatpush1.msra.mxu0 0.0
    %1732 = vmatprep.subr.mxu0 0.0
    %1733 = vmatpush1.msra.mxu0 0.0
    %1734 = vmatprep.subr.mxu0 0.0
    %1735 = vmatpush1.msra.mxu0 0.0
    %1736 = vmatprep.subr.mxu0 0.0
    %1737 = vmatpush1.msra.mxu0 0.0
    %1738 = vmatprep.subr.mxu0 0.0
    %1739 = vmatpush1.msra.mxu0 0.0
    %1740 = vmatprep.subr.mxu0 0.0
    %1741 = vmatpush1.msra.mxu0 0.0
    %1742 = vmatprep.subr.mxu0 0.0
    %1743 = vmatpush1.msra.mxu0 0.0
    %1744 = vmatprep.subr.mxu0 0.0
    %1745 = vmatpush1.msra.mxu0 0.0
    %1746 = vmatprep.subr.mxu0 0.0
    %1747 = vmatpush1.msra.mxu0 0.0
    %1748 = vmatprep.subr.mxu0 0.0
    %1749 = vmatpush1.msra.mxu0 0.0
    %1750 = vmatprep.subr.mxu0 0.0
    %1751 = vmatpush1.msra.mxu0 0.0
    %1752 = vmatprep.subr.mxu0 0.0
    %1753 = vmatpush1.msra.mxu0 0.0
    %1754 = vmatprep.subr.mxu0 0.0
    %1755 = vmatpush1.msra.mxu0 0.0
    %1756 = vmatprep.subr.mxu0 0.0
    %1757 = vmatpush1.msra.mxu0 0.0
    %1758 = vmatprep.subr.mxu0 0.0
    %1759 = vmatpush1.msra.mxu0 0.0
    %1760 = vmatprep.subr.mxu0 0.0
    %1761 = vmatpush1.msra.mxu0 0.0
    %1762 = vmatprep.subr.mxu0 0.0
    %1763 = vmatpush1.msra.mxu0 0.0
    %1764 = vmatprep.subr.mxu0 0.0
    %1765 = vmatpush1.msra.mxu0 0.0
    %1766 = vmatprep.subr.mxu0 0.0
    %1767 = vmatpush1.msra.mxu0 0.0
    %1768 = vmatprep.subr.mxu0 0.0
    %1769 = vmatpush1.msra.mxu0 0.0
    %1770 = vmatprep.subr.mxu0 0.0
    %1771 = vmatpush1.msra.mxu0 0.0
    %1772 = vmatprep.subr.mxu0 0.0
    %1773 = vmatpush1.msra.mxu0 0.0
    %1774 = vmatprep.subr.mxu0 0.0
    %1775 = vmatpush1.msra.mxu0 0.0
    %1776 = vmatprep.subr.mxu0 0.0
    %1777 = vmatpush1.msra.mxu0 0.0
    %1778 = vmatprep.mubr.f32.mxu0 0.0
    %1779 = vmatmul.mubr.f32.gmra.mrb[0].mxu0 %v1712
    %v1780 = vpop.f32.mrb[0].mxu0
    %v1781 = vadd.f32 0.0, %v1780
    %v1782 = vpop.f32.mrb[0].mxu0
    %v1783 = vadd.f32 0.0, %v1782
    %1784 = vdwg.mxu0
    %v1787 = vrot.slane %v1781, 2
    %v1788 = vrot.slane %v1783, 2
    %v1791 = vadd.f32 %v1477, %v1787
    %v1792 = vadd.f32 %v1478, %v1788
    %v1793 = vxor.u32 %v1791, 2147483648
    %v1794 = vxor.u32 %v1792, 2147483648
    %v1795 = vmul.f32 %v1793, 1.442695
    %v1796 = vpow.pop %v1795
    %v1797 = vmul.f32 %v1794, 1.442695
    %v1798 = vpow.pop %v1797
    %v1799 = vadd.f32 %v1796, 1.0
    %v1800 = vadd.f32 %v1798, 1.0
    %v1801 = vrcp.pop %v1799
    %v1802 = vmul.f32 1.0, %v1801
    %v1803 = vrcp.pop %v1800
    %v1804 = vmul.f32 1.0, %v1803
    %v1805 = vtanh.pop %v1792
    %v1807 = vrot.slane %v1703, 6
    %v1809 = vmul.f32 %v1802, %v1807
    %1811 = vrot.lane.b32.xlu0 %v1805, 64
    %v1812 = vpop.permute.xlu0 %1811
    %v1814 = vmul.f32 %v1802, %v1812
    %1816 = vrot.lane.b32.xlu0 %v1814, 64
    %v1817 = vpop.permute.xlu0 %1816
    %v1819 = vadd.f32 %v1809, %v1817
    %v1820 = vtanh.pop %v1819
    %1822 = vrot.lane.b32.xlu0 %v1820, 64
    %v1823 = vpop.permute.xlu0 %1822
    %v1825 = vmul.f32 %v1804, %v1823
    %v1828 = vrot.slane %v361, 6
    %v1829 = vrot.slane %v363, 6
    %v1832 = vsel %vm414, %v367, %v1828
    %v1833 = vsel %vm415, %v369, %v1829
    %v1835 = vrot.slane %v1825, 6
    %v1836 = vsel %vm424, %v1835, 0
    %1838 = vmatprep.subr.mxu0 %v372
    %1839 = vmatpush1.msra.mxu0 %v371
    %1840 = vmatprep.subr.mxu0 %v374
    %1841 = vmatpush1.msra.mxu0 %v373
    %1842 = vmatprep.subr.mxu0 %v376
    %1843 = vmatpush1.msra.mxu0 %v375
    %1844 = vmatprep.subr.mxu0 %v378
    %1845 = vmatpush1.msra.mxu0 %v377
    %1846 = vmatprep.subr.mxu0 %v380
    %1847 = vmatpush1.msra.mxu0 %v379
    %1848 = vmatprep.subr.mxu0 %v382
    %1849 = vmatpush1.msra.mxu0 %v381
    %1850 = vmatprep.subr.mxu0 %v384
    %1851 = vmatpush1.msra.mxu0 %v383
    %1852 = vmatprep.subr.mxu0 %v386
    %1853 = vmatpush1.msra.mxu0 %v385
    %1854 = vmatprep.subr.mxu0 0.0
    %1855 = vmatpush1.msra.mxu0 0.0
    %1856 = vmatprep.subr.mxu0 0.0
    %1857 = vmatpush1.msra.mxu0 0.0
    %1858 = vmatprep.subr.mxu0 0.0
    %1859 = vmatpush1.msra.mxu0 0.0
    %1860 = vmatprep.subr.mxu0 0.0
    %1861 = vmatpush1.msra.mxu0 0.0
    %1862 = vmatprep.subr.mxu0 0.0
    %1863 = vmatpush1.msra.mxu0 0.0
    %1864 = vmatprep.subr.mxu0 0.0
    %1865 = vmatpush1.msra.mxu0 0.0
    %1866 = vmatprep.subr.mxu0 0.0
    %1867 = vmatpush1.msra.mxu0 0.0
    %1868 = vmatprep.subr.mxu0 0.0
    %1869 = vmatpush1.msra.mxu0 0.0
    %1870 = vmatprep.subr.mxu0 0.0
    %1871 = vmatpush1.msra.mxu0 0.0
    %1872 = vmatprep.subr.mxu0 0.0
    %1873 = vmatpush1.msra.mxu0 0.0
    %1874 = vmatprep.subr.mxu0 0.0
    %1875 = vmatpush1.msra.mxu0 0.0
    %1876 = vmatprep.subr.mxu0 0.0
    %1877 = vmatpush1.msra.mxu0 0.0
    %1878 = vmatprep.subr.mxu0 0.0
    %1879 = vmatpush1.msra.mxu0 0.0
    %1880 = vmatprep.subr.mxu0 0.0
    %1881 = vmatpush1.msra.mxu0 0.0
    %1882 = vmatprep.subr.mxu0 0.0
    %1883 = vmatpush1.msra.mxu0 0.0
    %1884 = vmatprep.subr.mxu0 0.0
    %1885 = vmatpush1.msra.mxu0 0.0
    %1886 = vmatprep.subr.mxu0 0.0
    %1887 = vmatpush1.msra.mxu0 0.0
    %1888 = vmatprep.subr.mxu0 0.0
    %1889 = vmatpush1.msra.mxu0 0.0
    %1890 = vmatprep.subr.mxu0 0.0
    %1891 = vmatpush1.msra.mxu0 0.0
    %1892 = vmatprep.subr.mxu0 0.0
    %1893 = vmatpush1.msra.mxu0 0.0
    %1894 = vmatprep.subr.mxu0 0.0
    %1895 = vmatpush1.msra.mxu0 0.0
    %1896 = vmatprep.subr.mxu0 0.0
    %1897 = vmatpush1.msra.mxu0 0.0
    %1898 = vmatprep.subr.mxu0 0.0
    %1899 = vmatpush1.msra.mxu0 0.0
    %1900 = vmatprep.subr.mxu0 0.0
    %1901 = vmatpush1.msra.mxu0 0.0
    %1902 = vmatprep.mubr.f32.mxu0 0.0
    %1903 = vmatmul.mubr.f32.gmra.mrb[0].mxu0 %v1836
    %v1904 = vpop.f32.mrb[0].mxu0
    %v1905 = vadd.f32 0.0, %v1904
    %v1906 = vpop.f32.mrb[0].mxu0
    %v1907 = vadd.f32 0.0, %v1906
    %1908 = vdwg.mxu0
    %v1909 = vadd.f32 %v1832, %v1905
    %v1910 = vadd.f32 %v1833, %v1907
    %v1911 = vxor.u32 %v1909, 2147483648
    %v1912 = vxor.u32 %v1910, 2147483648
    %v1913 = vmul.f32 %v1911, 1.442695
    %v1914 = vpow.pop %v1913
    %v1915 = vmul.f32 %v1912, 1.442695
    %v1916 = vpow.pop %v1915
    %v1917 = vadd.f32 %v1914, 1.0
    %v1918 = vadd.f32 %v1916, 1.0
    %v1919 = vrcp.pop %v1917
    %v1920 = vmul.f32 1.0, %v1919
    %v1921 = vrcp.pop %v1918
    %v1922 = vmul.f32 1.0, %v1921
    %v1923 = vtanh.pop %v1910
    %v1925 = vrot.slane %v1819, 6
    %v1927 = vmul.f32 %v1920, %v1925
    %1929 = vrot.lane.b32.xlu0 %v1923, 64
    %v1930 = vpop.permute.xlu0 %1929
    %v1932 = vmul.f32 %v1920, %v1930
    %1934 = vrot.lane.b32.xlu0 %v1932, 64
    %v1935 = vpop.permute.xlu0 %1934
    %v1937 = vadd.f32 %v1927, %v1935
    %v1938 = vtanh.pop %v1937
    %1940 = vrot.lane.b32.xlu0 %v1938, 64
    %v1941 = vpop.permute.xlu0 %1940
    %v1943 = vmul.f32 %v1922, %v1941
    %v1944 = vrot.slane %v361, 2
    %v1945 = vrot.slane %v363, 2
    %v1948 = vsel %vm414, %v367, %v1944
    %v1949 = vsel %vm415, %v369, %v1945
    %v1951 = vsel %vm424, %v1943, 0
    %1953 = vmatprep.subr.mxu0 %v372
    %1954 = vmatpush1.msra.mxu0 %v371
    %1955 = vmatprep.subr.mxu0 %v374
    %1956 = vmatpush1.msra.mxu0 %v373
    %1957 = vmatprep.subr.mxu0 %v376
    %1958 = vmatpush1.msra.mxu0 %v375
    %1959 = vmatprep.subr.mxu0 %v378
    %1960 = vmatpush1.msra.mxu0 %v377
    %1961 = vmatprep.subr.mxu0 %v380
    %1962 = vmatpush1.msra.mxu0 %v379
    %1963 = vmatprep.subr.mxu0 %v382
    %1964 = vmatpush1.msra.mxu0 %v381
    %1965 = vmatprep.subr.mxu0 %v384
    %1966 = vmatpush1.msra.mxu0 %v383
    %1967 = vmatprep.subr.mxu0 %v386
    %1968 = vmatpush1.msra.mxu0 %v385
    %1969 = vmatprep.subr.mxu0 0.0
    %1970 = vmatpush1.msra.mxu0 0.0
    %1971 = vmatprep.subr.mxu0 0.0
    %1972 = vmatpush1.msra.mxu0 0.0
    %1973 = vmatprep.subr.mxu0 0.0
    %1974 = vmatpush1.msra.mxu0 0.0
    %1975 = vmatprep.subr.mxu0 0.0
    %1976 = vmatpush1.msra.mxu0 0.0
    %1977 = vmatprep.subr.mxu0 0.0
    %1978 = vmatpush1.msra.mxu0 0.0
    %1979 = vmatprep.subr.mxu0 0.0
    %1980 = vmatpush1.msra.mxu0 0.0
    %1981 = vmatprep.subr.mxu0 0.0
    %1982 = vmatpush1.msra.mxu0 0.0
    %1983 = vmatprep.subr.mxu0 0.0
    %1984 = vmatpush1.msra.mxu0 0.0
    %1985 = vmatprep.subr.mxu0 0.0
    %1986 = vmatpush1.msra.mxu0 0.0
    %1987 = vmatprep.subr.mxu0 0.0
    %1988 = vmatpush1.msra.mxu0 0.0
    %1989 = vmatprep.subr.mxu0 0.0
    %1990 = vmatpush1.msra.mxu0 0.0
    %1991 = vmatprep.subr.mxu0 0.0
    %1992 = vmatpush1.msra.mxu0 0.0
    %1993 = vmatprep.subr.mxu0 0.0
    %1994 = vmatpush1.msra.mxu0 0.0
    %1995 = vmatprep.subr.mxu0 0.0
    %1996 = vmatpush1.msra.mxu0 0.0
    %1997 = vmatprep.subr.mxu0 0.0
    %1998 = vmatpush1.msra.mxu0 0.0
    %1999 = vmatprep.subr.mxu0 0.0
    %2000 = vmatpush1.msra.mxu0 0.0
    %2001 = vmatprep.subr.mxu0 0.0
    %2002 = vmatpush1.msra.mxu0 0.0
    %2003 = vmatprep.subr.mxu0 0.0
    %2004 = vmatpush1.msra.mxu0 0.0
    %2005 = vmatprep.subr.mxu0 0.0
    %2006 = vmatpush1.msra.mxu0 0.0
    %2007 = vmatprep.subr.mxu0 0.0
    %2008 = vmatpush1.msra.mxu0 0.0
    %2009 = vmatprep.subr.mxu0 0.0
    %2010 = vmatpush1.msra.mxu0 0.0
    %2011 = vmatprep.subr.mxu0 0.0
    %2012 = vmatpush1.msra.mxu0 0.0
    %2013 = vmatprep.subr.mxu0 0.0
    %2014 = vmatpush1.msra.mxu0 0.0
    %2015 = vmatprep.subr.mxu0 0.0
    %2016 = vmatpush1.msra.mxu0 0.0
    %2017 = vmatprep.mubr.f32.mxu0 0.0
    %2018 = vmatmul.mubr.f32.gmra.mrb[0].mxu0 %v1951
    %v2019 = vpop.f32.mrb[0].mxu0
    %v2020 = vadd.f32 0.0, %v2019
    %v2021 = vpop.f32.mrb[0].mxu0
    %v2022 = vadd.f32 0.0, %v2021
    %2023 = vdwg.mxu0
    %v2026 = vrot.slane %v2020, 6
    %v2027 = vrot.slane %v2022, 6
    %v2030 = vadd.f32 %v1948, %v2026
    %v2031 = vadd.f32 %v1949, %v2027
    %v2032 = vxor.u32 %v2030, 2147483648
    %v2033 = vxor.u32 %v2031, 2147483648
    %v2034 = vmul.f32 %v2032, 1.442695
    %v2035 = vpow.pop %v2034
    %v2036 = vmul.f32 %v2033, 1.442695
    %v2037 = vpow.pop %v2036
    %v2038 = vadd.f32 %v2035, 1.0
    %v2039 = vadd.f32 %v2037, 1.0
    %v2040 = vrcp.pop %v2038
    %v2041 = vmul.f32 1.0, %v2040
    %v2042 = vrcp.pop %v2039
    %v2043 = vmul.f32 1.0, %v2042
    %v2044 = vtanh.pop %v2031
    %v2046 = vrot.slane %v1937, 6
    %v2048 = vmul.f32 %v2041, %v2046
    %2050 = vrot.lane.b32.xlu0 %v2044, 64
    %v2051 = vpop.permute.xlu0 %2050
    %v2053 = vmul.f32 %v2041, %v2051
    %2055 = vrot.lane.b32.xlu0 %v2053, 64
    %v2056 = vpop.permute.xlu0 %2055
    %v2058 = vadd.f32 %v2048, %v2056
    %v2059 = vtanh.pop %v2058
    %2061 = vrot.lane.b32.xlu0 %v2059, 64
    %v2062 = vpop.permute.xlu0 %2061
    %v2064 = vmul.f32 %v2043, %v2062
    %v2066 = vrot.slane %v2064, 2
    %v2067 = vsel %vm424, %v2066, 0
    %2069 = vmatprep.subr.mxu0 %v372
    %2070 = vmatpush1.msra.mxu0 %v371
    %2071 = vmatprep.subr.mxu0 %v374
    %2072 = vmatpush1.msra.mxu0 %v373
    %2073 = vmatprep.subr.mxu0 %v376
    %2074 = vmatpush1.msra.mxu0 %v375
    %2075 = vmatprep.subr.mxu0 %v378
    %2076 = vmatpush1.msra.mxu0 %v377
    %2077 = vmatprep.subr.mxu0 %v380
    %2078 = vmatpush1.msra.mxu0 %v379
    %2079 = vmatprep.subr.mxu0 %v382
    %2080 = vmatpush1.msra.mxu0 %v381
    %2081 = vmatprep.subr.mxu0 %v384
    %2082 = vmatpush1.msra.mxu0 %v383
    %2083 = vmatprep.subr.mxu0 %v386
    %2084 = vmatpush1.msra.mxu0 %v385
    %2085 = vmatprep.subr.mxu0 0.0
    %2086 = vmatpush1.msra.mxu0 0.0
    %2087 = vmatprep.subr.mxu0 0.0
    %2088 = vmatpush1.msra.mxu0 0.0
    %2089 = vmatprep.subr.mxu0 0.0
    %2090 = vmatpush1.msra.mxu0 0.0
    %2091 = vmatprep.subr.mxu0 0.0
    %2092 = vmatpush1.msra.mxu0 0.0
    %2093 = vmatprep.subr.mxu0 0.0
    %2094 = vmatpush1.msra.mxu0 0.0
    %2095 = vmatprep.subr.mxu0 0.0
    %2096 = vmatpush1.msra.mxu0 0.0
    %2097 = vmatprep.subr.mxu0 0.0
    %2098 = vmatpush1.msra.mxu0 0.0
    %2099 = vmatprep.subr.mxu0 0.0
    %2100 = vmatpush1.msra.mxu0 0.0
    %2101 = vmatprep.subr.mxu0 0.0
    %2102 = vmatpush1.msra.mxu0 0.0
    %2103 = vmatprep.subr.mxu0 0.0
    %2104 = vmatpush1.msra.mxu0 0.0
    %2105 = vmatprep.subr.mxu0 0.0
    %2106 = vmatpush1.msra.mxu0 0.0
    %2107 = vmatprep.subr.mxu0 0.0
    %2108 = vmatpush1.msra.mxu0 0.0
    %2109 = vmatprep.subr.mxu0 0.0
    %2110 = vmatpush1.msra.mxu0 0.0
    %2111 = vmatprep.subr.mxu0 0.0
    %2112 = vmatpush1.msra.mxu0 0.0
    %2113 = vmatprep.subr.mxu0 0.0
    %2114 = vmatpush1.msra.mxu0 0.0
    %2115 = vmatprep.subr.mxu0 0.0
    %2116 = vmatpush1.msra.mxu0 0.0
    %2117 = vmatprep.subr.mxu0 0.0
    %2118 = vmatpush1.msra.mxu0 0.0
    %2119 = vmatprep.subr.mxu0 0.0
    %2120 = vmatpush1.msra.mxu0 0.0
    %2121 = vmatprep.subr.mxu0 0.0
    %2122 = vmatpush1.msra.mxu0 0.0
    %2123 = vmatprep.subr.mxu0 0.0
    %2124 = vmatpush1.msra.mxu0 0.0
    %2125 = vmatprep.subr.mxu0 0.0
    %2126 = vmatpush1.msra.mxu0 0.0
    %2127 = vmatprep.subr.mxu0 0.0
    %2128 = vmatpush1.msra.mxu0 0.0
    %2129 = vmatprep.subr.mxu0 0.0
    %2130 = vmatpush1.msra.mxu0 0.0
    %2131 = vmatprep.subr.mxu0 0.0
    %2132 = vmatpush1.msra.mxu0 0.0
    %2133 = vmatprep.mubr.f32.mxu0 0.0
    %2134 = vmatmul.mubr.f32.gmra.mrb[0].mxu0 %v2067
    %v2135 = vpop.f32.mrb[0].mxu0
    %v2136 = vadd.f32 0.0, %v2135
    %v2137 = vpop.f32.mrb[0].mxu0
    %v2138 = vadd.f32 0.0, %v2137
    %2139 = vdwg.mxu0
    %v2142 = vrot.slane %v2136, 4
    %v2143 = vrot.slane %v2138, 4
    %v2146 = vadd.f32 %v1832, %v2142
    %v2147 = vadd.f32 %v1833, %v2143
    %v2148 = vxor.u32 %v2146, 2147483648
    %v2149 = vxor.u32 %v2147, 2147483648
    %v2150 = vmul.f32 %v2148, 1.442695
    %v2151 = vpow.pop %v2150
    %v2152 = vmul.f32 %v2149, 1.442695
    %v2153 = vpow.pop %v2152
    %v2154 = vadd.f32 %v2151, 1.0
    %v2155 = vadd.f32 %v2153, 1.0
    %v2156 = vrcp.pop %v2154
    %v2157 = vmul.f32 1.0, %v2156
    %v2158 = vrcp.pop %v2155
    %v2159 = vmul.f32 1.0, %v2158
    %v2160 = vtanh.pop %v2147
    %v2162 = vrot.slane %v2058, 6
    %v2164 = vmul.f32 %v2157, %v2162
    %2166 = vrot.lane.b32.xlu0 %v2160, 64
    %v2167 = vpop.permute.xlu0 %2166
    %v2169 = vmul.f32 %v2157, %v2167
    %2171 = vrot.lane.b32.xlu0 %v2169, 64
    %v2172 = vpop.permute.xlu0 %2171
    %v2174 = vadd.f32 %v2164, %v2172
    %v2175 = vtanh.pop %v2174
    %2177 = vrot.lane.b32.xlu0 %v2175, 64
    %v2178 = vpop.permute.xlu0 %2177
    %v2180 = vmul.f32 %v2159, %v2178
    %v2182 = vrot.slane %v2180, 4
    %v2183 = vsel %vm424, %v2182, 0
    %2185 = vmatprep.subr.mxu0 %v372
    %2186 = vmatpush1.msra.mxu0 %v371
    %2187 = vmatprep.subr.mxu0 %v374
    %2188 = vmatpush1.msra.mxu0 %v373
    %2189 = vmatprep.subr.mxu0 %v376
    %2190 = vmatpush1.msra.mxu0 %v375
    %2191 = vmatprep.subr.mxu0 %v378
    %2192 = vmatpush1.msra.mxu0 %v377
    %2193 = vmatprep.subr.mxu0 %v380
    %2194 = vmatpush1.msra.mxu0 %v379
    %2195 = vmatprep.subr.mxu0 %v382
    %2196 = vmatpush1.msra.mxu0 %v381
    %2197 = vmatprep.subr.mxu0 %v384
    %2198 = vmatpush1.msra.mxu0 %v383
    %2199 = vmatprep.subr.mxu0 %v386
    %2200 = vmatpush1.msra.mxu0 %v385
    %2201 = vmatprep.subr.mxu0 0.0
    %2202 = vmatpush1.msra.mxu0 0.0
    %2203 = vmatprep.subr.mxu0 0.0
    %2204 = vmatpush1.msra.mxu0 0.0
    %2205 = vmatprep.subr.mxu0 0.0
    %2206 = vmatpush1.msra.mxu0 0.0
    %2207 = vmatprep.subr.mxu0 0.0
    %2208 = vmatpush1.msra.mxu0 0.0
    %2209 = vmatprep.subr.mxu0 0.0
    %2210 = vmatpush1.msra.mxu0 0.0
    %2211 = vmatprep.subr.mxu0 0.0
    %2212 = vmatpush1.msra.mxu0 0.0
    %2213 = vmatprep.subr.mxu0 0.0
    %2214 = vmatpush1.msra.mxu0 0.0
    %2215 = vmatprep.subr.mxu0 0.0
    %2216 = vmatpush1.msra.mxu0 0.0
    %2217 = vmatprep.subr.mxu0 0.0
    %2218 = vmatpush1.msra.mxu0 0.0
    %2219 = vmatprep.subr.mxu0 0.0
    %2220 = vmatpush1.msra.mxu0 0.0
    %2221 = vmatprep.subr.mxu0 0.0
    %2222 = vmatpush1.msra.mxu0 0.0
    %2223 = vmatprep.subr.mxu0 0.0
    %2224 = vmatpush1.msra.mxu0 0.0
    %2225 = vmatprep.subr.mxu0 0.0
    %2226 = vmatpush1.msra.mxu0 0.0
    %2227 = vmatprep.subr.mxu0 0.0
    %2228 = vmatpush1.msra.mxu0 0.0
    %2229 = vmatprep.subr.mxu0 0.0
    %2230 = vmatpush1.msra.mxu0 0.0
    %2231 = vmatprep.subr.mxu0 0.0
    %2232 = vmatpush1.msra.mxu0 0.0
    %2233 = vmatprep.subr.mxu0 0.0
    %2234 = vmatpush1.msra.mxu0 0.0
    %2235 = vmatprep.subr.mxu0 0.0
    %2236 = vmatpush1.msra.mxu0 0.0
    %2237 = vmatprep.subr.mxu0 0.0
    %2238 = vmatpush1.msra.mxu0 0.0
    %2239 = vmatprep.subr.mxu0 0.0
    %2240 = vmatpush1.msra.mxu0 0.0
    %2241 = vmatprep.subr.mxu0 0.0
    %2242 = vmatpush1.msra.mxu0 0.0
    %2243 = vmatprep.subr.mxu0 0.0
    %2244 = vmatpush1.msra.mxu0 0.0
    %2245 = vmatprep.subr.mxu0 0.0
    %2246 = vmatpush1.msra.mxu0 0.0
    %2247 = vmatprep.subr.mxu0 0.0
    %2248 = vmatpush1.msra.mxu0 0.0
    %2249 = vmatprep.mubr.f32.mxu0 0.0
    %2250 = vmatmul.mubr.f32.gmra.mrb[0].mxu0 %v2183
    %v2251 = vpop.f32.mrb[0].mxu0
    %v2252 = vadd.f32 0.0, %v2251
    %v2253 = vpop.f32.mrb[0].mxu0
    %v2254 = vadd.f32 0.0, %v2253
    %2255 = vdwg.mxu0
    %v2258 = vrot.slane %v2252, 2
    %v2259 = vrot.slane %v2254, 2
    %v2262 = vadd.f32 %v1948, %v2258
    %v2263 = vadd.f32 %v1949, %v2259
    %v2264 = vxor.u32 %v2262, 2147483648
    %v2265 = vxor.u32 %v2263, 2147483648
    %v2266 = vmul.f32 %v2264, 1.442695
    %v2267 = vpow.pop %v2266
    %v2268 = vmul.f32 %v2265, 1.442695
    %v2269 = vpow.pop %v2268
    %v2270 = vadd.f32 %v2267, 1.0
    %v2271 = vadd.f32 %v2269, 1.0
    %v2272 = vrcp.pop %v2270
    %v2273 = vmul.f32 1.0, %v2272
    %v2274 = vrcp.pop %v2271
    %v2275 = vmul.f32 1.0, %v2274
    %v2276 = vtanh.pop %v2263
    %v2278 = vrot.slane %v2174, 6
    %v2280 = vmul.f32 %v2273, %v2278
    %2282 = vrot.lane.b32.xlu0 %v2276, 64
    %v2283 = vpop.permute.xlu0 %2282
    %v2285 = vmul.f32 %v2273, %v2283
    %2287 = vrot.lane.b32.xlu0 %v2285, 64
    %v2288 = vpop.permute.xlu0 %2287
    %v2290 = vadd.f32 %v2280, %v2288
    %v2291 = vtanh.pop %v2290
    %2293 = vrot.lane.b32.xlu0 %v2291, 64
    %v2294 = vpop.permute.xlu0 %2293
    %v2296 = vmul.f32 %v2275, %v2294
    %v2297 = vrot.slane %v530, 2
    %2300 = vrot.lane.b32.xlu0 %v2296, 64
    %v2301 = vpop.permute.xlu0 %2300
    %v2303 = vrot.slane %v1472, 2
    %2304 = vrot.lane.b32.xlu0 %v2303, 64
    %v2305 = vpop.permute.xlu0 %2304
    %vm2307 = vcmask 261120
    %v2308 = vsel %vm2307, %v1354, %v2297
    %v2309 = vsel %vm424, %v2308, %v2301
    %vm2310 = vcmask 785408
    %v2311 = vsel %vm2310, %v2309, %v2305
    %v2312 = vld [vmem:[%s6] sm:$0xff]
    %v2313 = vld [vmem:[%s6 + $0x8] sm:$0xff]
    %v2314 = vld [vmem:[%s6 + $0x10] sm:$0xff]
    %v2315 = vld [vmem:[%s6 + $0x18] sm:$0xff]
    %v2316 = vld [vmem:[%s6 + $0x20] sm:$0xff]
    %v2317 = vld [vmem:[%s6 + $0x28] sm:$0xff]
    %v2318 = vld [vmem:[%s6 + $0x30] sm:$0xff]
    %v2319 = vld [vmem:[%s6 + $0x38] sm:$0xff]
    %v2320 = vld [vmem:[%s6 + $0x40] sm:$0xff]
    %v2321 = vld [vmem:[%s6 + $0x48] sm:$0xff]
    %v2322 = vld [vmem:[%s6 + $0x50] sm:$0xff]
    %v2323 = vld [vmem:[%s6 + $0x58] sm:$0xff]
    %v2324 = vld [vmem:[%s6 + $0x60] sm:$0xff]
    %v2325 = vld [vmem:[%s6 + $0x68] sm:$0xff]
    %v2326 = vld [vmem:[%s6 + $0x70] sm:$0xff]
    %v2327 = vld [vmem:[%s6 + $0x78] sm:$0xff]
    %v2328 = vld [vmem:[%s7] sm:$0x1]
    %v2330 = vlaneseq
    %v2331 = vshrl.u32 %v2330, 7
    %v2332 = vsub.s32 0, %v2331
    %v2333 = vrot.slane %v2328, %v2332
    %v2336 = vrot.slane %v2311, 6
    %2338 = vmatprep.subr.mxu0 0.0
    %2339 = vmatpush1.msra.mxu0 %v2312
    %2340 = vmatprep.subr.mxu0 0.0
    %2341 = vmatpush1.msra.mxu0 %v2313
    %2342 = vmatprep.subr.mxu0 0.0
    %2343 = vmatpush1.msra.mxu0 %v2314
    %2344 = vmatprep.subr.mxu0 0.0
    %2345 = vmatpush1.msra.mxu0 %v2315
    %2346 = vmatprep.subr.mxu0 0.0
    %2347 = vmatpush1.msra.mxu0 %v2316
    %2348 = vmatprep.subr.mxu0 0.0
    %2349 = vmatpush1.msra.mxu0 %v2317
    %2350 = vmatprep.subr.mxu0 0.0
    %2351 = vmatpush1.msra.mxu0 %v2318
    %2352 = vmatprep.subr.mxu0 0.0
    %2353 = vmatpush1.msra.mxu0 %v2319
    %2354 = vmatprep.subr.mxu0 0.0
    %2355 = vmatpush1.msra.mxu0 %v2320
    %2356 = vmatprep.subr.mxu0 0.0
    %2357 = vmatpush1.msra.mxu0 %v2321
    %2358 = vmatprep.subr.mxu0 0.0
    %2359 = vmatpush1.msra.mxu0 %v2322
    %2360 = vmatprep.subr.mxu0 0.0
    %2361 = vmatpush1.msra.mxu0 %v2323
    %2362 = vmatprep.subr.mxu0 0.0
    %2363 = vmatpush1.msra.mxu0 %v2324
    %2364 = vmatprep.subr.mxu0 0.0
    %2365 = vmatpush1.msra.mxu0 %v2325
    %2366 = vmatprep.subr.mxu0 0.0
    %2367 = vmatpush1.msra.mxu0 %v2326
    %2368 = vmatprep.subr.mxu0 0.0
    %2369 = vmatpush1.msra.mxu0 %v2327
    %2370 = vmatprep.subr.mxu0 0.0
    %2371 = vmatpush1.msra.mxu0 0.0
    %2372 = vmatprep.subr.mxu0 0.0
    %2373 = vmatpush1.msra.mxu0 0.0
    %2374 = vmatprep.subr.mxu0 0.0
    %2375 = vmatpush1.msra.mxu0 0.0
    %2376 = vmatprep.subr.mxu0 0.0
    %2377 = vmatpush1.msra.mxu0 0.0
    %2378 = vmatprep.subr.mxu0 0.0
    %2379 = vmatpush1.msra.mxu0 0.0
    %2380 = vmatprep.subr.mxu0 0.0
    %2381 = vmatpush1.msra.mxu0 0.0
    %2382 = vmatprep.subr.mxu0 0.0
    %2383 = vmatpush1.msra.mxu0 0.0
    %2384 = vmatprep.subr.mxu0 0.0
    %2385 = vmatpush1.msra.mxu0 0.0
    %2386 = vmatprep.subr.mxu0 0.0
    %2387 = vmatpush1.msra.mxu0 0.0
    %2388 = vmatprep.subr.mxu0 0.0
    %2389 = vmatpush1.msra.mxu0 0.0
    %2390 = vmatprep.subr.mxu0 0.0
    %2391 = vmatpush1.msra.mxu0 0.0
    %2392 = vmatprep.subr.mxu0 0.0
    %2393 = vmatpush1.msra.mxu0 0.0
    %2394 = vmatprep.subr.mxu0 0.0
    %2395 = vmatpush1.msra.mxu0 0.0
    %2396 = vmatprep.subr.mxu0 0.0
    %2397 = vmatpush1.msra.mxu0 0.0
    %2398 = vmatprep.subr.mxu0 0.0
    %2399 = vmatpush1.msra.mxu0 0.0
    %2400 = vmatprep.subr.mxu0 0.0
    %2401 = vmatpush1.msra.mxu0 0.0
    %2402 = vmatprep.mubr.f32.mxu0 0.0
    %2403 = vmatmul.mubr.f32.gmra.mrb[0].mxu0 %v2336
    %v2404 = vpop.f32.mrb[0].mxu0
    %v2405 = vadd.f32 %v2333, %v2404
    %v2406 = vpop.f32.mrb[0].mxu0
    %2407 = vdwg.mxu0
    %vm2408 = vcmask 33792
    %v2409 = vsel %vm2408, %v2405, -inf
    %2410 = vmax.xlane.f32.xlu0 %v2409
    %v2411 = vpop.xlane.xlu0 %2410
    %v2412 = vsub.f32 %v2405, %v2411
    %v2413 = vmul.f32 %v2412, 1.442695
    %v2414 = vpow.pop %v2413
    %v2415 = vsel %vm2408, %v2414, 0.0
    %2416 = vadd.xlane.f32.xlu0 %v2415
    %v2417 = vpop.xlane.xlu0 %2416
    %v2418 = vlog2.pop %v2417
    %v2419 = vmul.f32 %v2418, 0.6931472
    %v2420 = vsub.f32 %v2412, %v2419
    %2421 = vst.msk [vmem:[#allocation9] sm:$0x3] %vm2408, %v2420
    // Predicated region
    $region42: #{bilstm_comp_forward.1} parent=1 // pred_check
      _
    $region43: #{bilstm_comp_forward.1} parent=1 // pred_check_branch
      %2423 = sbr.rel (0) target = $region45
    $region44: #{bilstm_comp_forward.1} parent=1 // pred_region
      %s2425 = ssub.s32 32, 32
      %2426 = vsyncadd [#allocation5], %s2425
      %s2428 = sshll.u32 [#allocation9], 4
      %s2429 = int_to_ptr.vmem [resolvable:$true] %s2428
      %2431 = dma.vmem_to_hbm [thread:$0]  %s2429, 32, %s8, [#allocation5]
    $region45: #{bilstm_comp_forward.1} parent=1 // pred_fallthru
      _
    // Predicated region
    $region46: #{bilstm_comp_forward.1} parent=1 // pred_check
      _
    $region47: #{bilstm_comp_forward.1} parent=1 // pred_check_branch
      %2433 = sbr.rel (0) target = $region49
    $region48: #{bilstm_comp_forward.1} parent=1 // pred_region
      %2434 = dma.done [#allocation5], 32
    $region49: #{bilstm_comp_forward.1} parent=1 // pred_fallthru
      _
    %2435 = vsyncpa [#allocation5], 1
    %2436 = vsyncpa [#allocation6], 1
    %2437 = vsyncpa [#allocation8], 1

</llo_original>
